<compile_context>
chip_gen: v7x
topology: tpu7x:2x2x1
jax: 0.10.0
libtpu: 0.0.40
codegen_flags: <defaults>
</compile_context>

<pallas_src>
import functools

import jax
import jax.numpy as jnp
from jax.experimental import pallas as pl
from jax.experimental.pallas import tpu as pltpu


K_IN = 784        # 28*28
K_PAD = 896       # 7*128 — zero-pad the first contraction to a lane multiple
H = 512
N_OUT = 10
N_PAD = 128       # lane-pad the final layer so output stores are lane-dense


def mlp_kernel(x_ref, w1_ref, b1_ref, w2_ref, b2_ref, w3_ref, b3_ref, o_ref):
    # One batch tile per grid step; three MXU matmuls with f32 accumulation.
    x = x_ref[...]                                            # (TB, 896) bf16
    h1 = jnp.dot(x, w1_ref[...], preferred_element_type=jnp.float32) + b1_ref[...]
    h1 = jnp.maximum(h1, 0.0)                                 # f32 elementwise (v5e-safe)
    h2 = jnp.dot(h1.astype(w2_ref.dtype), w2_ref[...],
                 preferred_element_type=jnp.float32) + b2_ref[...]
    h2 = jnp.maximum(h2, 0.0)
    h3 = jnp.dot(h2.astype(w3_ref.dtype), w3_ref[...],
                 preferred_element_type=jnp.float32) + b3_ref[...]
    # The PyTorch module applies ReLU after the last Linear as well — keep it.
    o_ref[...] = jnp.maximum(h3, 0.0).astype(o_ref.dtype)


def _round_up(v, m):
    return (v + m - 1) // m * m


def _pick_tile(B):
    """Batch tile: multiple of 128, at most 1024, >=2 grid steps for large B."""
    TB = min(1024, _round_up(B, 128))
    if B > 128:
        # Cap TB so the padded batch splits into at least two grid steps
        # (v7x megacore: dimension_semantics=("parallel",) needs >= 2 tiles).
        half = _round_up(_round_up(B, 128) // 2, 128)
        TB = min(TB, max(half, 128))
    return TB


def prepare_params(params, *, weight_dtype=jnp.bfloat16):
    """One-time pad/cast of weights & biases (hoisted out of the per-call path).

    `params` = (w1, b1, w2, b2, w3, b3), weights laid out (in_features, out_features)
    — i.e. the transpose of nn.Linear.weight.
    """
    w1, b1, w2, b2, w3, b3 = params
    assert w1.shape == (K_IN, H) and w2.shape == (H, H) and w3.shape == (H, N_OUT), \
        "weights must be (in_features, out_features) — transpose of nn.Linear.weight"
    w1p = jnp.pad(w1, ((0, K_PAD - K_IN), (0, 0))).astype(weight_dtype)
    w2p = w2.astype(weight_dtype)
    w3p = jnp.pad(w3, ((0, 0), (0, N_PAD - N_OUT))).astype(weight_dtype)
    b1p = jnp.asarray(b1).reshape(1, H).astype(jnp.float32)
    b2p = jnp.asarray(b2).reshape(1, H).astype(jnp.float32)
    b3p = jnp.pad(jnp.asarray(b3).reshape(1, N_OUT),
                  ((0, 0), (0, N_PAD - N_OUT))).astype(jnp.float32)
    return (w1p, b1p, w2p, b2p, w3p, b3p)


@jax.jit
def mlp_forward(x, prepared):
    """x: (B, ...) with prod(trailing dims) == 784. Returns (B, 10) float32."""
    w1p, b1p, w2p, b2p, w3p, b3p = prepared
    B = x.shape[0]
    act_dtype = w1p.dtype

    x_flat = x.reshape(B, -1).astype(act_dtype)               # nn.Flatten + cast (one pass)
    assert x_flat.shape[1] == K_IN, "expected 28*28 = 784 flattened features"

    TB = _pick_tile(B)
    B_pad = _round_up(B, TB)
    x_in = jnp.pad(x_flat, ((0, B_pad - B), (0, K_PAD - K_IN)))   # pad rows + K in bf16

    grid = (B_pad // TB,)

    def resident(shape):
        # Constant block index -> stays VMEM-resident; single pipeline buffer.
        return pl.BlockSpec(shape, lambda i: (0,) * len(shape),
                            pipeline_mode=pl.Buffered(1))

    out = pl.pallas_call(
        mlp_kernel,
        out_shape=jax.ShapeDtypeStruct((B_pad, N_PAD), jnp.float32),
        grid=grid,
        in_specs=[
            pl.BlockSpec((TB, K_PAD), lambda i: (i, 0)),      # x tile pipelines over batch
            resident(w1p.shape), resident(b1p.shape),         # weights stay VMEM-resident
            resident(w2p.shape), resident(b2p.shape),
            resident(w3p.shape), resident(b3p.shape),
        ],
        out_specs=pl.BlockSpec((TB, N_PAD), lambda i: (i, 0)),
        compiler_params=pltpu.CompilerParams(
            dimension_semantics=("parallel",),                # v7x: shard tiles over 2 TCs
            vmem_limit_bytes=32 << 20,                        # covers TB=1024 comfortably
        ),
    )(x_in, w1p, b1p, w2p, b2p, w3p, b3p)

    return out[:B, :N_OUT]


def neural_network_forward(x, params, *, weight_dtype=jnp.bfloat16):
    """Convenience wrapper: prepares params every call. Prefer prepare_params()
    once + mlp_forward() in a serving loop."""
    return mlp_forward(x, prepare_params(params, weight_dtype=weight_dtype))


def init_params(key):
    """Deterministic PyTorch-style uniform(-1/sqrt(fan_in), 1/sqrt(fan_in)) init."""
    dims = [(K_IN, H), (H, H), (H, N_OUT)]
    params = []
    for i, (fan_in, fan_out) in enumerate(dims):
        kw, kb = jax.random.split(jax.random.fold_in(key, i))
        bound = 1.0 / (fan_in ** 0.5)
        w = jax.random.uniform(kw, (fan_in, fan_out), jnp.float32, -bound, bound)
        b = jax.random.uniform(kb, (1, fan_out), jnp.float32, -bound, bound)
        params.extend([w, b])
    return tuple(params)


def _reference(x, params, dtype=jnp.bfloat16):
    """Pure-JAX reference with the same bf16 matmul inputs / f32 accumulation."""
    w1, b1, w2, b2, w3, b3 = params
    xf = x.reshape(x.shape[0], -1)
    h = jnp.maximum(jnp.dot(xf.astype(dtype), w1.astype(dtype),
                            preferred_element_type=jnp.float32) + b1, 0.0)
    h = jnp.maximum(jnp.dot(h.astype(dtype), w2.astype(dtype),
                            preferred_element_type=jnp.float32) + b2, 0.0)
    h = jnp.maximum(jnp.dot(h.astype(dtype), w3.astype(dtype),
                            preferred_element_type=jnp.float32) + b3, 0.0)
    return h


if __name__ == "__main__":
    key = jax.random.PRNGKey(0)
    params = init_params(key)
    prepared = prepare_params(params)          # one-time weight pad/cast (hoisted)

    # MNIST-like batch: (batch=2, channels=1, 28, 28) — single-tile path.
    x_small = jax.random.normal(jax.random.fold_in(key, 100), (2, 1, 28, 28), jnp.float32)
    logits_small = jax.block_until_ready(mlp_forward(x_small, prepared))
    assert logits_small.shape == (2, 10)
    ref_small = _reference(x_small, params)
    assert jnp.allclose(logits_small, ref_small, atol=1e-2, rtol=1e-2), float(
        jnp.max(jnp.abs(logits_small - ref_small)))

    # Larger batch — exercises batch padding and a 2-step ("parallel") grid.
    x_big = jax.random.normal(jax.random.fold_in(key, 200), (192, 1, 28, 28), jnp.float32)
    logits_big = jax.block_until_ready(mlp_forward(x_big, prepared))
    assert logits_big.shape == (192, 10)
    ref_big = _reference(x_big, params)
    assert jnp.allclose(logits_big, ref_big, atol=1e-2, rtol=1e-2), float(
        jnp.max(jnp.abs(logits_big - ref_big)))

    # Sanity vs full-f32 math (looser tolerance due to bf16 weights/activations).
    w1, b1, w2, b2, w3, b3 = params
    xf = x_small.reshape(2, -1)
    ref32 = jnp.maximum(xf @ w1 + b1, 0.0)
    ref32 = jnp.maximum(ref32 @ w2 + b2, 0.0)
    ref32 = jnp.maximum(ref32 @ w3 + b3, 0.0)
    assert jnp.allclose(logits_small, ref32, atol=1e-1, rtol=1e-1), float(
        jnp.max(jnp.abs(logits_small - ref32)))

    print("KERNEL_OK")
</pallas_src>

<mosaic_0001>
module attributes {stable_mosaic.version = 11 : i64} {
  func.func @mlp_kernel(%arg0: i32, %arg1: memref<128x896xbf16, #tpu.memory_space<vmem>>, %arg2: memref<896x512xbf16, #tpu.memory_space<vmem>>, %arg3: memref<1x512xf32, #tpu.memory_space<vmem>>, %arg4: memref<512x512xbf16, #tpu.memory_space<vmem>>, %arg5: memref<1x512xf32, #tpu.memory_space<vmem>>, %arg6: memref<512x128xbf16, #tpu.memory_space<vmem>>, %arg7: memref<1x128xf32, #tpu.memory_space<vmem>>, %arg8: memref<128x128xf32, #tpu.memory_space<vmem>>) attributes {dimension_semantics = [#tpu.dimension_semantics<parallel>], iteration_bounds = array<i64: 1>, scalar_prefetch = 0 : i64, scratch_operands = 0 : i64, tpu.core_type = #tpu.core_type<tc>, window_params = [{transform_indices = @transform_0, window_bounds = array<i64: 128, 896>}, {pipeline_mode = #tpu.pipeline_mode<synchronous>, transform_indices = @transform_1, window_bounds = array<i64: 896, 512>}, {pipeline_mode = #tpu.pipeline_mode<synchronous>, transform_indices = @transform_2, window_bounds = array<i64: 1, 512>}, {pipeline_mode = #tpu.pipeline_mode<synchronous>, transform_indices = @transform_3, window_bounds = array<i64: 512, 512>}, {pipeline_mode = #tpu.pipeline_mode<synchronous>, transform_indices = @transform_4, window_bounds = array<i64: 1, 512>}, {pipeline_mode = #tpu.pipeline_mode<synchronous>, transform_indices = @transform_5, window_bounds = array<i64: 512, 128>}, {pipeline_mode = #tpu.pipeline_mode<synchronous>, transform_indices = @transform_6, window_bounds = array<i64: 1, 128>}, {transform_indices = @transform_7, window_bounds = array<i64: 128, 128>}]} {
    %c0 = arith.constant 0 : index
    %c0_0 = arith.constant 0 : index
    %0 = vector.load %arg1[%c0, %c0_0] : memref<128x896xbf16, #tpu.memory_space<vmem>>, vector<128x896xbf16>
    %c0_1 = arith.constant 0 : index
    %c0_2 = arith.constant 0 : index
    %1 = vector.load %arg2[%c0_1, %c0_2] : memref<896x512xbf16, #tpu.memory_space<vmem>>, vector<896x512xbf16>
    %cst = arith.constant dense<0.000000e+00> : vector<128x512xf32>
    %2 = tpu.matmul %0, %1, %cst {dimension_numbers = #tpu.dot_dimension_numbers<[1], [0], [0], [1], [0, 0, 1, 1], [], []>} : vector<128x896xbf16>, vector<896x512xbf16>, vector<128x512xf32> -> vector<128x512xf32>
    %c0_3 = arith.constant 0 : index
    %c0_4 = arith.constant 0 : index
    %3 = vector.load %arg3[%c0_3, %c0_4] : memref<1x512xf32, #tpu.memory_space<vmem>>, vector<1x512xf32>
    %4 = vector.broadcast %3 : vector<1x512xf32> to vector<128x512xf32>
    %5 = arith.addf %2, %4 : vector<128x512xf32>
    %cst_5 = arith.constant 0.000000e+00 : f32
    %6 = vector.broadcast %cst_5 : f32 to vector<128x512xf32>
    %7 = arith.maximumf %5, %6 : vector<128x512xf32>
    %8 = arith.truncf %7 : vector<128x512xf32> to vector<128x512xbf16>
    %c0_6 = arith.constant 0 : index
    %c0_7 = arith.constant 0 : index
    %9 = vector.load %arg4[%c0_6, %c0_7] : memref<512x512xbf16, #tpu.memory_space<vmem>>, vector<512x512xbf16>
    %cst_8 = arith.constant dense<0.000000e+00> : vector<128x512xf32>
    %10 = tpu.matmul %8, %9, %cst_8 {dimension_numbers = #tpu.dot_dimension_numbers<[1], [0], [0], [1], [0, 0, 1, 1], [], []>} : vector<128x512xbf16>, vector<512x512xbf16>, vector<128x512xf32> -> vector<128x512xf32>
    %c0_9 = arith.constant 0 : index
    %c0_10 = arith.constant 0 : index
    %11 = vector.load %arg5[%c0_9, %c0_10] : memref<1x512xf32, #tpu.memory_space<vmem>>, vector<1x512xf32>
    %12 = vector.broadcast %11 : vector<1x512xf32> to vector<128x512xf32>
    %13 = arith.addf %10, %12 : vector<128x512xf32>
    %cst_11 = arith.constant 0.000000e+00 : f32
    %14 = vector.broadcast %cst_11 : f32 to vector<128x512xf32>
    %15 = arith.maximumf %13, %14 : vector<128x512xf32>
    %16 = arith.truncf %15 : vector<128x512xf32> to vector<128x512xbf16>
    %c0_12 = arith.constant 0 : index
    %c0_13 = arith.constant 0 : index
    %17 = vector.load %arg6[%c0_12, %c0_13] : memref<512x128xbf16, #tpu.memory_space<vmem>>, vector<512x128xbf16>
    %cst_14 = arith.constant dense<0.000000e+00> : vector<128x128xf32>
    %18 = tpu.matmul %16, %17, %cst_14 {dimension_numbers = #tpu.dot_dimension_numbers<[1], [0], [0], [1], [0, 0, 1, 1], [], []>} : vector<128x512xbf16>, vector<512x128xbf16>, vector<128x128xf32> -> vector<128x128xf32>
    %c0_15 = arith.constant 0 : index
    %c0_16 = arith.constant 0 : index
    %19 = vector.load %arg7[%c0_15, %c0_16] : memref<1x128xf32, #tpu.memory_space<vmem>>, vector<1x128xf32>
    %20 = vector.broadcast %19 : vector<1x128xf32> to vector<128x128xf32>
    %21 = arith.addf %18, %20 : vector<128x128xf32>
    %cst_17 = arith.constant 0.000000e+00 : f32
    %22 = vector.broadcast %cst_17 : f32 to vector<128x128xf32>
    %23 = arith.maximumf %21, %22 : vector<128x128xf32>
    %c0_18 = arith.constant 0 : index
    %c0_19 = arith.constant 0 : index
    %24 = vector.load %arg8[%c0_18, %c0_19] : memref<128x128xf32, #tpu.memory_space<vmem>>, vector<128x128xf32>
    tpu.vector_store %arg8[%c0_18, %c0_19], %23 {strides = array<i32>} : memref<128x128xf32, #tpu.memory_space<vmem>>, vector<128x128xf32>,
    return
  }
  func.func @transform_0(%arg0: i32) -> (i32, i32) {
    %c0_i32 = arith.constant 0 : i32
    %c0_i32_0 = arith.constant 0 : i32
    return %arg0, %c0_i32 : i32, i32
  }
  func.func @transform_1(%arg0: i32) -> (i32, i32) {
    %c0_i32 = arith.constant 0 : i32
    %c0_i32_0 = arith.constant 0 : i32
    %c0_i32_1 = arith.constant 0 : i32
    return %c0_i32, %c0_i32_0 : i32, i32
  }
  func.func @transform_2(%arg0: i32) -> (i32, i32) {
    %c0_i32 = arith.constant 0 : i32
    %c0_i32_0 = arith.constant 0 : i32
    %c0_i32_1 = arith.constant 0 : i32
    return %c0_i32, %c0_i32_0 : i32, i32
  }
  func.func @transform_3(%arg0: i32) -> (i32, i32) {
    %c0_i32 = arith.constant 0 : i32
    %c0_i32_0 = arith.constant 0 : i32
    %c0_i32_1 = arith.constant 0 : i32
    return %c0_i32, %c0_i32_0 : i32, i32
  }
  func.func @transform_4(%arg0: i32) -> (i32, i32) {
    %c0_i32 = arith.constant 0 : i32
    %c0_i32_0 = arith.constant 0 : i32
    %c0_i32_1 = arith.constant 0 : i32
    return %c0_i32, %c0_i32_0 : i32, i32
  }
  func.func @transform_5(%arg0: i32) -> (i32, i32) {
    %c0_i32 = arith.constant 0 : i32
    %c0_i32_0 = arith.constant 0 : i32
    %c0_i32_1 = arith.constant 0 : i32
    return %c0_i32, %c0_i32_0 : i32, i32
  }
  func.func @transform_6(%arg0: i32) -> (i32, i32) {
    %c0_i32 = arith.constant 0 : i32
    %c0_i32_0 = arith.constant 0 : i32
    %c0_i32_1 = arith.constant 0 : i32
    return %c0_i32, %c0_i32_0 : i32, i32
  }
  func.func @transform_7(%arg0: i32) -> (i32, i32) {
    %c0_i32 = arith.constant 0 : i32
    %c0_i32_0 = arith.constant 0 : i32
    return %arg0, %c0_i32 : i32, i32
  }
}

</mosaic_0001>

<llo_original>
// kernel: mlp_forward.1
$region0: #{mlp_forward.1}
  #allocation0 [shape = 'u32[]', space=smem, size = 0x4, offset = 0x4, fixed_abs, tag = 'smem constant byte address 0x4 - core index']
  #allocation1 [shape = 'u32[144,128]{1,0:T(1,128)}', space=vmem, size = 0x12000, scoped, tag = 'internal scratch']
  %s0 = inlined_call_operand.vmem [shape: bf16[128,896], index: 0, kind: input, shape index: {}]
  %s1 = inlined_call_operand.hbm [shape: bf16[896,512], index: 1, kind: input, shape index: {}]
  %s2 = inlined_call_operand.vmem [shape: f32[1,512], index: 2, kind: input, shape index: {}]
  %s3 = inlined_call_operand.hbm [shape: bf16[512,512], index: 3, kind: input, shape index: {}]
  %s4 = inlined_call_operand.vmem [shape: f32[1,512], index: 4, kind: input, shape index: {}]
  %s5 = inlined_call_operand.vmem [shape: bf16[512,128], index: 5, kind: input, shape index: {}]
  %s6 = inlined_call_operand.vmem [shape: f32[1,128], index: 6, kind: input, shape index: {}]
  %s7 = inlined_call_operand.vmem [shape: f32[128,128], index: 7, kind: output, shape index: {}]
  %s8 = sld [smem:[#allocation0]]
  $region46: #{mlp_forward.1} parent=0
    _
  %s10 = ssub.s32 1, %s8
  %s11 = scalar_select 0, %s10, %s8
  $region1: #{mlp_forward.1} parent=0
    #allocation2 [shape = 'u8[917504]{0}', space=vmem, size = 0xe0000, scoped, tag = 'input window, operand 1, single buffered']
    #allocation3 [shape = 's32[1]{0}', space=sflag, size = 0x4, scoped, tag = 'scoped memory for mlp_forward.1']
    #allocation4 [shape = 'u8[524288]{0}', space=vmem, size = 0x80000, scoped, tag = 'input window, operand 3, single buffered']
    #allocation5 [shape = 's32[1]{0}', space=sflag, size = 0x4, scoped, tag = 'scoped memory for mlp_forward.1']
    %12 = vsyncpa [#allocation3], 0
    %13 = vsyncpa [#allocation5], 0
    // Predicated region
    $region2: #{mlp_forward.1} parent=1 // pred_check
      _
    $region3: #{mlp_forward.1} parent=1 // pred_check_branch
      %15 = sbr.rel (0) target = $region5
    $region4: #{mlp_forward.1} parent=1 // pred_region
      _
    $region5: #{mlp_forward.1} parent=1 // pred_fallthru
      _
    // Predicated region
    $region6: #{mlp_forward.1} parent=1 // pred_check
      _
    $region7: #{mlp_forward.1} parent=1 // pred_check_branch
      %17 = sbr.rel (0) target = $region9
    $region8: #{mlp_forward.1} parent=1 // pred_region
      %s19 = ssub.s32 28672, 28672
      %20 = vsyncadd [#allocation3], %s19
      %s21 = sshll.u32 [#allocation2], 4
      %s22 = int_to_ptr.vmem [resolvable:$true] %s21
      %27 = dma.hbm_to_vmem [thread:$0]  %s1, 28672, %s22, [#allocation3], 256, 256, 16
    $region9: #{mlp_forward.1} parent=1 // pred_fallthru
      _
    // Predicated region
    $region10: #{mlp_forward.1} parent=1 // pred_check
      _
    $region11: #{mlp_forward.1} parent=1 // pred_check_branch
      %29 = sbr.rel (0) target = $region13
    $region12: #{mlp_forward.1} parent=1 // pred_region
      _
    $region13: #{mlp_forward.1} parent=1 // pred_fallthru
      _
    // Predicated region
    $region14: #{mlp_forward.1} parent=1 // pred_check
      _
    $region15: #{mlp_forward.1} parent=1 // pred_check_branch
      %31 = sbr.rel (0) target = $region17
    $region16: #{mlp_forward.1} parent=1 // pred_region
      %s33 = ssub.s32 16384, 16384
      %34 = vsyncadd [#allocation5], %s33
      %s35 = sshll.u32 [#allocation4], 4
      %s36 = int_to_ptr.vmem [resolvable:$true] %s35
      %41 = dma.hbm_to_vmem [thread:$0]  %s3, 16384, %s36, [#allocation5], 256, 256, 16
    $region17: #{mlp_forward.1} parent=1 // pred_fallthru
      _
    // Predicated region
    $region18: #{mlp_forward.1} parent=1 // pred_check
      _
    $region19: #{mlp_forward.1} parent=1 // pred_check_branch
      %43 = sbr.rel (0) target = $region21
    $region20: #{mlp_forward.1} parent=1 // pred_region
      _
    $region21: #{mlp_forward.1} parent=1 // pred_fallthru
      _
    // Predicated region
    $region22: #{mlp_forward.1} parent=1 // pred_check
      _
    $region23: #{mlp_forward.1} parent=1 // pred_check_branch
      %45 = sbr.rel (0) target = $region25
    $region24: #{mlp_forward.1} parent=1 // pred_region
      _
    $region25: #{mlp_forward.1} parent=1 // pred_fallthru
      _
    // Predicated region
    $region26: #{mlp_forward.1} parent=1 // pred_check
      _
    $region27: #{mlp_forward.1} parent=1 // pred_check_branch
      %47 = sbr.rel (0) target = $region29
    $region28: #{mlp_forward.1} parent=1 // pred_region
      _
    $region29: #{mlp_forward.1} parent=1 // pred_fallthru
      _
    // Predicated region
    $region30: #{mlp_forward.1} parent=1 // pred_check
      _
    $region31: #{mlp_forward.1} parent=1 // pred_check_branch
      %49 = sbr.rel (0) target = $region33
    $region32: #{mlp_forward.1} parent=1 // pred_region
      %50 = dma.done [#allocation3], 28672
    $region33: #{mlp_forward.1} parent=1 // pred_fallthru
      _
    // Predicated region
    $region34: #{mlp_forward.1} parent=1 // pred_check
      _
    $region35: #{mlp_forward.1} parent=1 // pred_check_branch
      %52 = sbr.rel (0) target = $region37
    $region36: #{mlp_forward.1} parent=1 // pred_region
      %53 = dma.done [#allocation5], 16384
    $region37: #{mlp_forward.1} parent=1 // pred_fallthru
      _
    %v55 = vld [vmem:[%s0] sm:$0xff]
    %v56 = vld [vmem:[%s0 + $0x8] sm:$0xff]
    %v57 = vld [vmem:[%s0 + $0x10] sm:$0xff]
    %v58 = vld [vmem:[%s0 + $0x18] sm:$0xf]
    %v59 = vld [vmem:[%s0 + $0x1c] sm:$0xff]
    %v60 = vld [vmem:[%s0 + $0x24] sm:$0xff]
    %v61 = vld [vmem:[%s0 + $0x2c] sm:$0xff]
    %v62 = vld [vmem:[%s0 + $0x34] sm:$0xf]
    %v63 = vld [vmem:[%s0 + $0x38] sm:$0xff]
    %v64 = vld [vmem:[%s0 + $0x40] sm:$0xff]
    %v65 = vld [vmem:[%s0 + $0x48] sm:$0xff]
    %v66 = vld [vmem:[%s0 + $0x50] sm:$0xf]
    %v67 = vld [vmem:[%s0 + $0x54] sm:$0xff]
    %v68 = vld [vmem:[%s0 + $0x5c] sm:$0xff]
    %v69 = vld [vmem:[%s0 + $0x64] sm:$0xff]
    %v70 = vld [vmem:[%s0 + $0x6c] sm:$0xf]
    %v71 = vld [vmem:[%s0 + $0x70] sm:$0xff]
    %v72 = vld [vmem:[%s0 + $0x78] sm:$0xff]
    %v73 = vld [vmem:[%s0 + $0x80] sm:$0xff]
    %v74 = vld [vmem:[%s0 + $0x88] sm:$0xf]
    %v75 = vld [vmem:[%s0 + $0x8c] sm:$0xff]
    %v76 = vld [vmem:[%s0 + $0x94] sm:$0xff]
    %v77 = vld [vmem:[%s0 + $0x9c] sm:$0xff]
    %v78 = vld [vmem:[%s0 + $0xa4] sm:$0xf]
    %v79 = vld [vmem:[%s0 + $0xa8] sm:$0xff]
    %v80 = vld [vmem:[%s0 + $0xb0] sm:$0xff]
    %v81 = vld [vmem:[%s0 + $0xb8] sm:$0xff]
    %v82 = vld [vmem:[%s0 + $0xc0] sm:$0xf]
    %v83 = vld [vmem:[%s0 + $0xc4] sm:$0xff]
    %v84 = vld [vmem:[%s0 + $0xcc] sm:$0xff]
    %v85 = vld [vmem:[%s0 + $0xd4] sm:$0xff]
    %v86 = vld [vmem:[%s0 + $0xdc] sm:$0xf]
    %v87 = vld [vmem:[%s0 + $0xe0] sm:$0xff]
    %v88 = vld [vmem:[%s0 + $0xe8] sm:$0xff]
    %v89 = vld [vmem:[%s0 + $0xf0] sm:$0xff]
    %v90 = vld [vmem:[%s0 + $0xf8] sm:$0xf]
    %v91 = vld [vmem:[%s0 + $0xfc] sm:$0xff]
    %v92 = vld [vmem:[%s0 + $0x104] sm:$0xff]
    %v93 = vld [vmem:[%s0 + $0x10c] sm:$0xff]
    %v94 = vld [vmem:[%s0 + $0x114] sm:$0xf]
    %v95 = vld [vmem:[%s0 + $0x118] sm:$0xff]
    %v96 = vld [vmem:[%s0 + $0x120] sm:$0xff]
    %v97 = vld [vmem:[%s0 + $0x128] sm:$0xff]
    %v98 = vld [vmem:[%s0 + $0x130] sm:$0xf]
    %v99 = vld [vmem:[%s0 + $0x134] sm:$0xff]
    %v100 = vld [vmem:[%s0 + $0x13c] sm:$0xff]
    %v101 = vld [vmem:[%s0 + $0x144] sm:$0xff]
    %v102 = vld [vmem:[%s0 + $0x14c] sm:$0xf]
    %v103 = vld [vmem:[%s0 + $0x150] sm:$0xff]
    %v104 = vld [vmem:[%s0 + $0x158] sm:$0xff]
    %v105 = vld [vmem:[%s0 + $0x160] sm:$0xff]
    %v106 = vld [vmem:[%s0 + $0x168] sm:$0xf]
    %v107 = vld [vmem:[%s0 + $0x16c] sm:$0xff]
    %v108 = vld [vmem:[%s0 + $0x174] sm:$0xff]
    %v109 = vld [vmem:[%s0 + $0x17c] sm:$0xff]
    %v110 = vld [vmem:[%s0 + $0x184] sm:$0xf]
    %v111 = vld [vmem:[%s0 + $0x188] sm:$0xff]
    %v112 = vld [vmem:[%s0 + $0x190] sm:$0xff]
    %v113 = vld [vmem:[%s0 + $0x198] sm:$0xff]
    %v114 = vld [vmem:[%s0 + $0x1a0] sm:$0xf]
    %v115 = vld [vmem:[%s0 + $0x1a4] sm:$0xff]
    %v116 = vld [vmem:[%s0 + $0x1ac] sm:$0xff]
    %v117 = vld [vmem:[%s0 + $0x1b4] sm:$0xff]
    %v118 = vld [vmem:[%s0 + $0x1bc] sm:$0xf]
    %v119 = vld [vmem:[#allocation2] sm:$0xff]
    %v120 = vld [vmem:[#allocation2 + $0x8] sm:$0xff]
    %v121 = vld [vmem:[#allocation2 + $0x10] sm:$0xff]
    %v122 = vld [vmem:[#allocation2 + $0x18] sm:$0xff]
    %v123 = vld [vmem:[#allocation2 + $0x20] sm:$0xff]
    %v124 = vld [vmem:[#allocation2 + $0x28] sm:$0xff]
    %v125 = vld [vmem:[#allocation2 + $0x30] sm:$0xff]
    %v126 = vld [vmem:[#allocation2 + $0x38] sm:$0xff]
    %v127 = vld [vmem:[#allocation2 + $0x40] sm:$0xff]
    %v128 = vld [vmem:[#allocation2 + $0x48] sm:$0xff]
    %v129 = vld [vmem:[#allocation2 + $0x50] sm:$0xff]
    %v130 = vld [vmem:[#allocation2 + $0x58] sm:$0xff]
    %v131 = vld [vmem:[#allocation2 + $0x60] sm:$0xff]
    %v132 = vld [vmem:[#allocation2 + $0x68] sm:$0xff]
    %v133 = vld [vmem:[#allocation2 + $0x70] sm:$0xff]
    %v134 = vld [vmem:[#allocation2 + $0x78] sm:$0xff]
    %v135 = vld [vmem:[#allocation2 + $0x80] sm:$0xff]
    %v136 = vld [vmem:[#allocation2 + $0x88] sm:$0xff]
    %v137 = vld [vmem:[#allocation2 + $0x90] sm:$0xff]
    %v138 = vld [vmem:[#allocation2 + $0x98] sm:$0xff]
    %v139 = vld [vmem:[#allocation2 + $0xa0] sm:$0xff]
    %v140 = vld [vmem:[#allocation2 + $0xa8] sm:$0xff]
    %v141 = vld [vmem:[#allocation2 + $0xb0] sm:$0xff]
    %v142 = vld [vmem:[#allocation2 + $0xb8] sm:$0xff]
    %v143 = vld [vmem:[#allocation2 + $0xc0] sm:$0xff]
    %v144 = vld [vmem:[#allocation2 + $0xc8] sm:$0xff]
    %v145 = vld [vmem:[#allocation2 + $0xd0] sm:$0xff]
    %v146 = vld [vmem:[#allocation2 + $0xd8] sm:$0xff]
    %v147 = vld [vmem:[#allocation2 + $0xe0] sm:$0xff]
    %v148 = vld [vmem:[#allocation2 + $0xe8] sm:$0xff]
    %v149 = vld [vmem:[#allocation2 + $0xf0] sm:$0xff]
    %v150 = vld [vmem:[#allocation2 + $0xf8] sm:$0xff]
    %v151 = vld [vmem:[#allocation2 + $0x100] sm:$0xff]
    %v152 = vld [vmem:[#allocation2 + $0x108] sm:$0xff]
    %v153 = vld [vmem:[#allocation2 + $0x110] sm:$0xff]
    %v154 = vld [vmem:[#allocation2 + $0x118] sm:$0xff]
    %v155 = vld [vmem:[#allocation2 + $0x120] sm:$0xff]
    %v156 = vld [vmem:[#allocation2 + $0x128] sm:$0xff]
    %v157 = vld [vmem:[#allocation2 + $0x130] sm:$0xff]
    %v158 = vld [vmem:[#allocation2 + $0x138] sm:$0xff]
    %v159 = vld [vmem:[#allocation2 + $0x140] sm:$0xff]
    %v160 = vld [vmem:[#allocation2 + $0x148] sm:$0xff]
    %v161 = vld [vmem:[#allocation2 + $0x150] sm:$0xff]
    %v162 = vld [vmem:[#allocation2 + $0x158] sm:$0xff]
    %v163 = vld [vmem:[#allocation2 + $0x160] sm:$0xff]
    %v164 = vld [vmem:[#allocation2 + $0x168] sm:$0xff]
    %v165 = vld [vmem:[#allocation2 + $0x170] sm:$0xff]
    %v166 = vld [vmem:[#allocation2 + $0x178] sm:$0xff]
    %v167 = vld [vmem:[#allocation2 + $0x180] sm:$0xff]
    %v168 = vld [vmem:[#allocation2 + $0x188] sm:$0xff]
    %v169 = vld [vmem:[#allocation2 + $0x190] sm:$0xff]
    %v170 = vld [vmem:[#allocation2 + $0x198] sm:$0xff]
    %v171 = vld [vmem:[#allocation2 + $0x1a0] sm:$0xff]
    %v172 = vld [vmem:[#allocation2 + $0x1a8] sm:$0xff]
    %v173 = vld [vmem:[#allocation2 + $0x1b0] sm:$0xff]
    %v174 = vld [vmem:[#allocation2 + $0x1b8] sm:$0xff]
    %v175 = vld [vmem:[#allocation2 + $0x1c0] sm:$0xff]
    %v176 = vld [vmem:[#allocation2 + $0x1c8] sm:$0xff]
    %v177 = vld [vmem:[#allocation2 + $0x1d0] sm:$0xff]
    %v178 = vld [vmem:[#allocation2 + $0x1d8] sm:$0xff]
    %v179 = vld [vmem:[#allocation2 + $0x1e0] sm:$0xff]
    %v180 = vld [vmem:[#allocation2 + $0x1e8] sm:$0xff]
    %v181 = vld [vmem:[#allocation2 + $0x1f0] sm:$0xff]
    %v182 = vld [vmem:[#allocation2 + $0x1f8] sm:$0xff]
    %v183 = vld [vmem:[#allocation2 + $0x200] sm:$0xff]
    %v184 = vld [vmem:[#allocation2 + $0x208] sm:$0xff]
    %v185 = vld [vmem:[#allocation2 + $0x210] sm:$0xff]
    %v186 = vld [vmem:[#allocation2 + $0x218] sm:$0xff]
    %v187 = vld [vmem:[#allocation2 + $0x220] sm:$0xff]
    %v188 = vld [vmem:[#allocation2 + $0x228] sm:$0xff]
    %v189 = vld [vmem:[#allocation2 + $0x230] sm:$0xff]
    %v190 = vld [vmem:[#allocation2 + $0x238] sm:$0xff]
    %v191 = vld [vmem:[#allocation2 + $0x240] sm:$0xff]
    %v192 = vld [vmem:[#allocation2 + $0x248] sm:$0xff]
    %v193 = vld [vmem:[#allocation2 + $0x250] sm:$0xff]
    %v194 = vld [vmem:[#allocation2 + $0x258] sm:$0xff]
    %v195 = vld [vmem:[#allocation2 + $0x260] sm:$0xff]
    %v196 = vld [vmem:[#allocation2 + $0x268] sm:$0xff]
    %v197 = vld [vmem:[#allocation2 + $0x270] sm:$0xff]
    %v198 = vld [vmem:[#allocation2 + $0x278] sm:$0xff]
    %v199 = vld [vmem:[#allocation2 + $0x280] sm:$0xff]
    %v200 = vld [vmem:[#allocation2 + $0x288] sm:$0xff]
    %v201 = vld [vmem:[#allocation2 + $0x290] sm:$0xff]
    %v202 = vld [vmem:[#allocation2 + $0x298] sm:$0xff]
    %v203 = vld [vmem:[#allocation2 + $0x2a0] sm:$0xff]
    %v204 = vld [vmem:[#allocation2 + $0x2a8] sm:$0xff]
    %v205 = vld [vmem:[#allocation2 + $0x2b0] sm:$0xff]
    %v206 = vld [vmem:[#allocation2 + $0x2b8] sm:$0xff]
    %v207 = vld [vmem:[#allocation2 + $0x2c0] sm:$0xff]
    %v208 = vld [vmem:[#allocation2 + $0x2c8] sm:$0xff]
    %v209 = vld [vmem:[#allocation2 + $0x2d0] sm:$0xff]
    %v210 = vld [vmem:[#allocation2 + $0x2d8] sm:$0xff]
    %v211 = vld [vmem:[#allocation2 + $0x2e0] sm:$0xff]
    %v212 = vld [vmem:[#allocation2 + $0x2e8] sm:$0xff]
    %v213 = vld [vmem:[#allocation2 + $0x2f0] sm:$0xff]
    %v214 = vld [vmem:[#allocation2 + $0x2f8] sm:$0xff]
    %v215 = vld [vmem:[#allocation2 + $0x300] sm:$0xff]
    %v216 = vld [vmem:[#allocation2 + $0x308] sm:$0xff]
    %v217 = vld [vmem:[#allocation2 + $0x310] sm:$0xff]
    %v218 = vld [vmem:[#allocation2 + $0x318] sm:$0xff]
    %v219 = vld [vmem:[#allocation2 + $0x320] sm:$0xff]
    %v220 = vld [vmem:[#allocation2 + $0x328] sm:$0xff]
    %v221 = vld [vmem:[#allocation2 + $0x330] sm:$0xff]
    %v222 = vld [vmem:[#allocation2 + $0x338] sm:$0xff]
    %v223 = vld [vmem:[#allocation2 + $0x340] sm:$0xff]
    %v224 = vld [vmem:[#allocation2 + $0x348] sm:$0xff]
    %v225 = vld [vmem:[#allocation2 + $0x350] sm:$0xff]
    %v226 = vld [vmem:[#allocation2 + $0x358] sm:$0xff]
    %v227 = vld [vmem:[#allocation2 + $0x360] sm:$0xff]
    %v228 = vld [vmem:[#allocation2 + $0x368] sm:$0xff]
    %v229 = vld [vmem:[#allocation2 + $0x370] sm:$0xff]
    %v230 = vld [vmem:[#allocation2 + $0x378] sm:$0xff]
    %v231 = vld [vmem:[#allocation2 + $0x380] sm:$0xff]
    %v232 = vld [vmem:[#allocation2 + $0x388] sm:$0xff]
    %v233 = vld [vmem:[#allocation2 + $0x390] sm:$0xff]
    %v234 = vld [vmem:[#allocation2 + $0x398] sm:$0xff]
    %v235 = vld [vmem:[#allocation2 + $0x3a0] sm:$0xff]
    %v236 = vld [vmem:[#allocation2 + $0x3a8] sm:$0xff]
    %v237 = vld [vmem:[#allocation2 + $0x3b0] sm:$0xff]
    %v238 = vld [vmem:[#allocation2 + $0x3b8] sm:$0xff]
    %v239 = vld [vmem:[#allocation2 + $0x3c0] sm:$0xff]
    %v240 = vld [vmem:[#allocation2 + $0x3c8] sm:$0xff]
    %v241 = vld [vmem:[#allocation2 + $0x3d0] sm:$0xff]
    %v242 = vld [vmem:[#allocation2 + $0x3d8] sm:$0xff]
    %v243 = vld [vmem:[#allocation2 + $0x3e0] sm:$0xff]
    %v244 = vld [vmem:[#allocation2 + $0x3e8] sm:$0xff]
    %v245 = vld [vmem:[#allocation2 + $0x3f0] sm:$0xff]
    %v246 = vld [vmem:[#allocation2 + $0x3f8] sm:$0xff]
    %v247 = vld [vmem:[#allocation2 + $0x400] sm:$0xff]
    %v248 = vld [vmem:[#allocation2 + $0x408] sm:$0xff]
    %v249 = vld [vmem:[#allocation2 + $0x410] sm:$0xff]
    %v250 = vld [vmem:[#allocation2 + $0x418] sm:$0xff]
    %v251 = vld [vmem:[#allocation2 + $0x420] sm:$0xff]
    %v252 = vld [vmem:[#allocation2 + $0x428] sm:$0xff]
    %v253 = vld [vmem:[#allocation2 + $0x430] sm:$0xff]
    %v254 = vld [vmem:[#allocation2 + $0x438] sm:$0xff]
    %v255 = vld [vmem:[#allocation2 + $0x440] sm:$0xff]
    %v256 = vld [vmem:[#allocation2 + $0x448] sm:$0xff]
    %v257 = vld [vmem:[#allocation2 + $0x450] sm:$0xff]
    %v258 = vld [vmem:[#allocation2 + $0x458] sm:$0xff]
    %v259 = vld [vmem:[#allocation2 + $0x460] sm:$0xff]
    %v260 = vld [vmem:[#allocation2 + $0x468] sm:$0xff]
    %v261 = vld [vmem:[#allocation2 + $0x470] sm:$0xff]
    %v262 = vld [vmem:[#allocation2 + $0x478] sm:$0xff]
    %v263 = vld [vmem:[#allocation2 + $0x480] sm:$0xff]
    %v264 = vld [vmem:[#allocation2 + $0x488] sm:$0xff]
    %v265 = vld [vmem:[#allocation2 + $0x490] sm:$0xff]
    %v266 = vld [vmem:[#allocation2 + $0x498] sm:$0xff]
    %v267 = vld [vmem:[#allocation2 + $0x4a0] sm:$0xff]
    %v268 = vld [vmem:[#allocation2 + $0x4a8] sm:$0xff]
    %v269 = vld [vmem:[#allocation2 + $0x4b0] sm:$0xff]
    %v270 = vld [vmem:[#allocation2 + $0x4b8] sm:$0xff]
    %v271 = vld [vmem:[#allocation2 + $0x4c0] sm:$0xff]
    %v272 = vld [vmem:[#allocation2 + $0x4c8] sm:$0xff]
    %v273 = vld [vmem:[#allocation2 + $0x4d0] sm:$0xff]
    %v274 = vld [vmem:[#allocation2 + $0x4d8] sm:$0xff]
    %v275 = vld [vmem:[#allocation2 + $0x4e0] sm:$0xff]
    %v276 = vld [vmem:[#allocation2 + $0x4e8] sm:$0xff]
    %v277 = vld [vmem:[#allocation2 + $0x4f0] sm:$0xff]
    %v278 = vld [vmem:[#allocation2 + $0x4f8] sm:$0xff]
    %v279 = vld [vmem:[#allocation2 + $0x500] sm:$0xff]
    %v280 = vld [vmem:[#allocation2 + $0x508] sm:$0xff]
    %v281 = vld [vmem:[#allocation2 + $0x510] sm:$0xff]
    %v282 = vld [vmem:[#allocation2 + $0x518] sm:$0xff]
    %v283 = vld [vmem:[#allocation2 + $0x520] sm:$0xff]
    %v284 = vld [vmem:[#allocation2 + $0x528] sm:$0xff]
    %v285 = vld [vmem:[#allocation2 + $0x530] sm:$0xff]
    %v286 = vld [vmem:[#allocation2 + $0x538] sm:$0xff]
    %v287 = vld [vmem:[#allocation2 + $0x540] sm:$0xff]
    %v288 = vld [vmem:[#allocation2 + $0x548] sm:$0xff]
    %v289 = vld [vmem:[#allocation2 + $0x550] sm:$0xff]
    %v290 = vld [vmem:[#allocation2 + $0x558] sm:$0xff]
    %v291 = vld [vmem:[#allocation2 + $0x560] sm:$0xff]
    %v292 = vld [vmem:[#allocation2 + $0x568] sm:$0xff]
    %v293 = vld [vmem:[#allocation2 + $0x570] sm:$0xff]
    %v294 = vld [vmem:[#allocation2 + $0x578] sm:$0xff]
    %v295 = vld [vmem:[#allocation2 + $0x580] sm:$0xff]
    %v296 = vld [vmem:[#allocation2 + $0x588] sm:$0xff]
    %v297 = vld [vmem:[#allocation2 + $0x590] sm:$0xff]
    %v298 = vld [vmem:[#allocation2 + $0x598] sm:$0xff]
    %v299 = vld [vmem:[#allocation2 + $0x5a0] sm:$0xff]
    %v300 = vld [vmem:[#allocation2 + $0x5a8] sm:$0xff]
    %v301 = vld [vmem:[#allocation2 + $0x5b0] sm:$0xff]
    %v302 = vld [vmem:[#allocation2 + $0x5b8] sm:$0xff]
    %v303 = vld [vmem:[#allocation2 + $0x5c0] sm:$0xff]
    %v304 = vld [vmem:[#allocation2 + $0x5c8] sm:$0xff]
    %v305 = vld [vmem:[#allocation2 + $0x5d0] sm:$0xff]
    %v306 = vld [vmem:[#allocation2 + $0x5d8] sm:$0xff]
    %v307 = vld [vmem:[#allocation2 + $0x5e0] sm:$0xff]
    %v308 = vld [vmem:[#allocation2 + $0x5e8] sm:$0xff]
    %v309 = vld [vmem:[#allocation2 + $0x5f0] sm:$0xff]
    %v310 = vld [vmem:[#allocation2 + $0x5f8] sm:$0xff]
    %v311 = vld [vmem:[#allocation2 + $0x600] sm:$0xff]
    %v312 = vld [vmem:[#allocation2 + $0x608] sm:$0xff]
    %v313 = vld [vmem:[#allocation2 + $0x610] sm:$0xff]
    %v314 = vld [vmem:[#allocation2 + $0x618] sm:$0xff]
    %v315 = vld [vmem:[#allocation2 + $0x620] sm:$0xff]
    %v316 = vld [vmem:[#allocation2 + $0x628] sm:$0xff]
    %v317 = vld [vmem:[#allocation2 + $0x630] sm:$0xff]
    %v318 = vld [vmem:[#allocation2 + $0x638] sm:$0xff]
    %v319 = vld [vmem:[#allocation2 + $0x640] sm:$0xff]
    %v320 = vld [vmem:[#allocation2 + $0x648] sm:$0xff]
    %v321 = vld [vmem:[#allocation2 + $0x650] sm:$0xff]
    %v322 = vld [vmem:[#allocation2 + $0x658] sm:$0xff]
    %v323 = vld [vmem:[#allocation2 + $0x660] sm:$0xff]
    %v324 = vld [vmem:[#allocation2 + $0x668] sm:$0xff]
    %v325 = vld [vmem:[#allocation2 + $0x670] sm:$0xff]
    %v326 = vld [vmem:[#allocation2 + $0x678] sm:$0xff]
    %v327 = vld [vmem:[#allocation2 + $0x680] sm:$0xff]
    %v328 = vld [vmem:[#allocation2 + $0x688] sm:$0xff]
    %v329 = vld [vmem:[#allocation2 + $0x690] sm:$0xff]
    %v330 = vld [vmem:[#allocation2 + $0x698] sm:$0xff]
    %v331 = vld [vmem:[#allocation2 + $0x6a0] sm:$0xff]
    %v332 = vld [vmem:[#allocation2 + $0x6a8] sm:$0xff]
    %v333 = vld [vmem:[#allocation2 + $0x6b0] sm:$0xff]
    %v334 = vld [vmem:[#allocation2 + $0x6b8] sm:$0xff]
    %v335 = vld [vmem:[#allocation2 + $0x6c0] sm:$0xff]
    %v336 = vld [vmem:[#allocation2 + $0x6c8] sm:$0xff]
    %v337 = vld [vmem:[#allocation2 + $0x6d0] sm:$0xff]
    %v338 = vld [vmem:[#allocation2 + $0x6d8] sm:$0xff]
    %v339 = vld [vmem:[#allocation2 + $0x6e0] sm:$0xff]
    %v340 = vld [vmem:[#allocation2 + $0x6e8] sm:$0xff]
    %v341 = vld [vmem:[#allocation2 + $0x6f0] sm:$0xff]
    %v342 = vld [vmem:[#allocation2 + $0x6f8] sm:$0xff]
    %v343 = vld [vmem:[%s2] sm:$0xf]
    %v345 = vlaneseq
    %v346 = vshrl.u32 %v345, 7
    %v347 = vsub.s32 0, %v346
    %v348 = vrot.slane %v343, %v347
    %v349 = vlaneseq
    %v350 = vshrl.u32 %v349, 7
    %v351 = vsub.s32 1, %v350
    %v352 = vrot.slane %v343, %v351
    %v353 = vlaneseq
    %v354 = vshrl.u32 %v353, 7
    %v355 = vsub.s32 2, %v354
    %v356 = vrot.slane %v343, %v355
    %v357 = vlaneseq
    %v358 = vshrl.u32 %v357, 7
    %v359 = vsub.s32 3, %v358
    %v360 = vrot.slane %v343, %v359
    %v429 = vunpack.c.l.b16 %v55
    %v430 = vunpack.c.h.b16 %v55
    %v431 = vunpack.c.l.b16 %v56
    %v432 = vunpack.c.h.b16 %v56
    %v433 = vunpack.c.l.b16 %v57
    %v434 = vunpack.c.h.b16 %v57
    %v435 = vunpack.c.l.b16 %v58
    %v436 = vunpack.c.l.b16 %v59
    %v437 = vunpack.c.h.b16 %v59
    %v438 = vunpack.c.l.b16 %v60
    %v439 = vunpack.c.h.b16 %v60
    %v440 = vunpack.c.l.b16 %v61
    %v441 = vunpack.c.h.b16 %v61
    %v442 = vunpack.c.l.b16 %v62
    %v443 = vunpack.c.l.b16 %v63
    %v444 = vunpack.c.h.b16 %v63
    %v445 = vunpack.c.l.b16 %v64
    %v446 = vunpack.c.h.b16 %v64
    %v447 = vunpack.c.l.b16 %v65
    %v448 = vunpack.c.h.b16 %v65
    %v449 = vunpack.c.l.b16 %v66
    %v450 = vunpack.c.l.b16 %v67
    %v451 = vunpack.c.h.b16 %v67
    %v452 = vunpack.c.l.b16 %v68
    %v453 = vunpack.c.h.b16 %v68
    %v454 = vunpack.c.l.b16 %v69
    %v455 = vunpack.c.h.b16 %v69
    %v456 = vunpack.c.l.b16 %v70
    %v457 = vunpack.c.l.b16 %v71
    %v458 = vunpack.c.h.b16 %v71
    %v459 = vunpack.c.l.b16 %v72
    %v460 = vunpack.c.h.b16 %v72
    %v461 = vunpack.c.l.b16 %v73
    %v462 = vunpack.c.h.b16 %v73
    %v463 = vunpack.c.l.b16 %v74
    %v464 = vunpack.c.l.b16 %v75
    %v465 = vunpack.c.h.b16 %v75
    %v466 = vunpack.c.l.b16 %v76
    %v467 = vunpack.c.h.b16 %v76
    %v468 = vunpack.c.l.b16 %v77
    %v469 = vunpack.c.h.b16 %v77
    %v470 = vunpack.c.l.b16 %v78
    %v471 = vunpack.c.l.b16 %v79
    %v472 = vunpack.c.h.b16 %v79
    %v473 = vunpack.c.l.b16 %v80
    %v474 = vunpack.c.h.b16 %v80
    %v475 = vunpack.c.l.b16 %v81
    %v476 = vunpack.c.h.b16 %v81
    %v477 = vunpack.c.l.b16 %v82
    %v478 = vunpack.c.l.b16 %v83
    %v479 = vunpack.c.h.b16 %v83
    %v480 = vunpack.c.l.b16 %v84
    %v481 = vunpack.c.h.b16 %v84
    %v482 = vunpack.c.l.b16 %v85
    %v483 = vunpack.c.h.b16 %v85
    %v484 = vunpack.c.l.b16 %v86
    %v485 = vunpack.c.l.b16 %v87
    %v486 = vunpack.c.h.b16 %v87
    %v487 = vunpack.c.l.b16 %v88
    %v488 = vunpack.c.h.b16 %v88
    %v489 = vunpack.c.l.b16 %v89
    %v490 = vunpack.c.h.b16 %v89
    %v491 = vunpack.c.l.b16 %v90
    %v492 = vunpack.c.l.b16 %v91
    %v493 = vunpack.c.h.b16 %v91
    %v494 = vunpack.c.l.b16 %v92
    %v495 = vunpack.c.h.b16 %v92
    %v496 = vunpack.c.l.b16 %v93
    %v497 = vunpack.c.h.b16 %v93
    %v498 = vunpack.c.l.b16 %v94
    %v499 = vunpack.c.l.b16 %v95
    %v500 = vunpack.c.h.b16 %v95
    %v501 = vunpack.c.l.b16 %v96
    %v502 = vunpack.c.h.b16 %v96
    %v503 = vunpack.c.l.b16 %v97
    %v504 = vunpack.c.h.b16 %v97
    %v505 = vunpack.c.l.b16 %v98
    %v506 = vunpack.c.l.b16 %v99
    %v507 = vunpack.c.h.b16 %v99
    %v508 = vunpack.c.l.b16 %v100
    %v509 = vunpack.c.h.b16 %v100
    %v510 = vunpack.c.l.b16 %v101
    %v511 = vunpack.c.h.b16 %v101
    %v512 = vunpack.c.l.b16 %v102
    %v513 = vunpack.c.l.b16 %v103
    %v514 = vunpack.c.h.b16 %v103
    %v515 = vunpack.c.l.b16 %v104
    %v516 = vunpack.c.h.b16 %v104
    %v517 = vunpack.c.l.b16 %v105
    %v518 = vunpack.c.h.b16 %v105
    %v519 = vunpack.c.l.b16 %v106
    %v520 = vunpack.c.l.b16 %v107
    %v521 = vunpack.c.h.b16 %v107
    %v522 = vunpack.c.l.b16 %v108
    %v523 = vunpack.c.h.b16 %v108
    %v524 = vunpack.c.l.b16 %v109
    %v525 = vunpack.c.h.b16 %v109
    %v526 = vunpack.c.l.b16 %v110
    %v527 = vunpack.c.l.b16 %v111
    %v528 = vunpack.c.h.b16 %v111
    %v529 = vunpack.c.l.b16 %v112
    %v530 = vunpack.c.h.b16 %v112
    %v531 = vunpack.c.l.b16 %v113
    %v532 = vunpack.c.h.b16 %v113
    %v533 = vunpack.c.l.b16 %v114
    %v534 = vunpack.c.l.b16 %v115
    %v535 = vunpack.c.h.b16 %v115
    %v536 = vunpack.c.l.b16 %v116
    %v537 = vunpack.c.h.b16 %v116
    %v538 = vunpack.c.l.b16 %v117
    %v539 = vunpack.c.h.b16 %v117
    %v540 = vunpack.c.l.b16 %v118
    %v541 = vpack.c.b16 %v436, %v429
    %v542 = vpack.c.b16 %v437, %v430
    %v543 = vpack.c.b16 %v438, %v431
    %v544 = vpack.c.b16 %v439, %v432
    %v545 = vpack.c.b16 %v440, %v433
    %v546 = vpack.c.b16 %v441, %v434
    %v547 = vpack.c.b16 %v442, %v435
    %v548 = vpack.c.b16 %v450, %v443
    %v549 = vpack.c.b16 %v451, %v444
    %v550 = vpack.c.b16 %v452, %v445
    %v551 = vpack.c.b16 %v453, %v446
    %v552 = vpack.c.b16 %v454, %v447
    %v553 = vpack.c.b16 %v455, %v448
    %v554 = vpack.c.b16 %v456, %v449
    %v555 = vpack.c.b16 %v464, %v457
    %v556 = vpack.c.b16 %v465, %v458
    %v557 = vpack.c.b16 %v466, %v459
    %v558 = vpack.c.b16 %v467, %v460
    %v559 = vpack.c.b16 %v468, %v461
    %v560 = vpack.c.b16 %v469, %v462
    %v561 = vpack.c.b16 %v470, %v463
    %v562 = vpack.c.b16 %v478, %v471
    %v563 = vpack.c.b16 %v479, %v472
    %v564 = vpack.c.b16 %v480, %v473
    %v565 = vpack.c.b16 %v481, %v474
    %v566 = vpack.c.b16 %v482, %v475
    %v567 = vpack.c.b16 %v483, %v476
    %v568 = vpack.c.b16 %v484, %v477
    %v569 = vpack.c.b16 %v492, %v485
    %v570 = vpack.c.b16 %v493, %v486
    %v571 = vpack.c.b16 %v494, %v487
    %v572 = vpack.c.b16 %v495, %v488
    %v573 = vpack.c.b16 %v496, %v489
    %v574 = vpack.c.b16 %v497, %v490
    %v575 = vpack.c.b16 %v498, %v491
    %v576 = vpack.c.b16 %v506, %v499
    %v577 = vpack.c.b16 %v507, %v500
    %v578 = vpack.c.b16 %v508, %v501
    %v579 = vpack.c.b16 %v509, %v502
    %v580 = vpack.c.b16 %v510, %v503
    %v581 = vpack.c.b16 %v511, %v504
    %v582 = vpack.c.b16 %v512, %v505
    %v583 = vpack.c.b16 %v520, %v513
    %v584 = vpack.c.b16 %v521, %v514
    %v585 = vpack.c.b16 %v522, %v515
    %v586 = vpack.c.b16 %v523, %v516
    %v587 = vpack.c.b16 %v524, %v517
    %v588 = vpack.c.b16 %v525, %v518
    %v589 = vpack.c.b16 %v526, %v519
    %v590 = vpack.c.b16 %v534, %v527
    %v591 = vpack.c.b16 %v535, %v528
    %v592 = vpack.c.b16 %v536, %v529
    %v593 = vpack.c.b16 %v537, %v530
    %v594 = vpack.c.b16 %v538, %v531
    %v595 = vpack.c.b16 %v539, %v532
    %v596 = vpack.c.b16 %v540, %v533
    %v877 = vunpack.c.l.b16 %v119
    %v878 = vunpack.c.h.b16 %v119
    %v879 = vunpack.c.l.b16 %v120
    %v880 = vunpack.c.h.b16 %v120
    %v881 = vunpack.c.l.b16 %v121
    %v882 = vunpack.c.h.b16 %v121
    %v883 = vunpack.c.l.b16 %v122
    %v884 = vunpack.c.h.b16 %v122
    %v885 = vunpack.c.l.b16 %v123
    %v886 = vunpack.c.h.b16 %v123
    %v887 = vunpack.c.l.b16 %v124
    %v888 = vunpack.c.h.b16 %v124
    %v889 = vunpack.c.l.b16 %v125
    %v890 = vunpack.c.h.b16 %v125
    %v891 = vunpack.c.l.b16 %v126
    %v892 = vunpack.c.h.b16 %v126
    %v893 = vunpack.c.l.b16 %v127
    %v894 = vunpack.c.h.b16 %v127
    %v895 = vunpack.c.l.b16 %v128
    %v896 = vunpack.c.h.b16 %v128
    %v897 = vunpack.c.l.b16 %v129
    %v898 = vunpack.c.h.b16 %v129
    %v899 = vunpack.c.l.b16 %v130
    %v900 = vunpack.c.h.b16 %v130
    %v901 = vunpack.c.l.b16 %v131
    %v902 = vunpack.c.h.b16 %v131
    %v903 = vunpack.c.l.b16 %v132
    %v904 = vunpack.c.h.b16 %v132
    %v905 = vunpack.c.l.b16 %v133
    %v906 = vunpack.c.h.b16 %v133
    %v907 = vunpack.c.l.b16 %v134
    %v908 = vunpack.c.h.b16 %v134
    %v909 = vunpack.c.l.b16 %v135
    %v910 = vunpack.c.h.b16 %v135
    %v911 = vunpack.c.l.b16 %v136
    %v912 = vunpack.c.h.b16 %v136
    %v913 = vunpack.c.l.b16 %v137
    %v914 = vunpack.c.h.b16 %v137
    %v915 = vunpack.c.l.b16 %v138
    %v916 = vunpack.c.h.b16 %v138
    %v917 = vunpack.c.l.b16 %v139
    %v918 = vunpack.c.h.b16 %v139
    %v919 = vunpack.c.l.b16 %v140
    %v920 = vunpack.c.h.b16 %v140
    %v921 = vunpack.c.l.b16 %v141
    %v922 = vunpack.c.h.b16 %v141
    %v923 = vunpack.c.l.b16 %v142
    %v924 = vunpack.c.h.b16 %v142
    %v925 = vunpack.c.l.b16 %v143
    %v926 = vunpack.c.h.b16 %v143
    %v927 = vunpack.c.l.b16 %v144
    %v928 = vunpack.c.h.b16 %v144
    %v929 = vunpack.c.l.b16 %v145
    %v930 = vunpack.c.h.b16 %v145
    %v931 = vunpack.c.l.b16 %v146
    %v932 = vunpack.c.h.b16 %v146
    %v933 = vunpack.c.l.b16 %v147
    %v934 = vunpack.c.h.b16 %v147
    %v935 = vunpack.c.l.b16 %v148
    %v936 = vunpack.c.h.b16 %v148
    %v937 = vunpack.c.l.b16 %v149
    %v938 = vunpack.c.h.b16 %v149
    %v939 = vunpack.c.l.b16 %v150
    %v940 = vunpack.c.h.b16 %v150
    %v941 = vunpack.c.l.b16 %v151
    %v942 = vunpack.c.h.b16 %v151
    %v943 = vunpack.c.l.b16 %v152
    %v944 = vunpack.c.h.b16 %v152
    %v945 = vunpack.c.l.b16 %v153
    %v946 = vunpack.c.h.b16 %v153
    %v947 = vunpack.c.l.b16 %v154
    %v948 = vunpack.c.h.b16 %v154
    %v949 = vunpack.c.l.b16 %v155
    %v950 = vunpack.c.h.b16 %v155
    %v951 = vunpack.c.l.b16 %v156
    %v952 = vunpack.c.h.b16 %v156
    %v953 = vunpack.c.l.b16 %v157
    %v954 = vunpack.c.h.b16 %v157
    %v955 = vunpack.c.l.b16 %v158
    %v956 = vunpack.c.h.b16 %v158
    %v957 = vunpack.c.l.b16 %v159
    %v958 = vunpack.c.h.b16 %v159
    %v959 = vunpack.c.l.b16 %v160
    %v960 = vunpack.c.h.b16 %v160
    %v961 = vunpack.c.l.b16 %v161
    %v962 = vunpack.c.h.b16 %v161
    %v963 = vunpack.c.l.b16 %v162
    %v964 = vunpack.c.h.b16 %v162
    %v965 = vunpack.c.l.b16 %v163
    %v966 = vunpack.c.h.b16 %v163
    %v967 = vunpack.c.l.b16 %v164
    %v968 = vunpack.c.h.b16 %v164
    %v969 = vunpack.c.l.b16 %v165
    %v970 = vunpack.c.h.b16 %v165
    %v971 = vunpack.c.l.b16 %v166
    %v972 = vunpack.c.h.b16 %v166
    %v973 = vunpack.c.l.b16 %v167
    %v974 = vunpack.c.h.b16 %v167
    %v975 = vunpack.c.l.b16 %v168
    %v976 = vunpack.c.h.b16 %v168
    %v977 = vunpack.c.l.b16 %v169
    %v978 = vunpack.c.h.b16 %v169
    %v979 = vunpack.c.l.b16 %v170
    %v980 = vunpack.c.h.b16 %v170
    %v981 = vunpack.c.l.b16 %v171
    %v982 = vunpack.c.h.b16 %v171
    %v983 = vunpack.c.l.b16 %v172
    %v984 = vunpack.c.h.b16 %v172
    %v985 = vunpack.c.l.b16 %v173
    %v986 = vunpack.c.h.b16 %v173
    %v987 = vunpack.c.l.b16 %v174
    %v988 = vunpack.c.h.b16 %v174
    %v989 = vunpack.c.l.b16 %v175
    %v990 = vunpack.c.h.b16 %v175
    %v991 = vunpack.c.l.b16 %v176
    %v992 = vunpack.c.h.b16 %v176
    %v993 = vunpack.c.l.b16 %v177
    %v994 = vunpack.c.h.b16 %v177
    %v995 = vunpack.c.l.b16 %v178
    %v996 = vunpack.c.h.b16 %v178
    %v997 = vunpack.c.l.b16 %v179
    %v998 = vunpack.c.h.b16 %v179
    %v999 = vunpack.c.l.b16 %v180
    %v1000 = vunpack.c.h.b16 %v180
    %v1001 = vunpack.c.l.b16 %v181
    %v1002 = vunpack.c.h.b16 %v181
    %v1003 = vunpack.c.l.b16 %v182
    %v1004 = vunpack.c.h.b16 %v182
    %v1005 = vunpack.c.l.b16 %v183
    %v1006 = vunpack.c.h.b16 %v183
    %v1007 = vunpack.c.l.b16 %v184
    %v1008 = vunpack.c.h.b16 %v184
    %v1009 = vunpack.c.l.b16 %v185
    %v1010 = vunpack.c.h.b16 %v185
    %v1011 = vunpack.c.l.b16 %v186
    %v1012 = vunpack.c.h.b16 %v186
    %v1013 = vunpack.c.l.b16 %v187
    %v1014 = vunpack.c.h.b16 %v187
    %v1015 = vunpack.c.l.b16 %v188
    %v1016 = vunpack.c.h.b16 %v188
    %v1017 = vunpack.c.l.b16 %v189
    %v1018 = vunpack.c.h.b16 %v189
    %v1019 = vunpack.c.l.b16 %v190
    %v1020 = vunpack.c.h.b16 %v190
    %v1021 = vunpack.c.l.b16 %v191
    %v1022 = vunpack.c.h.b16 %v191
    %v1023 = vunpack.c.l.b16 %v192
    %v1024 = vunpack.c.h.b16 %v192
    %v1025 = vunpack.c.l.b16 %v193
    %v1026 = vunpack.c.h.b16 %v193
    %v1027 = vunpack.c.l.b16 %v194
    %v1028 = vunpack.c.h.b16 %v194
    %v1029 = vunpack.c.l.b16 %v195
    %v1030 = vunpack.c.h.b16 %v195
    %v1031 = vunpack.c.l.b16 %v196
    %v1032 = vunpack.c.h.b16 %v196
    %v1033 = vunpack.c.l.b16 %v197
    %v1034 = vunpack.c.h.b16 %v197
    %v1035 = vunpack.c.l.b16 %v198
    %v1036 = vunpack.c.h.b16 %v198
    %v1037 = vunpack.c.l.b16 %v199
    %v1038 = vunpack.c.h.b16 %v199
    %v1039 = vunpack.c.l.b16 %v200
    %v1040 = vunpack.c.h.b16 %v200
    %v1041 = vunpack.c.l.b16 %v201
    %v1042 = vunpack.c.h.b16 %v201
    %v1043 = vunpack.c.l.b16 %v202
    %v1044 = vunpack.c.h.b16 %v202
    %v1045 = vunpack.c.l.b16 %v203
    %v1046 = vunpack.c.h.b16 %v203
    %v1047 = vunpack.c.l.b16 %v204
    %v1048 = vunpack.c.h.b16 %v204
    %v1049 = vunpack.c.l.b16 %v205
    %v1050 = vunpack.c.h.b16 %v205
    %v1051 = vunpack.c.l.b16 %v206
    %v1052 = vunpack.c.h.b16 %v206
    %v1053 = vunpack.c.l.b16 %v207
    %v1054 = vunpack.c.h.b16 %v207
    %v1055 = vunpack.c.l.b16 %v208
    %v1056 = vunpack.c.h.b16 %v208
    %v1057 = vunpack.c.l.b16 %v209
    %v1058 = vunpack.c.h.b16 %v209
    %v1059 = vunpack.c.l.b16 %v210
    %v1060 = vunpack.c.h.b16 %v210
    %v1061 = vunpack.c.l.b16 %v211
    %v1062 = vunpack.c.h.b16 %v211
    %v1063 = vunpack.c.l.b16 %v212
    %v1064 = vunpack.c.h.b16 %v212
    %v1065 = vunpack.c.l.b16 %v213
    %v1066 = vunpack.c.h.b16 %v213
    %v1067 = vunpack.c.l.b16 %v214
    %v1068 = vunpack.c.h.b16 %v214
    %v1069 = vunpack.c.l.b16 %v215
    %v1070 = vunpack.c.h.b16 %v215
    %v1071 = vunpack.c.l.b16 %v216
    %v1072 = vunpack.c.h.b16 %v216
    %v1073 = vunpack.c.l.b16 %v217
    %v1074 = vunpack.c.h.b16 %v217
    %v1075 = vunpack.c.l.b16 %v218
    %v1076 = vunpack.c.h.b16 %v218
    %v1077 = vunpack.c.l.b16 %v219
    %v1078 = vunpack.c.h.b16 %v219
    %v1079 = vunpack.c.l.b16 %v220
    %v1080 = vunpack.c.h.b16 %v220
    %v1081 = vunpack.c.l.b16 %v221
    %v1082 = vunpack.c.h.b16 %v221
    %v1083 = vunpack.c.l.b16 %v222
    %v1084 = vunpack.c.h.b16 %v222
    %v1085 = vunpack.c.l.b16 %v223
    %v1086 = vunpack.c.h.b16 %v223
    %v1087 = vunpack.c.l.b16 %v224
    %v1088 = vunpack.c.h.b16 %v224
    %v1089 = vunpack.c.l.b16 %v225
    %v1090 = vunpack.c.h.b16 %v225
    %v1091 = vunpack.c.l.b16 %v226
    %v1092 = vunpack.c.h.b16 %v226
    %v1093 = vunpack.c.l.b16 %v227
    %v1094 = vunpack.c.h.b16 %v227
    %v1095 = vunpack.c.l.b16 %v228
    %v1096 = vunpack.c.h.b16 %v228
    %v1097 = vunpack.c.l.b16 %v229
    %v1098 = vunpack.c.h.b16 %v229
    %v1099 = vunpack.c.l.b16 %v230
    %v1100 = vunpack.c.h.b16 %v230
    %v1101 = vunpack.c.l.b16 %v231
    %v1102 = vunpack.c.h.b16 %v231
    %v1103 = vunpack.c.l.b16 %v232
    %v1104 = vunpack.c.h.b16 %v232
    %v1105 = vunpack.c.l.b16 %v233
    %v1106 = vunpack.c.h.b16 %v233
    %v1107 = vunpack.c.l.b16 %v234
    %v1108 = vunpack.c.h.b16 %v234
    %v1109 = vunpack.c.l.b16 %v235
    %v1110 = vunpack.c.h.b16 %v235
    %v1111 = vunpack.c.l.b16 %v236
    %v1112 = vunpack.c.h.b16 %v236
    %v1113 = vunpack.c.l.b16 %v237
    %v1114 = vunpack.c.h.b16 %v237
    %v1115 = vunpack.c.l.b16 %v238
    %v1116 = vunpack.c.h.b16 %v238
    %v1117 = vunpack.c.l.b16 %v239
    %v1118 = vunpack.c.h.b16 %v239
    %v1119 = vunpack.c.l.b16 %v240
    %v1120 = vunpack.c.h.b16 %v240
    %v1121 = vunpack.c.l.b16 %v241
    %v1122 = vunpack.c.h.b16 %v241
    %v1123 = vunpack.c.l.b16 %v242
    %v1124 = vunpack.c.h.b16 %v242
    %v1125 = vunpack.c.l.b16 %v243
    %v1126 = vunpack.c.h.b16 %v243
    %v1127 = vunpack.c.l.b16 %v244
    %v1128 = vunpack.c.h.b16 %v244
    %v1129 = vunpack.c.l.b16 %v245
    %v1130 = vunpack.c.h.b16 %v245
    %v1131 = vunpack.c.l.b16 %v246
    %v1132 = vunpack.c.h.b16 %v246
    %v1133 = vunpack.c.l.b16 %v247
    %v1134 = vunpack.c.h.b16 %v247
    %v1135 = vunpack.c.l.b16 %v248
    %v1136 = vunpack.c.h.b16 %v248
    %v1137 = vunpack.c.l.b16 %v249
    %v1138 = vunpack.c.h.b16 %v249
    %v1139 = vunpack.c.l.b16 %v250
    %v1140 = vunpack.c.h.b16 %v250
    %v1141 = vunpack.c.l.b16 %v251
    %v1142 = vunpack.c.h.b16 %v251
    %v1143 = vunpack.c.l.b16 %v252
    %v1144 = vunpack.c.h.b16 %v252
    %v1145 = vunpack.c.l.b16 %v253
    %v1146 = vunpack.c.h.b16 %v253
    %v1147 = vunpack.c.l.b16 %v254
    %v1148 = vunpack.c.h.b16 %v254
    %v1149 = vunpack.c.l.b16 %v255
    %v1150 = vunpack.c.h.b16 %v255
    %v1151 = vunpack.c.l.b16 %v256
    %v1152 = vunpack.c.h.b16 %v256
    %v1153 = vunpack.c.l.b16 %v257
    %v1154 = vunpack.c.h.b16 %v257
    %v1155 = vunpack.c.l.b16 %v258
    %v1156 = vunpack.c.h.b16 %v258
    %v1157 = vunpack.c.l.b16 %v259
    %v1158 = vunpack.c.h.b16 %v259
    %v1159 = vunpack.c.l.b16 %v260
    %v1160 = vunpack.c.h.b16 %v260
    %v1161 = vunpack.c.l.b16 %v261
    %v1162 = vunpack.c.h.b16 %v261
    %v1163 = vunpack.c.l.b16 %v262
    %v1164 = vunpack.c.h.b16 %v262
    %v1165 = vunpack.c.l.b16 %v263
    %v1166 = vunpack.c.h.b16 %v263
    %v1167 = vunpack.c.l.b16 %v264
    %v1168 = vunpack.c.h.b16 %v264
    %v1169 = vunpack.c.l.b16 %v265
    %v1170 = vunpack.c.h.b16 %v265
    %v1171 = vunpack.c.l.b16 %v266
    %v1172 = vunpack.c.h.b16 %v266
    %v1173 = vunpack.c.l.b16 %v267
    %v1174 = vunpack.c.h.b16 %v267
    %v1175 = vunpack.c.l.b16 %v268
    %v1176 = vunpack.c.h.b16 %v268
    %v1177 = vunpack.c.l.b16 %v269
    %v1178 = vunpack.c.h.b16 %v269
    %v1179 = vunpack.c.l.b16 %v270
    %v1180 = vunpack.c.h.b16 %v270
    %v1181 = vunpack.c.l.b16 %v271
    %v1182 = vunpack.c.h.b16 %v271
    %v1183 = vunpack.c.l.b16 %v272
    %v1184 = vunpack.c.h.b16 %v272
    %v1185 = vunpack.c.l.b16 %v273
    %v1186 = vunpack.c.h.b16 %v273
    %v1187 = vunpack.c.l.b16 %v274
    %v1188 = vunpack.c.h.b16 %v274
    %v1189 = vunpack.c.l.b16 %v275
    %v1190 = vunpack.c.h.b16 %v275
    %v1191 = vunpack.c.l.b16 %v276
    %v1192 = vunpack.c.h.b16 %v276
    %v1193 = vunpack.c.l.b16 %v277
    %v1194 = vunpack.c.h.b16 %v277
    %v1195 = vunpack.c.l.b16 %v278
    %v1196 = vunpack.c.h.b16 %v278
    %v1197 = vunpack.c.l.b16 %v279
    %v1198 = vunpack.c.h.b16 %v279
    %v1199 = vunpack.c.l.b16 %v280
    %v1200 = vunpack.c.h.b16 %v280
    %v1201 = vunpack.c.l.b16 %v281
    %v1202 = vunpack.c.h.b16 %v281
    %v1203 = vunpack.c.l.b16 %v282
    %v1204 = vunpack.c.h.b16 %v282
    %v1205 = vunpack.c.l.b16 %v283
    %v1206 = vunpack.c.h.b16 %v283
    %v1207 = vunpack.c.l.b16 %v284
    %v1208 = vunpack.c.h.b16 %v284
    %v1209 = vunpack.c.l.b16 %v285
    %v1210 = vunpack.c.h.b16 %v285
    %v1211 = vunpack.c.l.b16 %v286
    %v1212 = vunpack.c.h.b16 %v286
    %v1213 = vunpack.c.l.b16 %v287
    %v1214 = vunpack.c.h.b16 %v287
    %v1215 = vunpack.c.l.b16 %v288
    %v1216 = vunpack.c.h.b16 %v288
    %v1217 = vunpack.c.l.b16 %v289
    %v1218 = vunpack.c.h.b16 %v289
    %v1219 = vunpack.c.l.b16 %v290
    %v1220 = vunpack.c.h.b16 %v290
    %v1221 = vunpack.c.l.b16 %v291
    %v1222 = vunpack.c.h.b16 %v291
    %v1223 = vunpack.c.l.b16 %v292
    %v1224 = vunpack.c.h.b16 %v292
    %v1225 = vunpack.c.l.b16 %v293
    %v1226 = vunpack.c.h.b16 %v293
    %v1227 = vunpack.c.l.b16 %v294
    %v1228 = vunpack.c.h.b16 %v294
    %v1229 = vunpack.c.l.b16 %v295
    %v1230 = vunpack.c.h.b16 %v295
    %v1231 = vunpack.c.l.b16 %v296
    %v1232 = vunpack.c.h.b16 %v296
    %v1233 = vunpack.c.l.b16 %v297
    %v1234 = vunpack.c.h.b16 %v297
    %v1235 = vunpack.c.l.b16 %v298
    %v1236 = vunpack.c.h.b16 %v298
    %v1237 = vunpack.c.l.b16 %v299
    %v1238 = vunpack.c.h.b16 %v299
    %v1239 = vunpack.c.l.b16 %v300
    %v1240 = vunpack.c.h.b16 %v300
    %v1241 = vunpack.c.l.b16 %v301
    %v1242 = vunpack.c.h.b16 %v301
    %v1243 = vunpack.c.l.b16 %v302
    %v1244 = vunpack.c.h.b16 %v302
    %v1245 = vunpack.c.l.b16 %v303
    %v1246 = vunpack.c.h.b16 %v303
    %v1247 = vunpack.c.l.b16 %v304
    %v1248 = vunpack.c.h.b16 %v304
    %v1249 = vunpack.c.l.b16 %v305
    %v1250 = vunpack.c.h.b16 %v305
    %v1251 = vunpack.c.l.b16 %v306
    %v1252 = vunpack.c.h.b16 %v306
    %v1253 = vunpack.c.l.b16 %v307
    %v1254 = vunpack.c.h.b16 %v307
    %v1255 = vunpack.c.l.b16 %v308
    %v1256 = vunpack.c.h.b16 %v308
    %v1257 = vunpack.c.l.b16 %v309
    %v1258 = vunpack.c.h.b16 %v309
    %v1259 = vunpack.c.l.b16 %v310
    %v1260 = vunpack.c.h.b16 %v310
    %v1261 = vunpack.c.l.b16 %v311
    %v1262 = vunpack.c.h.b16 %v311
    %v1263 = vunpack.c.l.b16 %v312
    %v1264 = vunpack.c.h.b16 %v312
    %v1265 = vunpack.c.l.b16 %v313
    %v1266 = vunpack.c.h.b16 %v313
    %v1267 = vunpack.c.l.b16 %v314
    %v1268 = vunpack.c.h.b16 %v314
    %v1269 = vunpack.c.l.b16 %v315
    %v1270 = vunpack.c.h.b16 %v315
    %v1271 = vunpack.c.l.b16 %v316
    %v1272 = vunpack.c.h.b16 %v316
    %v1273 = vunpack.c.l.b16 %v317
    %v1274 = vunpack.c.h.b16 %v317
    %v1275 = vunpack.c.l.b16 %v318
    %v1276 = vunpack.c.h.b16 %v318
    %v1277 = vunpack.c.l.b16 %v319
    %v1278 = vunpack.c.h.b16 %v319
    %v1279 = vunpack.c.l.b16 %v320
    %v1280 = vunpack.c.h.b16 %v320
    %v1281 = vunpack.c.l.b16 %v321
    %v1282 = vunpack.c.h.b16 %v321
    %v1283 = vunpack.c.l.b16 %v322
    %v1284 = vunpack.c.h.b16 %v322
    %v1285 = vunpack.c.l.b16 %v323
    %v1286 = vunpack.c.h.b16 %v323
    %v1287 = vunpack.c.l.b16 %v324
    %v1288 = vunpack.c.h.b16 %v324
    %v1289 = vunpack.c.l.b16 %v325
    %v1290 = vunpack.c.h.b16 %v325
    %v1291 = vunpack.c.l.b16 %v326
    %v1292 = vunpack.c.h.b16 %v326
    %v1293 = vunpack.c.l.b16 %v327
    %v1294 = vunpack.c.h.b16 %v327
    %v1295 = vunpack.c.l.b16 %v328
    %v1296 = vunpack.c.h.b16 %v328
    %v1297 = vunpack.c.l.b16 %v329
    %v1298 = vunpack.c.h.b16 %v329
    %v1299 = vunpack.c.l.b16 %v330
    %v1300 = vunpack.c.h.b16 %v330
    %v1301 = vunpack.c.l.b16 %v331
    %v1302 = vunpack.c.h.b16 %v331
    %v1303 = vunpack.c.l.b16 %v332
    %v1304 = vunpack.c.h.b16 %v332
    %v1305 = vunpack.c.l.b16 %v333
    %v1306 = vunpack.c.h.b16 %v333
    %v1307 = vunpack.c.l.b16 %v334
    %v1308 = vunpack.c.h.b16 %v334
    %v1309 = vunpack.c.l.b16 %v335
    %v1310 = vunpack.c.h.b16 %v335
    %v1311 = vunpack.c.l.b16 %v336
    %v1312 = vunpack.c.h.b16 %v336
    %v1313 = vunpack.c.l.b16 %v337
    %v1314 = vunpack.c.h.b16 %v337
    %v1315 = vunpack.c.l.b16 %v338
    %v1316 = vunpack.c.h.b16 %v338
    %v1317 = vunpack.c.l.b16 %v339
    %v1318 = vunpack.c.h.b16 %v339
    %v1319 = vunpack.c.l.b16 %v340
    %v1320 = vunpack.c.h.b16 %v340
    %v1321 = vunpack.c.l.b16 %v341
    %v1322 = vunpack.c.h.b16 %v341
    %v1323 = vunpack.c.l.b16 %v342
    %v1324 = vunpack.c.h.b16 %v342
    %v1325 = vpack.c.b16 %v881, %v877
    %v1326 = vpack.c.b16 %v882, %v878
    %v1327 = vpack.c.b16 %v883, %v879
    %v1328 = vpack.c.b16 %v884, %v880
    %v1329 = vpack.c.b16 %v889, %v885
    %v1330 = vpack.c.b16 %v890, %v886
    %v1331 = vpack.c.b16 %v891, %v887
    %v1332 = vpack.c.b16 %v892, %v888
    %v1333 = vpack.c.b16 %v897, %v893
    %v1334 = vpack.c.b16 %v898, %v894
    %v1335 = vpack.c.b16 %v899, %v895
    %v1336 = vpack.c.b16 %v900, %v896
    %v1337 = vpack.c.b16 %v905, %v901
    %v1338 = vpack.c.b16 %v906, %v902
    %v1339 = vpack.c.b16 %v907, %v903
    %v1340 = vpack.c.b16 %v908, %v904
    %v1341 = vpack.c.b16 %v913, %v909
    %v1342 = vpack.c.b16 %v914, %v910
    %v1343 = vpack.c.b16 %v915, %v911
    %v1344 = vpack.c.b16 %v916, %v912
    %v1345 = vpack.c.b16 %v921, %v917
    %v1346 = vpack.c.b16 %v922, %v918
    %v1347 = vpack.c.b16 %v923, %v919
    %v1348 = vpack.c.b16 %v924, %v920
    %v1349 = vpack.c.b16 %v929, %v925
    %v1350 = vpack.c.b16 %v930, %v926
    %v1351 = vpack.c.b16 %v931, %v927
    %v1352 = vpack.c.b16 %v932, %v928
    %v1353 = vpack.c.b16 %v937, %v933
    %v1354 = vpack.c.b16 %v938, %v934
    %v1355 = vpack.c.b16 %v939, %v935
    %v1356 = vpack.c.b16 %v940, %v936
    %v1357 = vpack.c.b16 %v945, %v941
    %v1358 = vpack.c.b16 %v946, %v942
    %v1359 = vpack.c.b16 %v947, %v943
    %v1360 = vpack.c.b16 %v948, %v944
    %v1361 = vpack.c.b16 %v953, %v949
    %v1362 = vpack.c.b16 %v954, %v950
    %v1363 = vpack.c.b16 %v955, %v951
    %v1364 = vpack.c.b16 %v956, %v952
    %v1365 = vpack.c.b16 %v961, %v957
    %v1366 = vpack.c.b16 %v962, %v958
    %v1367 = vpack.c.b16 %v963, %v959
    %v1368 = vpack.c.b16 %v964, %v960
    %v1369 = vpack.c.b16 %v969, %v965
    %v1370 = vpack.c.b16 %v970, %v966
    %v1371 = vpack.c.b16 %v971, %v967
    %v1372 = vpack.c.b16 %v972, %v968
    %v1373 = vpack.c.b16 %v977, %v973
    %v1374 = vpack.c.b16 %v978, %v974
    %v1375 = vpack.c.b16 %v979, %v975
    %v1376 = vpack.c.b16 %v980, %v976
    %v1377 = vpack.c.b16 %v985, %v981
    %v1378 = vpack.c.b16 %v986, %v982
    %v1379 = vpack.c.b16 %v987, %v983
    %v1380 = vpack.c.b16 %v988, %v984
    %v1381 = vpack.c.b16 %v993, %v989
    %v1382 = vpack.c.b16 %v994, %v990
    %v1383 = vpack.c.b16 %v995, %v991
    %v1384 = vpack.c.b16 %v996, %v992
    %v1385 = vpack.c.b16 %v1001, %v997
    %v1386 = vpack.c.b16 %v1002, %v998
    %v1387 = vpack.c.b16 %v1003, %v999
    %v1388 = vpack.c.b16 %v1004, %v1000
    %v1389 = vpack.c.b16 %v1009, %v1005
    %v1390 = vpack.c.b16 %v1010, %v1006
    %v1391 = vpack.c.b16 %v1011, %v1007
    %v1392 = vpack.c.b16 %v1012, %v1008
    %v1393 = vpack.c.b16 %v1017, %v1013
    %v1394 = vpack.c.b16 %v1018, %v1014
    %v1395 = vpack.c.b16 %v1019, %v1015
    %v1396 = vpack.c.b16 %v1020, %v1016
    %v1397 = vpack.c.b16 %v1025, %v1021
    %v1398 = vpack.c.b16 %v1026, %v1022
    %v1399 = vpack.c.b16 %v1027, %v1023
    %v1400 = vpack.c.b16 %v1028, %v1024
    %v1401 = vpack.c.b16 %v1033, %v1029
    %v1402 = vpack.c.b16 %v1034, %v1030
    %v1403 = vpack.c.b16 %v1035, %v1031
    %v1404 = vpack.c.b16 %v1036, %v1032
    %v1405 = vpack.c.b16 %v1041, %v1037
    %v1406 = vpack.c.b16 %v1042, %v1038
    %v1407 = vpack.c.b16 %v1043, %v1039
    %v1408 = vpack.c.b16 %v1044, %v1040
    %v1409 = vpack.c.b16 %v1049, %v1045
    %v1410 = vpack.c.b16 %v1050, %v1046
    %v1411 = vpack.c.b16 %v1051, %v1047
    %v1412 = vpack.c.b16 %v1052, %v1048
    %v1413 = vpack.c.b16 %v1057, %v1053
    %v1414 = vpack.c.b16 %v1058, %v1054
    %v1415 = vpack.c.b16 %v1059, %v1055
    %v1416 = vpack.c.b16 %v1060, %v1056
    %v1417 = vpack.c.b16 %v1065, %v1061
    %v1418 = vpack.c.b16 %v1066, %v1062
    %v1419 = vpack.c.b16 %v1067, %v1063
    %v1420 = vpack.c.b16 %v1068, %v1064
    %v1421 = vpack.c.b16 %v1073, %v1069
    %v1422 = vpack.c.b16 %v1074, %v1070
    %v1423 = vpack.c.b16 %v1075, %v1071
    %v1424 = vpack.c.b16 %v1076, %v1072
    %v1425 = vpack.c.b16 %v1081, %v1077
    %v1426 = vpack.c.b16 %v1082, %v1078
    %v1427 = vpack.c.b16 %v1083, %v1079
    %v1428 = vpack.c.b16 %v1084, %v1080
    %v1429 = vpack.c.b16 %v1089, %v1085
    %v1430 = vpack.c.b16 %v1090, %v1086
    %v1431 = vpack.c.b16 %v1091, %v1087
    %v1432 = vpack.c.b16 %v1092, %v1088
    %v1433 = vpack.c.b16 %v1097, %v1093
    %v1434 = vpack.c.b16 %v1098, %v1094
    %v1435 = vpack.c.b16 %v1099, %v1095
    %v1436 = vpack.c.b16 %v1100, %v1096
    %v1437 = vpack.c.b16 %v1105, %v1101
    %v1438 = vpack.c.b16 %v1106, %v1102
    %v1439 = vpack.c.b16 %v1107, %v1103
    %v1440 = vpack.c.b16 %v1108, %v1104
    %v1441 = vpack.c.b16 %v1113, %v1109
    %v1442 = vpack.c.b16 %v1114, %v1110
    %v1443 = vpack.c.b16 %v1115, %v1111
    %v1444 = vpack.c.b16 %v1116, %v1112
    %v1445 = vpack.c.b16 %v1121, %v1117
    %v1446 = vpack.c.b16 %v1122, %v1118
    %v1447 = vpack.c.b16 %v1123, %v1119
    %v1448 = vpack.c.b16 %v1124, %v1120
    %v1449 = vpack.c.b16 %v1129, %v1125
    %v1450 = vpack.c.b16 %v1130, %v1126
    %v1451 = vpack.c.b16 %v1131, %v1127
    %v1452 = vpack.c.b16 %v1132, %v1128
    %v1453 = vpack.c.b16 %v1137, %v1133
    %v1454 = vpack.c.b16 %v1138, %v1134
    %v1455 = vpack.c.b16 %v1139, %v1135
    %v1456 = vpack.c.b16 %v1140, %v1136
    %v1457 = vpack.c.b16 %v1145, %v1141
    %v1458 = vpack.c.b16 %v1146, %v1142
    %v1459 = vpack.c.b16 %v1147, %v1143
    %v1460 = vpack.c.b16 %v1148, %v1144
    %v1461 = vpack.c.b16 %v1153, %v1149
    %v1462 = vpack.c.b16 %v1154, %v1150
    %v1463 = vpack.c.b16 %v1155, %v1151
    %v1464 = vpack.c.b16 %v1156, %v1152
    %v1465 = vpack.c.b16 %v1161, %v1157
    %v1466 = vpack.c.b16 %v1162, %v1158
    %v1467 = vpack.c.b16 %v1163, %v1159
    %v1468 = vpack.c.b16 %v1164, %v1160
    %v1469 = vpack.c.b16 %v1169, %v1165
    %v1470 = vpack.c.b16 %v1170, %v1166
    %v1471 = vpack.c.b16 %v1171, %v1167
    %v1472 = vpack.c.b16 %v1172, %v1168
    %v1473 = vpack.c.b16 %v1177, %v1173
    %v1474 = vpack.c.b16 %v1178, %v1174
    %v1475 = vpack.c.b16 %v1179, %v1175
    %v1476 = vpack.c.b16 %v1180, %v1176
    %v1477 = vpack.c.b16 %v1185, %v1181
    %v1478 = vpack.c.b16 %v1186, %v1182
    %v1479 = vpack.c.b16 %v1187, %v1183
    %v1480 = vpack.c.b16 %v1188, %v1184
    %v1481 = vpack.c.b16 %v1193, %v1189
    %v1482 = vpack.c.b16 %v1194, %v1190
    %v1483 = vpack.c.b16 %v1195, %v1191
    %v1484 = vpack.c.b16 %v1196, %v1192
    %v1485 = vpack.c.b16 %v1201, %v1197
    %v1486 = vpack.c.b16 %v1202, %v1198
    %v1487 = vpack.c.b16 %v1203, %v1199
    %v1488 = vpack.c.b16 %v1204, %v1200
    %v1489 = vpack.c.b16 %v1209, %v1205
    %v1490 = vpack.c.b16 %v1210, %v1206
    %v1491 = vpack.c.b16 %v1211, %v1207
    %v1492 = vpack.c.b16 %v1212, %v1208
    %v1493 = vpack.c.b16 %v1217, %v1213
    %v1494 = vpack.c.b16 %v1218, %v1214
    %v1495 = vpack.c.b16 %v1219, %v1215
    %v1496 = vpack.c.b16 %v1220, %v1216
    %v1497 = vpack.c.b16 %v1225, %v1221
    %v1498 = vpack.c.b16 %v1226, %v1222
    %v1499 = vpack.c.b16 %v1227, %v1223
    %v1500 = vpack.c.b16 %v1228, %v1224
    %v1501 = vpack.c.b16 %v1233, %v1229
    %v1502 = vpack.c.b16 %v1234, %v1230
    %v1503 = vpack.c.b16 %v1235, %v1231
    %v1504 = vpack.c.b16 %v1236, %v1232
    %v1505 = vpack.c.b16 %v1241, %v1237
    %v1506 = vpack.c.b16 %v1242, %v1238
    %v1507 = vpack.c.b16 %v1243, %v1239
    %v1508 = vpack.c.b16 %v1244, %v1240
    %v1509 = vpack.c.b16 %v1249, %v1245
    %v1510 = vpack.c.b16 %v1250, %v1246
    %v1511 = vpack.c.b16 %v1251, %v1247
    %v1512 = vpack.c.b16 %v1252, %v1248
    %v1513 = vpack.c.b16 %v1257, %v1253
    %v1514 = vpack.c.b16 %v1258, %v1254
    %v1515 = vpack.c.b16 %v1259, %v1255
    %v1516 = vpack.c.b16 %v1260, %v1256
    %v1517 = vpack.c.b16 %v1265, %v1261
    %v1518 = vpack.c.b16 %v1266, %v1262
    %v1519 = vpack.c.b16 %v1267, %v1263
    %v1520 = vpack.c.b16 %v1268, %v1264
    %v1521 = vpack.c.b16 %v1273, %v1269
    %v1522 = vpack.c.b16 %v1274, %v1270
    %v1523 = vpack.c.b16 %v1275, %v1271
    %v1524 = vpack.c.b16 %v1276, %v1272
    %v1525 = vpack.c.b16 %v1281, %v1277
    %v1526 = vpack.c.b16 %v1282, %v1278
    %v1527 = vpack.c.b16 %v1283, %v1279
    %v1528 = vpack.c.b16 %v1284, %v1280
    %v1529 = vpack.c.b16 %v1289, %v1285
    %v1530 = vpack.c.b16 %v1290, %v1286
    %v1531 = vpack.c.b16 %v1291, %v1287
    %v1532 = vpack.c.b16 %v1292, %v1288
    %v1533 = vpack.c.b16 %v1297, %v1293
    %v1534 = vpack.c.b16 %v1298, %v1294
    %v1535 = vpack.c.b16 %v1299, %v1295
    %v1536 = vpack.c.b16 %v1300, %v1296
    %v1537 = vpack.c.b16 %v1305, %v1301
    %v1538 = vpack.c.b16 %v1306, %v1302
    %v1539 = vpack.c.b16 %v1307, %v1303
    %v1540 = vpack.c.b16 %v1308, %v1304
    %v1541 = vpack.c.b16 %v1313, %v1309
    %v1542 = vpack.c.b16 %v1314, %v1310
    %v1543 = vpack.c.b16 %v1315, %v1311
    %v1544 = vpack.c.b16 %v1316, %v1312
    %v1545 = vpack.c.b16 %v1321, %v1317
    %v1546 = vpack.c.b16 %v1322, %v1318
    %v1547 = vpack.c.b16 %v1323, %v1319
    %v1548 = vpack.c.b16 %v1324, %v1320
    %1773 = vmatprep.subr.bf16.mxu0 %v1326
    %1774 = vmatpush1.bf16.msra.mxu0 %v1325
    %1775 = vmatprep.subr.bf16.mxu0 %v1330
    %1776 = vmatpush1.bf16.msra.mxu0 %v1329
    %1777 = vmatprep.subr.bf16.mxu0 %v1334
    %1778 = vmatpush1.bf16.msra.mxu0 %v1333
    %1779 = vmatprep.subr.bf16.mxu0 %v1338
    %1780 = vmatpush1.bf16.msra.mxu0 %v1337
    %1781 = vmatprep.subr.bf16.mxu0 %v1342
    %1782 = vmatpush1.bf16.msra.mxu0 %v1341
    %1783 = vmatprep.subr.bf16.mxu0 %v1346
    %1784 = vmatpush1.bf16.msra.mxu0 %v1345
    %1785 = vmatprep.subr.bf16.mxu0 %v1350
    %1786 = vmatpush1.bf16.msra.mxu0 %v1349
    %1787 = vmatprep.subr.bf16.mxu0 %v1354
    %1788 = vmatpush1.bf16.msra.mxu0 %v1353
    %1789 = vmatprep.subr.bf16.mxu0 %v1358
    %1790 = vmatpush1.bf16.msra.mxu0 %v1357
    %1791 = vmatprep.subr.bf16.mxu0 %v1362
    %1792 = vmatpush1.bf16.msra.mxu0 %v1361
    %1793 = vmatprep.subr.bf16.mxu0 %v1366
    %1794 = vmatpush1.bf16.msra.mxu0 %v1365
    %1795 = vmatprep.subr.bf16.mxu0 %v1370
    %1796 = vmatpush1.bf16.msra.mxu0 %v1369
    %1797 = vmatprep.subr.bf16.mxu0 %v1374
    %1798 = vmatpush1.bf16.msra.mxu0 %v1373
    %1799 = vmatprep.subr.bf16.mxu0 %v1378
    %1800 = vmatpush1.bf16.msra.mxu0 %v1377
    %1801 = vmatprep.subr.bf16.mxu0 %v1382
    %1802 = vmatpush1.bf16.msra.mxu0 %v1381
    %1803 = vmatprep.subr.bf16.mxu0 %v1386
    %1804 = vmatpush1.bf16.msra.mxu0 %v1385
    %1805 = vmatprep.mubr.bf16.mxu0 %v542
    %1806 = vmatmul.mubr.bf16.gmra.mrb[0].mxu0 %v541
    %v1807 = vpop.f32.mrb[0].mxu0
    %v1808 = vadd.f32 %v348, %v1807
    %v1809 = vpop.f32.mrb[0].mxu0
    %v1810 = vadd.f32 %v352, %v1809
    %v1811 = vpop.f32.mrb[0].mxu0
    %v1812 = vadd.f32 %v348, %v1811
    %v1813 = vpop.f32.mrb[0].mxu0
    %v1814 = vadd.f32 %v352, %v1813
    %1815 = vmatprep.mubr.bf16.mxu0 %v549
    %1816 = vmatmul.mubr.bf16.gmra.mrb[0].mxu0 %v548
    %v1817 = vpop.f32.mrb[0].mxu0
    %v1818 = vadd.f32 %v348, %v1817
    %v1819 = vpop.f32.mrb[0].mxu0
    %v1820 = vadd.f32 %v352, %v1819
    %v1821 = vpop.f32.mrb[0].mxu0
    %v1822 = vadd.f32 %v348, %v1821
    %v1823 = vpop.f32.mrb[0].mxu0
    %v1824 = vadd.f32 %v352, %v1823
    %1825 = vmatprep.mubr.bf16.mxu0 %v556
    %1826 = vmatmul.mubr.bf16.gmra.mrb[0].mxu0 %v555
    %v1827 = vpop.f32.mrb[0].mxu0
    %v1828 = vadd.f32 %v348, %v1827
    %v1829 = vpop.f32.mrb[0].mxu0
    %v1830 = vadd.f32 %v352, %v1829
    %v1831 = vpop.f32.mrb[0].mxu0
    %v1832 = vadd.f32 %v348, %v1831
    %v1833 = vpop.f32.mrb[0].mxu0
    %v1834 = vadd.f32 %v352, %v1833
    %1835 = vmatprep.mubr.bf16.mxu0 %v563
    %1836 = vmatmul.mubr.bf16.gmra.mrb[0].mxu0 %v562
    %v1837 = vpop.f32.mrb[0].mxu0
    %v1838 = vadd.f32 %v348, %v1837
    %v1839 = vpop.f32.mrb[0].mxu0
    %v1840 = vadd.f32 %v352, %v1839
    %v1841 = vpop.f32.mrb[0].mxu0
    %v1842 = vadd.f32 %v348, %v1841
    %v1843 = vpop.f32.mrb[0].mxu0
    %v1844 = vadd.f32 %v352, %v1843
    %1845 = vmatprep.mubr.bf16.mxu0 %v570
    %1846 = vmatmul.mubr.bf16.gmra.mrb[0].mxu0 %v569
    %v1847 = vpop.f32.mrb[0].mxu0
    %v1848 = vadd.f32 %v348, %v1847
    %v1849 = vpop.f32.mrb[0].mxu0
    %v1850 = vadd.f32 %v352, %v1849
    %v1851 = vpop.f32.mrb[0].mxu0
    %v1852 = vadd.f32 %v348, %v1851
    %v1853 = vpop.f32.mrb[0].mxu0
    %v1854 = vadd.f32 %v352, %v1853
    %1855 = vmatprep.mubr.bf16.mxu0 %v577
    %1856 = vmatmul.mubr.bf16.gmra.mrb[0].mxu0 %v576
    %v1857 = vpop.f32.mrb[0].mxu0
    %v1858 = vadd.f32 %v348, %v1857
    %v1859 = vpop.f32.mrb[0].mxu0
    %v1860 = vadd.f32 %v352, %v1859
    %v1861 = vpop.f32.mrb[0].mxu0
    %v1862 = vadd.f32 %v348, %v1861
    %v1863 = vpop.f32.mrb[0].mxu0
    %v1864 = vadd.f32 %v352, %v1863
    %1865 = vmatprep.mubr.bf16.mxu0 %v584
    %1866 = vmatmul.mubr.bf16.gmra.mrb[0].mxu0 %v583
    %v1867 = vpop.f32.mrb[0].mxu0
    %v1868 = vadd.f32 %v348, %v1867
    %v1869 = vpop.f32.mrb[0].mxu0
    %v1870 = vadd.f32 %v352, %v1869
    %v1871 = vpop.f32.mrb[0].mxu0
    %v1872 = vadd.f32 %v348, %v1871
    %v1873 = vpop.f32.mrb[0].mxu0
    %v1874 = vadd.f32 %v352, %v1873
    %1875 = vmatprep.mubr.bf16.mxu0 %v591
    %1876 = vmatmul.mubr.bf16.gmra.mrb[0].mxu0 %v590
    %v1877 = vpop.f32.mrb[0].mxu0
    %v1878 = vadd.f32 %v348, %v1877
    %v1879 = vpop.f32.mrb[0].mxu0
    %v1880 = vadd.f32 %v352, %v1879
    %v1881 = vpop.f32.mrb[0].mxu0
    %v1882 = vadd.f32 %v348, %v1881
    %v1883 = vpop.f32.mrb[0].mxu0
    %v1884 = vadd.f32 %v352, %v1883
    %1885 = vdwg.mxu0
    %1886 = vmatprep.subr.bf16.mxu0 %v1390
    %1887 = vmatpush1.bf16.msra.mxu0 %v1389
    %1888 = vmatprep.subr.bf16.mxu0 %v1394
    %1889 = vmatpush1.bf16.msra.mxu0 %v1393
    %1890 = vmatprep.subr.bf16.mxu0 %v1398
    %1891 = vmatpush1.bf16.msra.mxu0 %v1397
    %1892 = vmatprep.subr.bf16.mxu0 %v1402
    %1893 = vmatpush1.bf16.msra.mxu0 %v1401
    %1894 = vmatprep.subr.bf16.mxu0 %v1406
    %1895 = vmatpush1.bf16.msra.mxu0 %v1405
    %1896 = vmatprep.subr.bf16.mxu0 %v1410
    %1897 = vmatpush1.bf16.msra.mxu0 %v1409
    %1898 = vmatprep.subr.bf16.mxu0 %v1414
    %1899 = vmatpush1.bf16.msra.mxu0 %v1413
    %1900 = vmatprep.subr.bf16.mxu0 %v1418
    %1901 = vmatpush1.bf16.msra.mxu0 %v1417
    %1902 = vmatprep.subr.bf16.mxu0 %v1422
    %1903 = vmatpush1.bf16.msra.mxu0 %v1421
    %1904 = vmatprep.subr.bf16.mxu0 %v1426
    %1905 = vmatpush1.bf16.msra.mxu0 %v1425
    %1906 = vmatprep.subr.bf16.mxu0 %v1430
    %1907 = vmatpush1.bf16.msra.mxu0 %v1429
    %1908 = vmatprep.subr.bf16.mxu0 %v1434
    %1909 = vmatpush1.bf16.msra.mxu0 %v1433
    %1910 = vmatprep.subr.bf16.mxu0 %v1438
    %1911 = vmatpush1.bf16.msra.mxu0 %v1437
    %1912 = vmatprep.subr.bf16.mxu0 %v1442
    %1913 = vmatpush1.bf16.msra.mxu0 %v1441
    %1914 = vmatprep.subr.bf16.mxu0 %v1446
    %1915 = vmatpush1.bf16.msra.mxu0 %v1445
    %1916 = vmatprep.subr.bf16.mxu0 %v1450
    %1917 = vmatpush1.bf16.msra.mxu0 %v1449
    %1918 = vmatprep.mubr.bf16.mxu0 %v544
    %1919 = vmatmul.mubr.bf16.gmra.mrb[0].mxu0 %v543
    %v1920 = vpop.f32.mrb[0].mxu0
    %v1921 = vadd.f32 %v1808, %v1920
    %v1922 = vpop.f32.mrb[0].mxu0
    %v1923 = vadd.f32 %v1810, %v1922
    %v1924 = vpop.f32.mrb[0].mxu0
    %v1925 = vadd.f32 %v1812, %v1924
    %v1926 = vpop.f32.mrb[0].mxu0
    %v1927 = vadd.f32 %v1814, %v1926
    %1928 = vmatprep.mubr.bf16.mxu0 %v551
    %1929 = vmatmul.mubr.bf16.gmra.mrb[0].mxu0 %v550
    %v1930 = vpop.f32.mrb[0].mxu0
    %v1931 = vadd.f32 %v1818, %v1930
    %v1932 = vpop.f32.mrb[0].mxu0
    %v1933 = vadd.f32 %v1820, %v1932
    %v1934 = vpop.f32.mrb[0].mxu0
    %v1935 = vadd.f32 %v1822, %v1934
    %v1936 = vpop.f32.mrb[0].mxu0
    %v1937 = vadd.f32 %v1824, %v1936
    %1938 = vmatprep.mubr.bf16.mxu0 %v558
    %1939 = vmatmul.mubr.bf16.gmra.mrb[0].mxu0 %v557
    %v1940 = vpop.f32.mrb[0].mxu0
    %v1941 = vadd.f32 %v1828, %v1940
    %v1942 = vpop.f32.mrb[0].mxu0
    %v1943 = vadd.f32 %v1830, %v1942
    %v1944 = vpop.f32.mrb[0].mxu0
    %v1945 = vadd.f32 %v1832, %v1944
    %v1946 = vpop.f32.mrb[0].mxu0
    %v1947 = vadd.f32 %v1834, %v1946
    %1948 = vmatprep.mubr.bf16.mxu0 %v565
    %1949 = vmatmul.mubr.bf16.gmra.mrb[0].mxu0 %v564
    %v1950 = vpop.f32.mrb[0].mxu0
    %v1951 = vadd.f32 %v1838, %v1950
    %v1952 = vpop.f32.mrb[0].mxu0
    %v1953 = vadd.f32 %v1840, %v1952
    %v1954 = vpop.f32.mrb[0].mxu0
    %v1955 = vadd.f32 %v1842, %v1954
    %v1956 = vpop.f32.mrb[0].mxu0
    %v1957 = vadd.f32 %v1844, %v1956
    %1958 = vmatprep.mubr.bf16.mxu0 %v572
    %1959 = vmatmul.mubr.bf16.gmra.mrb[0].mxu0 %v571
    %v1960 = vpop.f32.mrb[0].mxu0
    %v1961 = vadd.f32 %v1848, %v1960
    %v1962 = vpop.f32.mrb[0].mxu0
    %v1963 = vadd.f32 %v1850, %v1962
    %v1964 = vpop.f32.mrb[0].mxu0
    %v1965 = vadd.f32 %v1852, %v1964
    %v1966 = vpop.f32.mrb[0].mxu0
    %v1967 = vadd.f32 %v1854, %v1966
    %1968 = vmatprep.mubr.bf16.mxu0 %v579
    %1969 = vmatmul.mubr.bf16.gmra.mrb[0].mxu0 %v578
    %v1970 = vpop.f32.mrb[0].mxu0
    %v1971 = vadd.f32 %v1858, %v1970
    %v1972 = vpop.f32.mrb[0].mxu0
    %v1973 = vadd.f32 %v1860, %v1972
    %v1974 = vpop.f32.mrb[0].mxu0
    %v1975 = vadd.f32 %v1862, %v1974
    %v1976 = vpop.f32.mrb[0].mxu0
    %v1977 = vadd.f32 %v1864, %v1976
    %1978 = vmatprep.mubr.bf16.mxu0 %v586
    %1979 = vmatmul.mubr.bf16.gmra.mrb[0].mxu0 %v585
    %v1980 = vpop.f32.mrb[0].mxu0
    %v1981 = vadd.f32 %v1868, %v1980
    %v1982 = vpop.f32.mrb[0].mxu0
    %v1983 = vadd.f32 %v1870, %v1982
    %v1984 = vpop.f32.mrb[0].mxu0
    %v1985 = vadd.f32 %v1872, %v1984
    %v1986 = vpop.f32.mrb[0].mxu0
    %v1987 = vadd.f32 %v1874, %v1986
    %1988 = vmatprep.mubr.bf16.mxu0 %v593
    %1989 = vmatmul.mubr.bf16.gmra.mrb[0].mxu0 %v592
    %v1990 = vpop.f32.mrb[0].mxu0
    %v1991 = vadd.f32 %v1878, %v1990
    %v1992 = vpop.f32.mrb[0].mxu0
    %v1993 = vadd.f32 %v1880, %v1992
    %v1994 = vpop.f32.mrb[0].mxu0
    %v1995 = vadd.f32 %v1882, %v1994
    %v1996 = vpop.f32.mrb[0].mxu0
    %v1997 = vadd.f32 %v1884, %v1996
    %1998 = vdwg.mxu0
    %1999 = vmatprep.subr.bf16.mxu0 %v1454
    %2000 = vmatpush1.bf16.msra.mxu0 %v1453
    %2001 = vmatprep.subr.bf16.mxu0 %v1458
    %2002 = vmatpush1.bf16.msra.mxu0 %v1457
    %2003 = vmatprep.subr.bf16.mxu0 %v1462
    %2004 = vmatpush1.bf16.msra.mxu0 %v1461
    %2005 = vmatprep.subr.bf16.mxu0 %v1466
    %2006 = vmatpush1.bf16.msra.mxu0 %v1465
    %2007 = vmatprep.subr.bf16.mxu0 %v1470
    %2008 = vmatpush1.bf16.msra.mxu0 %v1469
    %2009 = vmatprep.subr.bf16.mxu0 %v1474
    %2010 = vmatpush1.bf16.msra.mxu0 %v1473
    %2011 = vmatprep.subr.bf16.mxu0 %v1478
    %2012 = vmatpush1.bf16.msra.mxu0 %v1477
    %2013 = vmatprep.subr.bf16.mxu0 %v1482
    %2014 = vmatpush1.bf16.msra.mxu0 %v1481
    %2015 = vmatprep.subr.bf16.mxu0 %v1486
    %2016 = vmatpush1.bf16.msra.mxu0 %v1485
    %2017 = vmatprep.subr.bf16.mxu0 %v1490
    %2018 = vmatpush1.bf16.msra.mxu0 %v1489
    %2019 = vmatprep.subr.bf16.mxu0 %v1494
    %2020 = vmatpush1.bf16.msra.mxu0 %v1493
    %2021 = vmatprep.subr.bf16.mxu0 %v1498
    %2022 = vmatpush1.bf16.msra.mxu0 %v1497
    %2023 = vmatprep.subr.bf16.mxu0 %v1502
    %2024 = vmatpush1.bf16.msra.mxu0 %v1501
    %2025 = vmatprep.subr.bf16.mxu0 %v1506
    %2026 = vmatpush1.bf16.msra.mxu0 %v1505
    %2027 = vmatprep.subr.bf16.mxu0 %v1510
    %2028 = vmatpush1.bf16.msra.mxu0 %v1509
    %2029 = vmatprep.subr.bf16.mxu0 %v1514
    %2030 = vmatpush1.bf16.msra.mxu0 %v1513
    %2031 = vmatprep.mubr.bf16.mxu0 %v546
    %2032 = vmatmul.mubr.bf16.gmra.mrb[0].mxu0 %v545
    %v2033 = vpop.f32.mrb[0].mxu0
    %v2034 = vadd.f32 %v1921, %v2033
    %v2035 = vpop.f32.mrb[0].mxu0
    %v2036 = vadd.f32 %v1923, %v2035
    %v2037 = vpop.f32.mrb[0].mxu0
    %v2038 = vadd.f32 %v1925, %v2037
    %v2039 = vpop.f32.mrb[0].mxu0
    %v2040 = vadd.f32 %v1927, %v2039
    %2041 = vmatprep.mubr.bf16.mxu0 %v553
    %2042 = vmatmul.mubr.bf16.gmra.mrb[0].mxu0 %v552
    %v2043 = vpop.f32.mrb[0].mxu0
    %v2044 = vadd.f32 %v1931, %v2043
    %v2045 = vpop.f32.mrb[0].mxu0
    %v2046 = vadd.f32 %v1933, %v2045
    %v2047 = vpop.f32.mrb[0].mxu0
    %v2048 = vadd.f32 %v1935, %v2047
    %v2049 = vpop.f32.mrb[0].mxu0
    %v2050 = vadd.f32 %v1937, %v2049
    %2051 = vmatprep.mubr.bf16.mxu0 %v560
    %2052 = vmatmul.mubr.bf16.gmra.mrb[0].mxu0 %v559
    %v2053 = vpop.f32.mrb[0].mxu0
    %v2054 = vadd.f32 %v1941, %v2053
    %v2055 = vpop.f32.mrb[0].mxu0
    %v2056 = vadd.f32 %v1943, %v2055
    %v2057 = vpop.f32.mrb[0].mxu0
    %v2058 = vadd.f32 %v1945, %v2057
    %v2059 = vpop.f32.mrb[0].mxu0
    %v2060 = vadd.f32 %v1947, %v2059
    %2061 = vmatprep.mubr.bf16.mxu0 %v567
    %2062 = vmatmul.mubr.bf16.gmra.mrb[0].mxu0 %v566
    %v2063 = vpop.f32.mrb[0].mxu0
    %v2064 = vadd.f32 %v1951, %v2063
    %v2065 = vpop.f32.mrb[0].mxu0
    %v2066 = vadd.f32 %v1953, %v2065
    %v2067 = vpop.f32.mrb[0].mxu0
    %v2068 = vadd.f32 %v1955, %v2067
    %v2069 = vpop.f32.mrb[0].mxu0
    %v2070 = vadd.f32 %v1957, %v2069
    %2071 = vmatprep.mubr.bf16.mxu0 %v574
    %2072 = vmatmul.mubr.bf16.gmra.mrb[0].mxu0 %v573
    %v2073 = vpop.f32.mrb[0].mxu0
    %v2074 = vadd.f32 %v1961, %v2073
    %v2075 = vpop.f32.mrb[0].mxu0
    %v2076 = vadd.f32 %v1963, %v2075
    %v2077 = vpop.f32.mrb[0].mxu0
    %v2078 = vadd.f32 %v1965, %v2077
    %v2079 = vpop.f32.mrb[0].mxu0
    %v2080 = vadd.f32 %v1967, %v2079
    %2081 = vmatprep.mubr.bf16.mxu0 %v581
    %2082 = vmatmul.mubr.bf16.gmra.mrb[0].mxu0 %v580
    %v2083 = vpop.f32.mrb[0].mxu0
    %v2084 = vadd.f32 %v1971, %v2083
    %v2085 = vpop.f32.mrb[0].mxu0
    %v2086 = vadd.f32 %v1973, %v2085
    %v2087 = vpop.f32.mrb[0].mxu0
    %v2088 = vadd.f32 %v1975, %v2087
    %v2089 = vpop.f32.mrb[0].mxu0
    %v2090 = vadd.f32 %v1977, %v2089
    %2091 = vmatprep.mubr.bf16.mxu0 %v588
    %2092 = vmatmul.mubr.bf16.gmra.mrb[0].mxu0 %v587
    %v2093 = vpop.f32.mrb[0].mxu0
    %v2094 = vadd.f32 %v1981, %v2093
    %v2095 = vpop.f32.mrb[0].mxu0
    %v2096 = vadd.f32 %v1983, %v2095
    %v2097 = vpop.f32.mrb[0].mxu0
    %v2098 = vadd.f32 %v1985, %v2097
    %v2099 = vpop.f32.mrb[0].mxu0
    %v2100 = vadd.f32 %v1987, %v2099
    %2101 = vmatprep.mubr.bf16.mxu0 %v595
    %2102 = vmatmul.mubr.bf16.gmra.mrb[0].mxu0 %v594
    %v2103 = vpop.f32.mrb[0].mxu0
    %v2104 = vadd.f32 %v1991, %v2103
    %v2105 = vpop.f32.mrb[0].mxu0
    %v2106 = vadd.f32 %v1993, %v2105
    %v2107 = vpop.f32.mrb[0].mxu0
    %v2108 = vadd.f32 %v1995, %v2107
    %v2109 = vpop.f32.mrb[0].mxu0
    %v2110 = vadd.f32 %v1997, %v2109
    %2111 = vdwg.mxu0
    %2112 = vmatprep.subr.bf16.mxu0 %v1518
    %2113 = vmatpush1.bf16.msra.mxu0 %v1517
    %2114 = vmatprep.subr.bf16.mxu0 %v1522
    %2115 = vmatpush1.bf16.msra.mxu0 %v1521
    %2116 = vmatprep.subr.bf16.mxu0 %v1526
    %2117 = vmatpush1.bf16.msra.mxu0 %v1525
    %2118 = vmatprep.subr.bf16.mxu0 %v1530
    %2119 = vmatpush1.bf16.msra.mxu0 %v1529
    %2120 = vmatprep.subr.bf16.mxu0 %v1534
    %2121 = vmatpush1.bf16.msra.mxu0 %v1533
    %2122 = vmatprep.subr.bf16.mxu0 %v1538
    %2123 = vmatpush1.bf16.msra.mxu0 %v1537
    %2124 = vmatprep.subr.bf16.mxu0 %v1542
    %2125 = vmatpush1.bf16.msra.mxu0 %v1541
    %2126 = vmatprep.subr.bf16.mxu0 %v1546
    %2127 = vmatpush1.bf16.msra.mxu0 %v1545
    %2128 = vmatprep.subr.bf16.mxu0 0
    %2129 = vmatpush1.bf16.msra.mxu0 0
    %2130 = vmatprep.subr.bf16.mxu0 0
    %2131 = vmatpush1.bf16.msra.mxu0 0
    %2132 = vmatprep.subr.bf16.mxu0 0
    %2133 = vmatpush1.bf16.msra.mxu0 0
    %2134 = vmatprep.subr.bf16.mxu0 0
    %2135 = vmatpush1.bf16.msra.mxu0 0
    %2136 = vmatprep.subr.bf16.mxu0 0
    %2137 = vmatpush1.bf16.msra.mxu0 0
    %2138 = vmatprep.subr.bf16.mxu0 0
    %2139 = vmatpush1.bf16.msra.mxu0 0
    %2140 = vmatprep.subr.bf16.mxu0 0
    %2141 = vmatpush1.bf16.msra.mxu0 0
    %2142 = vmatprep.subr.bf16.mxu0 0
    %2143 = vmatpush1.bf16.msra.mxu0 0
    %2144 = vmatprep.mubr.bf16.mxu0 0
    %2145 = vmatmul.mubr.bf16.gmra.mrb[0].mxu0 %v547
    %v2146 = vpop.f32.mrb[0].mxu0
    %v2147 = vadd.f32 %v2034, %v2146
    %v2148 = vpop.f32.mrb[0].mxu0
    %v2149 = vadd.f32 %v2036, %v2148
    %v2150 = vpop.f32.mrb[0].mxu0
    %v2151 = vadd.f32 %v2038, %v2150
    %v2152 = vpop.f32.mrb[0].mxu0
    %v2153 = vadd.f32 %v2040, %v2152
    %2154 = vmatprep.mubr.bf16.mxu0 0
    %2155 = vmatmul.mubr.bf16.gmra.mrb[0].mxu0 %v554
    %v2156 = vpop.f32.mrb[0].mxu0
    %v2157 = vadd.f32 %v2044, %v2156
    %v2158 = vpop.f32.mrb[0].mxu0
    %v2159 = vadd.f32 %v2046, %v2158
    %v2160 = vpop.f32.mrb[0].mxu0
    %v2161 = vadd.f32 %v2048, %v2160
    %v2162 = vpop.f32.mrb[0].mxu0
    %v2163 = vadd.f32 %v2050, %v2162
    %2164 = vmatprep.mubr.bf16.mxu0 0
    %2165 = vmatmul.mubr.bf16.gmra.mrb[0].mxu0 %v561
    %v2166 = vpop.f32.mrb[0].mxu0
    %v2167 = vadd.f32 %v2054, %v2166
    %v2168 = vpop.f32.mrb[0].mxu0
    %v2169 = vadd.f32 %v2056, %v2168
    %v2170 = vpop.f32.mrb[0].mxu0
    %v2171 = vadd.f32 %v2058, %v2170
    %v2172 = vpop.f32.mrb[0].mxu0
    %v2173 = vadd.f32 %v2060, %v2172
    %2174 = vmatprep.mubr.bf16.mxu0 0
    %2175 = vmatmul.mubr.bf16.gmra.mrb[0].mxu0 %v568
    %v2176 = vpop.f32.mrb[0].mxu0
    %v2177 = vadd.f32 %v2064, %v2176
    %v2178 = vpop.f32.mrb[0].mxu0
    %v2179 = vadd.f32 %v2066, %v2178
    %v2180 = vpop.f32.mrb[0].mxu0
    %v2181 = vadd.f32 %v2068, %v2180
    %v2182 = vpop.f32.mrb[0].mxu0
    %v2183 = vadd.f32 %v2070, %v2182
    %2184 = vmatprep.mubr.bf16.mxu0 0
    %2185 = vmatmul.mubr.bf16.gmra.mrb[0].mxu0 %v575
    %v2186 = vpop.f32.mrb[0].mxu0
    %v2187 = vadd.f32 %v2074, %v2186
    %v2188 = vpop.f32.mrb[0].mxu0
    %v2189 = vadd.f32 %v2076, %v2188
    %v2190 = vpop.f32.mrb[0].mxu0
    %v2191 = vadd.f32 %v2078, %v2190
    %v2192 = vpop.f32.mrb[0].mxu0
    %v2193 = vadd.f32 %v2080, %v2192
    %2194 = vmatprep.mubr.bf16.mxu0 0
    %2195 = vmatmul.mubr.bf16.gmra.mrb[0].mxu0 %v582
    %v2196 = vpop.f32.mrb[0].mxu0
    %v2197 = vadd.f32 %v2084, %v2196
    %v2198 = vpop.f32.mrb[0].mxu0
    %v2199 = vadd.f32 %v2086, %v2198
    %v2200 = vpop.f32.mrb[0].mxu0
    %v2201 = vadd.f32 %v2088, %v2200
    %v2202 = vpop.f32.mrb[0].mxu0
    %v2203 = vadd.f32 %v2090, %v2202
    %2204 = vmatprep.mubr.bf16.mxu0 0
    %2205 = vmatmul.mubr.bf16.gmra.mrb[0].mxu0 %v589
    %v2206 = vpop.f32.mrb[0].mxu0
    %v2207 = vadd.f32 %v2094, %v2206
    %v2208 = vpop.f32.mrb[0].mxu0
    %v2209 = vadd.f32 %v2096, %v2208
    %v2210 = vpop.f32.mrb[0].mxu0
    %v2211 = vadd.f32 %v2098, %v2210
    %v2212 = vpop.f32.mrb[0].mxu0
    %v2213 = vadd.f32 %v2100, %v2212
    %2214 = vmatprep.mubr.bf16.mxu0 0
    %2215 = vmatmul.mubr.bf16.gmra.mrb[0].mxu0 %v596
    %v2216 = vpop.f32.mrb[0].mxu0
    %v2217 = vadd.f32 %v2104, %v2216
    %v2218 = vpop.f32.mrb[0].mxu0
    %v2219 = vadd.f32 %v2106, %v2218
    %v2220 = vpop.f32.mrb[0].mxu0
    %v2221 = vadd.f32 %v2108, %v2220
    %v2222 = vpop.f32.mrb[0].mxu0
    %v2223 = vadd.f32 %v2110, %v2222
    %2224 = vdwg.mxu0
    %2225 = vmatprep.subr.bf16.mxu0 %v1328
    %2226 = vmatpush1.bf16.msra.mxu0 %v1327
    %2227 = vmatprep.subr.bf16.mxu0 %v1332
    %2228 = vmatpush1.bf16.msra.mxu0 %v1331
    %2229 = vmatprep.subr.bf16.mxu0 %v1336
    %2230 = vmatpush1.bf16.msra.mxu0 %v1335
    %2231 = vmatprep.subr.bf16.mxu0 %v1340
    %2232 = vmatpush1.bf16.msra.mxu0 %v1339
    %2233 = vmatprep.subr.bf16.mxu0 %v1344
    %2234 = vmatpush1.bf16.msra.mxu0 %v1343
    %2235 = vmatprep.subr.bf16.mxu0 %v1348
    %2236 = vmatpush1.bf16.msra.mxu0 %v1347
    %2237 = vmatprep.subr.bf16.mxu0 %v1352
    %2238 = vmatpush1.bf16.msra.mxu0 %v1351
    %2239 = vmatprep.subr.bf16.mxu0 %v1356
    %2240 = vmatpush1.bf16.msra.mxu0 %v1355
    %2241 = vmatprep.subr.bf16.mxu0 %v1360
    %2242 = vmatpush1.bf16.msra.mxu0 %v1359
    %2243 = vmatprep.subr.bf16.mxu0 %v1364
    %2244 = vmatpush1.bf16.msra.mxu0 %v1363
    %2245 = vmatprep.subr.bf16.mxu0 %v1368
    %2246 = vmatpush1.bf16.msra.mxu0 %v1367
    %2247 = vmatprep.subr.bf16.mxu0 %v1372
    %2248 = vmatpush1.bf16.msra.mxu0 %v1371
    %2249 = vmatprep.subr.bf16.mxu0 %v1376
    %2250 = vmatpush1.bf16.msra.mxu0 %v1375
    %2251 = vmatprep.subr.bf16.mxu0 %v1380
    %2252 = vmatpush1.bf16.msra.mxu0 %v1379
    %2253 = vmatprep.subr.bf16.mxu0 %v1384
    %2254 = vmatpush1.bf16.msra.mxu0 %v1383
    %2255 = vmatprep.subr.bf16.mxu0 %v1388
    %2256 = vmatpush1.bf16.msra.mxu0 %v1387
    %2257 = vmatprep.mubr.bf16.mxu0 %v542
    %2258 = vmatmul.mubr.bf16.gmra.mrb[0].mxu0 %v541
    %v2259 = vpop.f32.mrb[0].mxu0
    %v2260 = vadd.f32 %v356, %v2259
    %v2261 = vpop.f32.mrb[0].mxu0
    %v2262 = vadd.f32 %v360, %v2261
    %v2263 = vpop.f32.mrb[0].mxu0
    %v2264 = vadd.f32 %v356, %v2263
    %v2265 = vpop.f32.mrb[0].mxu0
    %v2266 = vadd.f32 %v360, %v2265
    %2267 = vmatprep.mubr.bf16.mxu0 %v549
    %2268 = vmatmul.mubr.bf16.gmra.mrb[0].mxu0 %v548
    %v2269 = vpop.f32.mrb[0].mxu0
    %v2270 = vadd.f32 %v356, %v2269
    %v2271 = vpop.f32.mrb[0].mxu0
    %v2272 = vadd.f32 %v360, %v2271
    %v2273 = vpop.f32.mrb[0].mxu0
    %v2274 = vadd.f32 %v356, %v2273
    %v2275 = vpop.f32.mrb[0].mxu0
    %v2276 = vadd.f32 %v360, %v2275
    %2277 = vmatprep.mubr.bf16.mxu0 %v556
    %2278 = vmatmul.mubr.bf16.gmra.mrb[0].mxu0 %v555
    %v2279 = vpop.f32.mrb[0].mxu0
    %v2280 = vadd.f32 %v356, %v2279
    %v2281 = vpop.f32.mrb[0].mxu0
    %v2282 = vadd.f32 %v360, %v2281
    %v2283 = vpop.f32.mrb[0].mxu0
    %v2284 = vadd.f32 %v356, %v2283
    %v2285 = vpop.f32.mrb[0].mxu0
    %v2286 = vadd.f32 %v360, %v2285
    %2287 = vmatprep.mubr.bf16.mxu0 %v563
    %2288 = vmatmul.mubr.bf16.gmra.mrb[0].mxu0 %v562
    %v2289 = vpop.f32.mrb[0].mxu0
    %v2290 = vadd.f32 %v356, %v2289
    %v2291 = vpop.f32.mrb[0].mxu0
    %v2292 = vadd.f32 %v360, %v2291
    %v2293 = vpop.f32.mrb[0].mxu0
    %v2294 = vadd.f32 %v356, %v2293
    %v2295 = vpop.f32.mrb[0].mxu0
    %v2296 = vadd.f32 %v360, %v2295
    %2297 = vmatprep.mubr.bf16.mxu0 %v570
    %2298 = vmatmul.mubr.bf16.gmra.mrb[0].mxu0 %v569
    %v2299 = vpop.f32.mrb[0].mxu0
    %v2300 = vadd.f32 %v356, %v2299
    %v2301 = vpop.f32.mrb[0].mxu0
    %v2302 = vadd.f32 %v360, %v2301
    %v2303 = vpop.f32.mrb[0].mxu0
    %v2304 = vadd.f32 %v356, %v2303
    %v2305 = vpop.f32.mrb[0].mxu0
    %v2306 = vadd.f32 %v360, %v2305
    %2307 = vmatprep.mubr.bf16.mxu0 %v577
    %2308 = vmatmul.mubr.bf16.gmra.mrb[0].mxu0 %v576
    %v2309 = vpop.f32.mrb[0].mxu0
    %v2310 = vadd.f32 %v356, %v2309
    %v2311 = vpop.f32.mrb[0].mxu0
    %v2312 = vadd.f32 %v360, %v2311
    %v2313 = vpop.f32.mrb[0].mxu0
    %v2314 = vadd.f32 %v356, %v2313
    %v2315 = vpop.f32.mrb[0].mxu0
    %v2316 = vadd.f32 %v360, %v2315
    %2317 = vmatprep.mubr.bf16.mxu0 %v584
    %2318 = vmatmul.mubr.bf16.gmra.mrb[0].mxu0 %v583
    %v2319 = vpop.f32.mrb[0].mxu0
    %v2320 = vadd.f32 %v356, %v2319
    %v2321 = vpop.f32.mrb[0].mxu0
    %v2322 = vadd.f32 %v360, %v2321
    %v2323 = vpop.f32.mrb[0].mxu0
    %v2324 = vadd.f32 %v356, %v2323
    %v2325 = vpop.f32.mrb[0].mxu0
    %v2326 = vadd.f32 %v360, %v2325
    %2327 = vmatprep.mubr.bf16.mxu0 %v591
    %2328 = vmatmul.mubr.bf16.gmra.mrb[0].mxu0 %v590
    %v2329 = vpop.f32.mrb[0].mxu0
    %v2330 = vadd.f32 %v356, %v2329
    %v2331 = vpop.f32.mrb[0].mxu0
    %v2332 = vadd.f32 %v360, %v2331
    %v2333 = vpop.f32.mrb[0].mxu0
    %v2334 = vadd.f32 %v356, %v2333
    %v2335 = vpop.f32.mrb[0].mxu0
    %v2336 = vadd.f32 %v360, %v2335
    %2337 = vdwg.mxu0
    %2338 = vmatprep.subr.bf16.mxu0 %v1392
    %2339 = vmatpush1.bf16.msra.mxu0 %v1391
    %2340 = vmatprep.subr.bf16.mxu0 %v1396
    %2341 = vmatpush1.bf16.msra.mxu0 %v1395
    %2342 = vmatprep.subr.bf16.mxu0 %v1400
    %2343 = vmatpush1.bf16.msra.mxu0 %v1399
    %2344 = vmatprep.subr.bf16.mxu0 %v1404
    %2345 = vmatpush1.bf16.msra.mxu0 %v1403
    %2346 = vmatprep.subr.bf16.mxu0 %v1408
    %2347 = vmatpush1.bf16.msra.mxu0 %v1407
    %2348 = vmatprep.subr.bf16.mxu0 %v1412
    %2349 = vmatpush1.bf16.msra.mxu0 %v1411
    %2350 = vmatprep.subr.bf16.mxu0 %v1416
    %2351 = vmatpush1.bf16.msra.mxu0 %v1415
    %2352 = vmatprep.subr.bf16.mxu0 %v1420
    %2353 = vmatpush1.bf16.msra.mxu0 %v1419
    %2354 = vmatprep.subr.bf16.mxu0 %v1424
    %2355 = vmatpush1.bf16.msra.mxu0 %v1423
    %2356 = vmatprep.subr.bf16.mxu0 %v1428
    %2357 = vmatpush1.bf16.msra.mxu0 %v1427
    %2358 = vmatprep.subr.bf16.mxu0 %v1432
    %2359 = vmatpush1.bf16.msra.mxu0 %v1431
    %2360 = vmatprep.subr.bf16.mxu0 %v1436
    %2361 = vmatpush1.bf16.msra.mxu0 %v1435
    %2362 = vmatprep.subr.bf16.mxu0 %v1440
    %2363 = vmatpush1.bf16.msra.mxu0 %v1439
    %2364 = vmatprep.subr.bf16.mxu0 %v1444
    %2365 = vmatpush1.bf16.msra.mxu0 %v1443
    %2366 = vmatprep.subr.bf16.mxu0 %v1448
    %2367 = vmatpush1.bf16.msra.mxu0 %v1447
    %2368 = vmatprep.subr.bf16.mxu0 %v1452
    %2369 = vmatpush1.bf16.msra.mxu0 %v1451
    %2370 = vmatprep.mubr.bf16.mxu0 %v544
    %2371 = vmatmul.mubr.bf16.gmra.mrb[0].mxu0 %v543
    %v2372 = vpop.f32.mrb[0].mxu0
    %v2373 = vadd.f32 %v2260, %v2372
    %v2374 = vpop.f32.mrb[0].mxu0
    %v2375 = vadd.f32 %v2262, %v2374
    %v2376 = vpop.f32.mrb[0].mxu0
    %v2377 = vadd.f32 %v2264, %v2376
    %v2378 = vpop.f32.mrb[0].mxu0
    %v2379 = vadd.f32 %v2266, %v2378
    %2380 = vmatprep.mubr.bf16.mxu0 %v551
    %2381 = vmatmul.mubr.bf16.gmra.mrb[0].mxu0 %v550
    %v2382 = vpop.f32.mrb[0].mxu0
    %v2383 = vadd.f32 %v2270, %v2382
    %v2384 = vpop.f32.mrb[0].mxu0
    %v2385 = vadd.f32 %v2272, %v2384
    %v2386 = vpop.f32.mrb[0].mxu0
    %v2387 = vadd.f32 %v2274, %v2386
    %v2388 = vpop.f32.mrb[0].mxu0
    %v2389 = vadd.f32 %v2276, %v2388
    %2390 = vmatprep.mubr.bf16.mxu0 %v558
    %2391 = vmatmul.mubr.bf16.gmra.mrb[0].mxu0 %v557
    %v2392 = vpop.f32.mrb[0].mxu0
    %v2393 = vadd.f32 %v2280, %v2392
    %v2394 = vpop.f32.mrb[0].mxu0
    %v2395 = vadd.f32 %v2282, %v2394
    %v2396 = vpop.f32.mrb[0].mxu0
    %v2397 = vadd.f32 %v2284, %v2396
    %v2398 = vpop.f32.mrb[0].mxu0
    %v2399 = vadd.f32 %v2286, %v2398
    %2400 = vmatprep.mubr.bf16.mxu0 %v565
    %2401 = vmatmul.mubr.bf16.gmra.mrb[0].mxu0 %v564
    %v2402 = vpop.f32.mrb[0].mxu0
    %v2403 = vadd.f32 %v2290, %v2402
    %v2404 = vpop.f32.mrb[0].mxu0
    %v2405 = vadd.f32 %v2292, %v2404
    %v2406 = vpop.f32.mrb[0].mxu0
    %v2407 = vadd.f32 %v2294, %v2406
    %v2408 = vpop.f32.mrb[0].mxu0
    %v2409 = vadd.f32 %v2296, %v2408
    %2410 = vmatprep.mubr.bf16.mxu0 %v572
    %2411 = vmatmul.mubr.bf16.gmra.mrb[0].mxu0 %v571
    %v2412 = vpop.f32.mrb[0].mxu0
    %v2413 = vadd.f32 %v2300, %v2412
    %v2414 = vpop.f32.mrb[0].mxu0
    %v2415 = vadd.f32 %v2302, %v2414
    %v2416 = vpop.f32.mrb[0].mxu0
    %v2417 = vadd.f32 %v2304, %v2416
    %v2418 = vpop.f32.mrb[0].mxu0
    %v2419 = vadd.f32 %v2306, %v2418
    %2420 = vmatprep.mubr.bf16.mxu0 %v579
    %2421 = vmatmul.mubr.bf16.gmra.mrb[0].mxu0 %v578
    %v2422 = vpop.f32.mrb[0].mxu0
    %v2423 = vadd.f32 %v2310, %v2422
    %v2424 = vpop.f32.mrb[0].mxu0
    %v2425 = vadd.f32 %v2312, %v2424
    %v2426 = vpop.f32.mrb[0].mxu0
    %v2427 = vadd.f32 %v2314, %v2426
    %v2428 = vpop.f32.mrb[0].mxu0
    %v2429 = vadd.f32 %v2316, %v2428
    %2430 = vmatprep.mubr.bf16.mxu0 %v586
    %2431 = vmatmul.mubr.bf16.gmra.mrb[0].mxu0 %v585
    %v2432 = vpop.f32.mrb[0].mxu0
    %v2433 = vadd.f32 %v2320, %v2432
    %v2434 = vpop.f32.mrb[0].mxu0
    %v2435 = vadd.f32 %v2322, %v2434
    %v2436 = vpop.f32.mrb[0].mxu0
    %v2437 = vadd.f32 %v2324, %v2436
    %v2438 = vpop.f32.mrb[0].mxu0
    %v2439 = vadd.f32 %v2326, %v2438
    %2440 = vmatprep.mubr.bf16.mxu0 %v593
    %2441 = vmatmul.mubr.bf16.gmra.mrb[0].mxu0 %v592
    %v2442 = vpop.f32.mrb[0].mxu0
    %v2443 = vadd.f32 %v2330, %v2442
    %v2444 = vpop.f32.mrb[0].mxu0
    %v2445 = vadd.f32 %v2332, %v2444
    %v2446 = vpop.f32.mrb[0].mxu0
    %v2447 = vadd.f32 %v2334, %v2446
    %v2448 = vpop.f32.mrb[0].mxu0
    %v2449 = vadd.f32 %v2336, %v2448
    %2450 = vdwg.mxu0
    %2451 = vmatprep.subr.bf16.mxu0 %v1456
    %2452 = vmatpush1.bf16.msra.mxu0 %v1455
    %2453 = vmatprep.subr.bf16.mxu0 %v1460
    %2454 = vmatpush1.bf16.msra.mxu0 %v1459
    %2455 = vmatprep.subr.bf16.mxu0 %v1464
    %2456 = vmatpush1.bf16.msra.mxu0 %v1463
    %2457 = vmatprep.subr.bf16.mxu0 %v1468
    %2458 = vmatpush1.bf16.msra.mxu0 %v1467
    %2459 = vmatprep.subr.bf16.mxu0 %v1472
    %2460 = vmatpush1.bf16.msra.mxu0 %v1471
    %2461 = vmatprep.subr.bf16.mxu0 %v1476
    %2462 = vmatpush1.bf16.msra.mxu0 %v1475
    %2463 = vmatprep.subr.bf16.mxu0 %v1480
    %2464 = vmatpush1.bf16.msra.mxu0 %v1479
    %2465 = vmatprep.subr.bf16.mxu0 %v1484
    %2466 = vmatpush1.bf16.msra.mxu0 %v1483
    %2467 = vmatprep.subr.bf16.mxu0 %v1488
    %2468 = vmatpush1.bf16.msra.mxu0 %v1487
    %2469 = vmatprep.subr.bf16.mxu0 %v1492
    %2470 = vmatpush1.bf16.msra.mxu0 %v1491
    %2471 = vmatprep.subr.bf16.mxu0 %v1496
    %2472 = vmatpush1.bf16.msra.mxu0 %v1495
    %2473 = vmatprep.subr.bf16.mxu0 %v1500
    %2474 = vmatpush1.bf16.msra.mxu0 %v1499
    %2475 = vmatprep.subr.bf16.mxu0 %v1504
    %2476 = vmatpush1.bf16.msra.mxu0 %v1503
    %2477 = vmatprep.subr.bf16.mxu0 %v1508
    %2478 = vmatpush1.bf16.msra.mxu0 %v1507
    %2479 = vmatprep.subr.bf16.mxu0 %v1512
    %2480 = vmatpush1.bf16.msra.mxu0 %v1511
    %2481 = vmatprep.subr.bf16.mxu0 %v1516
    %2482 = vmatpush1.bf16.msra.mxu0 %v1515
    %2483 = vmatprep.mubr.bf16.mxu0 %v546
    %2484 = vmatmul.mubr.bf16.gmra.mrb[0].mxu0 %v545
    %v2485 = vpop.f32.mrb[0].mxu0
    %v2486 = vadd.f32 %v2373, %v2485
    %v2487 = vpop.f32.mrb[0].mxu0
    %v2488 = vadd.f32 %v2375, %v2487
    %v2489 = vpop.f32.mrb[0].mxu0
    %v2490 = vadd.f32 %v2377, %v2489
    %v2491 = vpop.f32.mrb[0].mxu0
    %v2492 = vadd.f32 %v2379, %v2491
    %2493 = vmatprep.mubr.bf16.mxu0 %v553
    %2494 = vmatmul.mubr.bf16.gmra.mrb[0].mxu0 %v552
    %v2495 = vpop.f32.mrb[0].mxu0
    %v2496 = vadd.f32 %v2383, %v2495
    %v2497 = vpop.f32.mrb[0].mxu0
    %v2498 = vadd.f32 %v2385, %v2497
    %v2499 = vpop.f32.mrb[0].mxu0
    %v2500 = vadd.f32 %v2387, %v2499
    %v2501 = vpop.f32.mrb[0].mxu0
    %v2502 = vadd.f32 %v2389, %v2501
    %2503 = vmatprep.mubr.bf16.mxu0 %v560
    %2504 = vmatmul.mubr.bf16.gmra.mrb[0].mxu0 %v559
    %v2505 = vpop.f32.mrb[0].mxu0
    %v2506 = vadd.f32 %v2393, %v2505
    %v2507 = vpop.f32.mrb[0].mxu0
    %v2508 = vadd.f32 %v2395, %v2507
    %v2509 = vpop.f32.mrb[0].mxu0
    %v2510 = vadd.f32 %v2397, %v2509
    %v2511 = vpop.f32.mrb[0].mxu0
    %v2512 = vadd.f32 %v2399, %v2511
    %2513 = vmatprep.mubr.bf16.mxu0 %v567
    %2514 = vmatmul.mubr.bf16.gmra.mrb[0].mxu0 %v566
    %v2515 = vpop.f32.mrb[0].mxu0
    %v2516 = vadd.f32 %v2403, %v2515
    %v2517 = vpop.f32.mrb[0].mxu0
    %v2518 = vadd.f32 %v2405, %v2517
    %v2519 = vpop.f32.mrb[0].mxu0
    %v2520 = vadd.f32 %v2407, %v2519
    %v2521 = vpop.f32.mrb[0].mxu0
    %v2522 = vadd.f32 %v2409, %v2521
    %2523 = vmatprep.mubr.bf16.mxu0 %v574
    %2524 = vmatmul.mubr.bf16.gmra.mrb[0].mxu0 %v573
    %v2525 = vpop.f32.mrb[0].mxu0
    %v2526 = vadd.f32 %v2413, %v2525
    %v2527 = vpop.f32.mrb[0].mxu0
    %v2528 = vadd.f32 %v2415, %v2527
    %v2529 = vpop.f32.mrb[0].mxu0
    %v2530 = vadd.f32 %v2417, %v2529
    %v2531 = vpop.f32.mrb[0].mxu0
    %v2532 = vadd.f32 %v2419, %v2531
    %2533 = vmatprep.mubr.bf16.mxu0 %v581
    %2534 = vmatmul.mubr.bf16.gmra.mrb[0].mxu0 %v580
    %v2535 = vpop.f32.mrb[0].mxu0
    %v2536 = vadd.f32 %v2423, %v2535
    %v2537 = vpop.f32.mrb[0].mxu0
    %v2538 = vadd.f32 %v2425, %v2537
    %v2539 = vpop.f32.mrb[0].mxu0
    %v2540 = vadd.f32 %v2427, %v2539
    %v2541 = vpop.f32.mrb[0].mxu0
    %v2542 = vadd.f32 %v2429, %v2541
    %2543 = vmatprep.mubr.bf16.mxu0 %v588
    %2544 = vmatmul.mubr.bf16.gmra.mrb[0].mxu0 %v587
    %v2545 = vpop.f32.mrb[0].mxu0
    %v2546 = vadd.f32 %v2433, %v2545
    %v2547 = vpop.f32.mrb[0].mxu0
    %v2548 = vadd.f32 %v2435, %v2547
    %v2549 = vpop.f32.mrb[0].mxu0
    %v2550 = vadd.f32 %v2437, %v2549
    %v2551 = vpop.f32.mrb[0].mxu0
    %v2552 = vadd.f32 %v2439, %v2551
    %2553 = vmatprep.mubr.bf16.mxu0 %v595
    %2554 = vmatmul.mubr.bf16.gmra.mrb[0].mxu0 %v594
    %v2555 = vpop.f32.mrb[0].mxu0
    %v2556 = vadd.f32 %v2443, %v2555
    %v2557 = vpop.f32.mrb[0].mxu0
    %v2558 = vadd.f32 %v2445, %v2557
    %v2559 = vpop.f32.mrb[0].mxu0
    %v2560 = vadd.f32 %v2447, %v2559
    %v2561 = vpop.f32.mrb[0].mxu0
    %v2562 = vadd.f32 %v2449, %v2561
    %2563 = vdwg.mxu0
    %2564 = vmatprep.subr.bf16.mxu0 %v1520
    %2565 = vmatpush1.bf16.msra.mxu0 %v1519
    %2566 = vmatprep.subr.bf16.mxu0 %v1524
    %2567 = vmatpush1.bf16.msra.mxu0 %v1523
    %2568 = vmatprep.subr.bf16.mxu0 %v1528
    %2569 = vmatpush1.bf16.msra.mxu0 %v1527
    %2570 = vmatprep.subr.bf16.mxu0 %v1532
    %2571 = vmatpush1.bf16.msra.mxu0 %v1531
    %2572 = vmatprep.subr.bf16.mxu0 %v1536
    %2573 = vmatpush1.bf16.msra.mxu0 %v1535
    %2574 = vmatprep.subr.bf16.mxu0 %v1540
    %2575 = vmatpush1.bf16.msra.mxu0 %v1539
    %2576 = vmatprep.subr.bf16.mxu0 %v1544
    %2577 = vmatpush1.bf16.msra.mxu0 %v1543
    %2578 = vmatprep.subr.bf16.mxu0 %v1548
    %2579 = vmatpush1.bf16.msra.mxu0 %v1547
    %2580 = vmatprep.subr.bf16.mxu0 0
    %2581 = vmatpush1.bf16.msra.mxu0 0
    %2582 = vmatprep.subr.bf16.mxu0 0
    %2583 = vmatpush1.bf16.msra.mxu0 0
    %2584 = vmatprep.subr.bf16.mxu0 0
    %2585 = vmatpush1.bf16.msra.mxu0 0
    %2586 = vmatprep.subr.bf16.mxu0 0
    %2587 = vmatpush1.bf16.msra.mxu0 0
    %2588 = vmatprep.subr.bf16.mxu0 0
    %2589 = vmatpush1.bf16.msra.mxu0 0
    %2590 = vmatprep.subr.bf16.mxu0 0
    %2591 = vmatpush1.bf16.msra.mxu0 0
    %2592 = vmatprep.subr.bf16.mxu0 0
    %2593 = vmatpush1.bf16.msra.mxu0 0
    %2594 = vmatprep.subr.bf16.mxu0 0
    %2595 = vmatpush1.bf16.msra.mxu0 0
    %2596 = vmatprep.mubr.bf16.mxu0 0
    %2597 = vmatmul.mubr.bf16.gmra.mrb[0].mxu0 %v547
    %v2598 = vpop.f32.mrb[0].mxu0
    %v2599 = vadd.f32 %v2486, %v2598
    %v2600 = vpop.f32.mrb[0].mxu0
    %v2601 = vadd.f32 %v2488, %v2600
    %v2602 = vpop.f32.mrb[0].mxu0
    %v2603 = vadd.f32 %v2490, %v2602
    %v2604 = vpop.f32.mrb[0].mxu0
    %v2605 = vadd.f32 %v2492, %v2604
    %2606 = vmatprep.mubr.bf16.mxu0 0
    %2607 = vmatmul.mubr.bf16.gmra.mrb[0].mxu0 %v554
    %v2608 = vpop.f32.mrb[0].mxu0
    %v2609 = vadd.f32 %v2496, %v2608
    %v2610 = vpop.f32.mrb[0].mxu0
    %v2611 = vadd.f32 %v2498, %v2610
    %v2612 = vpop.f32.mrb[0].mxu0
    %v2613 = vadd.f32 %v2500, %v2612
    %v2614 = vpop.f32.mrb[0].mxu0
    %v2615 = vadd.f32 %v2502, %v2614
    %2616 = vmatprep.mubr.bf16.mxu0 0
    %2617 = vmatmul.mubr.bf16.gmra.mrb[0].mxu0 %v561
    %v2618 = vpop.f32.mrb[0].mxu0
    %v2619 = vadd.f32 %v2506, %v2618
    %v2620 = vpop.f32.mrb[0].mxu0
    %v2621 = vadd.f32 %v2508, %v2620
    %v2622 = vpop.f32.mrb[0].mxu0
    %v2623 = vadd.f32 %v2510, %v2622
    %v2624 = vpop.f32.mrb[0].mxu0
    %v2625 = vadd.f32 %v2512, %v2624
    %2626 = vmatprep.mubr.bf16.mxu0 0
    %2627 = vmatmul.mubr.bf16.gmra.mrb[0].mxu0 %v568
    %v2628 = vpop.f32.mrb[0].mxu0
    %v2629 = vadd.f32 %v2516, %v2628
    %v2630 = vpop.f32.mrb[0].mxu0
    %v2631 = vadd.f32 %v2518, %v2630
    %v2632 = vpop.f32.mrb[0].mxu0
    %v2633 = vadd.f32 %v2520, %v2632
    %v2634 = vpop.f32.mrb[0].mxu0
    %v2635 = vadd.f32 %v2522, %v2634
    %2636 = vmatprep.mubr.bf16.mxu0 0
    %2637 = vmatmul.mubr.bf16.gmra.mrb[0].mxu0 %v575
    %v2638 = vpop.f32.mrb[0].mxu0
    %v2639 = vadd.f32 %v2526, %v2638
    %v2640 = vpop.f32.mrb[0].mxu0
    %v2641 = vadd.f32 %v2528, %v2640
    %v2642 = vpop.f32.mrb[0].mxu0
    %v2643 = vadd.f32 %v2530, %v2642
    %v2644 = vpop.f32.mrb[0].mxu0
    %v2645 = vadd.f32 %v2532, %v2644
    %2646 = vmatprep.mubr.bf16.mxu0 0
    %2647 = vmatmul.mubr.bf16.gmra.mrb[0].mxu0 %v582
    %v2648 = vpop.f32.mrb[0].mxu0
    %v2649 = vadd.f32 %v2536, %v2648
    %v2650 = vpop.f32.mrb[0].mxu0
    %v2651 = vadd.f32 %v2538, %v2650
    %v2652 = vpop.f32.mrb[0].mxu0
    %v2653 = vadd.f32 %v2540, %v2652
    %v2654 = vpop.f32.mrb[0].mxu0
    %v2655 = vadd.f32 %v2542, %v2654
    %2656 = vmatprep.mubr.bf16.mxu0 0
    %2657 = vmatmul.mubr.bf16.gmra.mrb[0].mxu0 %v589
    %v2658 = vpop.f32.mrb[0].mxu0
    %v2659 = vadd.f32 %v2546, %v2658
    %v2660 = vpop.f32.mrb[0].mxu0
    %v2661 = vadd.f32 %v2548, %v2660
    %v2662 = vpop.f32.mrb[0].mxu0
    %v2663 = vadd.f32 %v2550, %v2662
    %v2664 = vpop.f32.mrb[0].mxu0
    %v2665 = vadd.f32 %v2552, %v2664
    %2666 = vmatprep.mubr.bf16.mxu0 0
    %2667 = vmatmul.mubr.bf16.gmra.mrb[0].mxu0 %v596
    %v2668 = vpop.f32.mrb[0].mxu0
    %v2669 = vadd.f32 %v2556, %v2668
    %v2670 = vpop.f32.mrb[0].mxu0
    %v2671 = vadd.f32 %v2558, %v2670
    %v2672 = vpop.f32.mrb[0].mxu0
    %v2673 = vadd.f32 %v2560, %v2672
    %v2674 = vpop.f32.mrb[0].mxu0
    %v2675 = vadd.f32 %v2562, %v2674
    %2676 = vdwg.mxu0
    %v2677 = vmax.f32 %v2147, 0.0
    %v2678 = vmax.f32 %v2149, 0.0
    %v2679 = vmax.f32 %v2599, 0.0
    %v2680 = vmax.f32 %v2601, 0.0
    %v2681 = vmax.f32 %v2151, 0.0
    %v2682 = vmax.f32 %v2153, 0.0
    %v2683 = vmax.f32 %v2603, 0.0
    %v2684 = vmax.f32 %v2605, 0.0
    %v2685 = vmax.f32 %v2157, 0.0
    %v2686 = vmax.f32 %v2159, 0.0
    %v2687 = vmax.f32 %v2609, 0.0
    %v2688 = vmax.f32 %v2611, 0.0
    %v2689 = vmax.f32 %v2161, 0.0
    %v2690 = vmax.f32 %v2163, 0.0
    %v2691 = vmax.f32 %v2613, 0.0
    %v2692 = vmax.f32 %v2615, 0.0
    %v2693 = vmax.f32 %v2167, 0.0
    %v2694 = vmax.f32 %v2169, 0.0
    %v2695 = vmax.f32 %v2619, 0.0
    %v2696 = vmax.f32 %v2621, 0.0
    %v2697 = vmax.f32 %v2171, 0.0
    %v2698 = vmax.f32 %v2173, 0.0
    %v2699 = vmax.f32 %v2623, 0.0
    %v2700 = vmax.f32 %v2625, 0.0
    %v2701 = vmax.f32 %v2177, 0.0
    %v2702 = vmax.f32 %v2179, 0.0
    %v2703 = vmax.f32 %v2629, 0.0
    %v2704 = vmax.f32 %v2631, 0.0
    %v2705 = vmax.f32 %v2181, 0.0
    %v2706 = vmax.f32 %v2183, 0.0
    %v2707 = vmax.f32 %v2633, 0.0
    %v2708 = vmax.f32 %v2635, 0.0
    %v2709 = vmax.f32 %v2187, 0.0
    %v2710 = vmax.f32 %v2189, 0.0
    %v2711 = vmax.f32 %v2639, 0.0
    %v2712 = vmax.f32 %v2641, 0.0
    %v2713 = vmax.f32 %v2191, 0.0
    %v2714 = vmax.f32 %v2193, 0.0
    %v2715 = vmax.f32 %v2643, 0.0
    %v2716 = vmax.f32 %v2645, 0.0
    %v2717 = vmax.f32 %v2197, 0.0
    %v2718 = vmax.f32 %v2199, 0.0
    %v2719 = vmax.f32 %v2649, 0.0
    %v2720 = vmax.f32 %v2651, 0.0
    %v2721 = vmax.f32 %v2201, 0.0
    %v2722 = vmax.f32 %v2203, 0.0
    %v2723 = vmax.f32 %v2653, 0.0
    %v2724 = vmax.f32 %v2655, 0.0
    %v2725 = vmax.f32 %v2207, 0.0
    %v2726 = vmax.f32 %v2209, 0.0
    %v2727 = vmax.f32 %v2659, 0.0
    %v2728 = vmax.f32 %v2661, 0.0
    %v2729 = vmax.f32 %v2211, 0.0
    %v2730 = vmax.f32 %v2213, 0.0
    %v2731 = vmax.f32 %v2663, 0.0
    %v2732 = vmax.f32 %v2665, 0.0
    %v2733 = vmax.f32 %v2217, 0.0
    %v2734 = vmax.f32 %v2219, 0.0
    %v2735 = vmax.f32 %v2669, 0.0
    %v2736 = vmax.f32 %v2671, 0.0
    %v2737 = vmax.f32 %v2221, 0.0
    %v2738 = vmax.f32 %v2223, 0.0
    %v2739 = vmax.f32 %v2673, 0.0
    %v2740 = vmax.f32 %v2675, 0.0
    %v2741 = vpack.c.bf16 %v2681, %v2677
    %v2742 = vpack.c.bf16 %v2682, %v2678
    %v2743 = vpack.c.bf16 %v2683, %v2679
    %v2744 = vpack.c.bf16 %v2684, %v2680
    %v2745 = vpack.c.bf16 %v2689, %v2685
    %v2746 = vpack.c.bf16 %v2690, %v2686
    %v2747 = vpack.c.bf16 %v2691, %v2687
    %v2748 = vpack.c.bf16 %v2692, %v2688
    %v2749 = vpack.c.bf16 %v2697, %v2693
    %v2750 = vpack.c.bf16 %v2698, %v2694
    %v2751 = vpack.c.bf16 %v2699, %v2695
    %v2752 = vpack.c.bf16 %v2700, %v2696
    %v2753 = vpack.c.bf16 %v2705, %v2701
    %v2754 = vpack.c.bf16 %v2706, %v2702
    %v2755 = vpack.c.bf16 %v2707, %v2703
    %v2756 = vpack.c.bf16 %v2708, %v2704
    %v2757 = vpack.c.bf16 %v2713, %v2709
    %v2758 = vpack.c.bf16 %v2714, %v2710
    %v2759 = vpack.c.bf16 %v2715, %v2711
    %v2760 = vpack.c.bf16 %v2716, %v2712
    %v2761 = vpack.c.bf16 %v2721, %v2717
    %v2762 = vpack.c.bf16 %v2722, %v2718
    %v2763 = vpack.c.bf16 %v2723, %v2719
    %v2764 = vpack.c.bf16 %v2724, %v2720
    %v2765 = vpack.c.bf16 %v2729, %v2725
    %v2766 = vpack.c.bf16 %v2730, %v2726
    %v2767 = vpack.c.bf16 %v2731, %v2727
    %v2768 = vpack.c.bf16 %v2732, %v2728
    %v2769 = vpack.c.bf16 %v2737, %v2733
    %v2770 = vpack.c.bf16 %v2738, %v2734
    %v2771 = vpack.c.bf16 %v2739, %v2735
    %v2772 = vpack.c.bf16 %v2740, %v2736
    %v2773 = vld [vmem:[#allocation4] sm:$0xff]
    %v2774 = vld [vmem:[#allocation4 + $0x8] sm:$0xff]
    %v2775 = vld [vmem:[#allocation4 + $0x10] sm:$0xff]
    %v2776 = vld [vmem:[#allocation4 + $0x18] sm:$0xff]
    %v2777 = vld [vmem:[#allocation4 + $0x20] sm:$0xff]
    %v2778 = vld [vmem:[#allocation4 + $0x28] sm:$0xff]
    %v2779 = vld [vmem:[#allocation4 + $0x30] sm:$0xff]
    %v2780 = vld [vmem:[#allocation4 + $0x38] sm:$0xff]
    %v2781 = vld [vmem:[#allocation4 + $0x40] sm:$0xff]
    %v2782 = vld [vmem:[#allocation4 + $0x48] sm:$0xff]
    %v2783 = vld [vmem:[#allocation4 + $0x50] sm:$0xff]
    %v2784 = vld [vmem:[#allocation4 + $0x58] sm:$0xff]
    %v2785 = vld [vmem:[#allocation4 + $0x60] sm:$0xff]
    %v2786 = vld [vmem:[#allocation4 + $0x68] sm:$0xff]
    %v2787 = vld [vmem:[#allocation4 + $0x70] sm:$0xff]
    %v2788 = vld [vmem:[#allocation4 + $0x78] sm:$0xff]
    %v2789 = vld [vmem:[#allocation4 + $0x80] sm:$0xff]
    %v2790 = vld [vmem:[#allocation4 + $0x88] sm:$0xff]
    %v2791 = vld [vmem:[#allocation4 + $0x90] sm:$0xff]
    %v2792 = vld [vmem:[#allocation4 + $0x98] sm:$0xff]
    %v2793 = vld [vmem:[#allocation4 + $0xa0] sm:$0xff]
    %v2794 = vld [vmem:[#allocation4 + $0xa8] sm:$0xff]
    %v2795 = vld [vmem:[#allocation4 + $0xb0] sm:$0xff]
    %v2796 = vld [vmem:[#allocation4 + $0xb8] sm:$0xff]
    %v2797 = vld [vmem:[#allocation4 + $0xc0] sm:$0xff]
    %v2798 = vld [vmem:[#allocation4 + $0xc8] sm:$0xff]
    %v2799 = vld [vmem:[#allocation4 + $0xd0] sm:$0xff]
    %v2800 = vld [vmem:[#allocation4 + $0xd8] sm:$0xff]
    %v2801 = vld [vmem:[#allocation4 + $0xe0] sm:$0xff]
    %v2802 = vld [vmem:[#allocation4 + $0xe8] sm:$0xff]
    %v2803 = vld [vmem:[#allocation4 + $0xf0] sm:$0xff]
    %v2804 = vld [vmem:[#allocation4 + $0xf8] sm:$0xff]
    %v2805 = vld [vmem:[#allocation4 + $0x100] sm:$0xff]
    %v2806 = vld [vmem:[#allocation4 + $0x108] sm:$0xff]
    %v2807 = vld [vmem:[#allocation4 + $0x110] sm:$0xff]
    %v2808 = vld [vmem:[#allocation4 + $0x118] sm:$0xff]
    %v2809 = vld [vmem:[#allocation4 + $0x120] sm:$0xff]
    %v2810 = vld [vmem:[#allocation4 + $0x128] sm:$0xff]
    %v2811 = vld [vmem:[#allocation4 + $0x130] sm:$0xff]
    %v2812 = vld [vmem:[#allocation4 + $0x138] sm:$0xff]
    %v2813 = vld [vmem:[#allocation4 + $0x140] sm:$0xff]
    %v2814 = vld [vmem:[#allocation4 + $0x148] sm:$0xff]
    %v2815 = vld [vmem:[#allocation4 + $0x150] sm:$0xff]
    %v2816 = vld [vmem:[#allocation4 + $0x158] sm:$0xff]
    %v2817 = vld [vmem:[#allocation4 + $0x160] sm:$0xff]
    %v2818 = vld [vmem:[#allocation4 + $0x168] sm:$0xff]
    %v2819 = vld [vmem:[#allocation4 + $0x170] sm:$0xff]
    %v2820 = vld [vmem:[#allocation4 + $0x178] sm:$0xff]
    %v2821 = vld [vmem:[#allocation4 + $0x180] sm:$0xff]
    %v2822 = vld [vmem:[#allocation4 + $0x188] sm:$0xff]
    %v2823 = vld [vmem:[#allocation4 + $0x190] sm:$0xff]
    %v2824 = vld [vmem:[#allocation4 + $0x198] sm:$0xff]
    %v2825 = vld [vmem:[#allocation4 + $0x1a0] sm:$0xff]
    %v2826 = vld [vmem:[#allocation4 + $0x1a8] sm:$0xff]
    %v2827 = vld [vmem:[#allocation4 + $0x1b0] sm:$0xff]
    %v2828 = vld [vmem:[#allocation4 + $0x1b8] sm:$0xff]
    %v2829 = vld [vmem:[#allocation4 + $0x1c0] sm:$0xff]
    %v2830 = vld [vmem:[#allocation4 + $0x1c8] sm:$0xff]
    %v2831 = vld [vmem:[#allocation4 + $0x1d0] sm:$0xff]
    %v2832 = vld [vmem:[#allocation4 + $0x1d8] sm:$0xff]
    %v2833 = vld [vmem:[#allocation4 + $0x1e0] sm:$0xff]
    %v2834 = vld [vmem:[#allocation4 + $0x1e8] sm:$0xff]
    %v2835 = vld [vmem:[#allocation4 + $0x1f0] sm:$0xff]
    %v2836 = vld [vmem:[#allocation4 + $0x1f8] sm:$0xff]
    %v2837 = vld [vmem:[#allocation4 + $0x200] sm:$0xff]
    %v2838 = vld [vmem:[#allocation4 + $0x208] sm:$0xff]
    %v2839 = vld [vmem:[#allocation4 + $0x210] sm:$0xff]
    %v2840 = vld [vmem:[#allocation4 + $0x218] sm:$0xff]
    %v2841 = vld [vmem:[#allocation4 + $0x220] sm:$0xff]
    %v2842 = vld [vmem:[#allocation4 + $0x228] sm:$0xff]
    %v2843 = vld [vmem:[#allocation4 + $0x230] sm:$0xff]
    %v2844 = vld [vmem:[#allocation4 + $0x238] sm:$0xff]
    %v2845 = vld [vmem:[#allocation4 + $0x240] sm:$0xff]
    %v2846 = vld [vmem:[#allocation4 + $0x248] sm:$0xff]
    %v2847 = vld [vmem:[#allocation4 + $0x250] sm:$0xff]
    %v2848 = vld [vmem:[#allocation4 + $0x258] sm:$0xff]
    %v2849 = vld [vmem:[#allocation4 + $0x260] sm:$0xff]
    %v2850 = vld [vmem:[#allocation4 + $0x268] sm:$0xff]
    %v2851 = vld [vmem:[#allocation4 + $0x270] sm:$0xff]
    %v2852 = vld [vmem:[#allocation4 + $0x278] sm:$0xff]
    %v2853 = vld [vmem:[#allocation4 + $0x280] sm:$0xff]
    %v2854 = vld [vmem:[#allocation4 + $0x288] sm:$0xff]
    %v2855 = vld [vmem:[#allocation4 + $0x290] sm:$0xff]
    %v2856 = vld [vmem:[#allocation4 + $0x298] sm:$0xff]
    %v2857 = vld [vmem:[#allocation4 + $0x2a0] sm:$0xff]
    %v2858 = vld [vmem:[#allocation4 + $0x2a8] sm:$0xff]
    %v2859 = vld [vmem:[#allocation4 + $0x2b0] sm:$0xff]
    %v2860 = vld [vmem:[#allocation4 + $0x2b8] sm:$0xff]
    %v2861 = vld [vmem:[#allocation4 + $0x2c0] sm:$0xff]
    %v2862 = vld [vmem:[#allocation4 + $0x2c8] sm:$0xff]
    %v2863 = vld [vmem:[#allocation4 + $0x2d0] sm:$0xff]
    %v2864 = vld [vmem:[#allocation4 + $0x2d8] sm:$0xff]
    %v2865 = vld [vmem:[#allocation4 + $0x2e0] sm:$0xff]
    %v2866 = vld [vmem:[#allocation4 + $0x2e8] sm:$0xff]
    %v2867 = vld [vmem:[#allocation4 + $0x2f0] sm:$0xff]
    %v2868 = vld [vmem:[#allocation4 + $0x2f8] sm:$0xff]
    %v2869 = vld [vmem:[#allocation4 + $0x300] sm:$0xff]
    %v2870 = vld [vmem:[#allocation4 + $0x308] sm:$0xff]
    %v2871 = vld [vmem:[#allocation4 + $0x310] sm:$0xff]
    %v2872 = vld [vmem:[#allocation4 + $0x318] sm:$0xff]
    %v2873 = vld [vmem:[#allocation4 + $0x320] sm:$0xff]
    %v2874 = vld [vmem:[#allocation4 + $0x328] sm:$0xff]
    %v2875 = vld [vmem:[#allocation4 + $0x330] sm:$0xff]
    %v2876 = vld [vmem:[#allocation4 + $0x338] sm:$0xff]
    %v2877 = vld [vmem:[#allocation4 + $0x340] sm:$0xff]
    %v2878 = vld [vmem:[#allocation4 + $0x348] sm:$0xff]
    %v2879 = vld [vmem:[#allocation4 + $0x350] sm:$0xff]
    %v2880 = vld [vmem:[#allocation4 + $0x358] sm:$0xff]
    %v2881 = vld [vmem:[#allocation4 + $0x360] sm:$0xff]
    %v2882 = vld [vmem:[#allocation4 + $0x368] sm:$0xff]
    %v2883 = vld [vmem:[#allocation4 + $0x370] sm:$0xff]
    %v2884 = vld [vmem:[#allocation4 + $0x378] sm:$0xff]
    %v2885 = vld [vmem:[#allocation4 + $0x380] sm:$0xff]
    %v2886 = vld [vmem:[#allocation4 + $0x388] sm:$0xff]
    %v2887 = vld [vmem:[#allocation4 + $0x390] sm:$0xff]
    %v2888 = vld [vmem:[#allocation4 + $0x398] sm:$0xff]
    %v2889 = vld [vmem:[#allocation4 + $0x3a0] sm:$0xff]
    %v2890 = vld [vmem:[#allocation4 + $0x3a8] sm:$0xff]
    %v2891 = vld [vmem:[#allocation4 + $0x3b0] sm:$0xff]
    %v2892 = vld [vmem:[#allocation4 + $0x3b8] sm:$0xff]
    %v2893 = vld [vmem:[#allocation4 + $0x3c0] sm:$0xff]
    %v2894 = vld [vmem:[#allocation4 + $0x3c8] sm:$0xff]
    %v2895 = vld [vmem:[#allocation4 + $0x3d0] sm:$0xff]
    %v2896 = vld [vmem:[#allocation4 + $0x3d8] sm:$0xff]
    %v2897 = vld [vmem:[#allocation4 + $0x3e0] sm:$0xff]
    %v2898 = vld [vmem:[#allocation4 + $0x3e8] sm:$0xff]
    %v2899 = vld [vmem:[#allocation4 + $0x3f0] sm:$0xff]
    %v2900 = vld [vmem:[#allocation4 + $0x3f8] sm:$0xff]
    %v2901 = vld [vmem:[%s4] sm:$0xf]
    %v2903 = vlaneseq
    %v2904 = vshrl.u32 %v2903, 7
    %v2905 = vsub.s32 0, %v2904
    %v2906 = vrot.slane %v2901, %v2905
    %v2907 = vlaneseq
    %v2908 = vshrl.u32 %v2907, 7
    %v2909 = vsub.s32 1, %v2908
    %v2910 = vrot.slane %v2901, %v2909
    %v2911 = vlaneseq
    %v2912 = vshrl.u32 %v2911, 7
    %v2913 = vsub.s32 2, %v2912
    %v2914 = vrot.slane %v2901, %v2913
    %v2915 = vlaneseq
    %v2916 = vshrl.u32 %v2915, 7
    %v2917 = vsub.s32 3, %v2916
    %v2918 = vrot.slane %v2901, %v2917
    %v3051 = vunpack.c.l.b16 %v2773
    %v3052 = vunpack.c.h.b16 %v2773
    %v3053 = vunpack.c.l.b16 %v2774
    %v3054 = vunpack.c.h.b16 %v2774
    %v3055 = vunpack.c.l.b16 %v2775
    %v3056 = vunpack.c.h.b16 %v2775
    %v3057 = vunpack.c.l.b16 %v2776
    %v3058 = vunpack.c.h.b16 %v2776
    %v3059 = vunpack.c.l.b16 %v2777
    %v3060 = vunpack.c.h.b16 %v2777
    %v3061 = vunpack.c.l.b16 %v2778
    %v3062 = vunpack.c.h.b16 %v2778
    %v3063 = vunpack.c.l.b16 %v2779
    %v3064 = vunpack.c.h.b16 %v2779
    %v3065 = vunpack.c.l.b16 %v2780
    %v3066 = vunpack.c.h.b16 %v2780
    %v3067 = vunpack.c.l.b16 %v2781
    %v3068 = vunpack.c.h.b16 %v2781
    %v3069 = vunpack.c.l.b16 %v2782
    %v3070 = vunpack.c.h.b16 %v2782
    %v3071 = vunpack.c.l.b16 %v2783
    %v3072 = vunpack.c.h.b16 %v2783
    %v3073 = vunpack.c.l.b16 %v2784
    %v3074 = vunpack.c.h.b16 %v2784
    %v3075 = vunpack.c.l.b16 %v2785
    %v3076 = vunpack.c.h.b16 %v2785
    %v3077 = vunpack.c.l.b16 %v2786
    %v3078 = vunpack.c.h.b16 %v2786
    %v3079 = vunpack.c.l.b16 %v2787
    %v3080 = vunpack.c.h.b16 %v2787
    %v3081 = vunpack.c.l.b16 %v2788
    %v3082 = vunpack.c.h.b16 %v2788
    %v3083 = vunpack.c.l.b16 %v2789
    %v3084 = vunpack.c.h.b16 %v2789
    %v3085 = vunpack.c.l.b16 %v2790
    %v3086 = vunpack.c.h.b16 %v2790
    %v3087 = vunpack.c.l.b16 %v2791
    %v3088 = vunpack.c.h.b16 %v2791
    %v3089 = vunpack.c.l.b16 %v2792
    %v3090 = vunpack.c.h.b16 %v2792
    %v3091 = vunpack.c.l.b16 %v2793
    %v3092 = vunpack.c.h.b16 %v2793
    %v3093 = vunpack.c.l.b16 %v2794
    %v3094 = vunpack.c.h.b16 %v2794
    %v3095 = vunpack.c.l.b16 %v2795
    %v3096 = vunpack.c.h.b16 %v2795
    %v3097 = vunpack.c.l.b16 %v2796
    %v3098 = vunpack.c.h.b16 %v2796
    %v3099 = vunpack.c.l.b16 %v2797
    %v3100 = vunpack.c.h.b16 %v2797
    %v3101 = vunpack.c.l.b16 %v2798
    %v3102 = vunpack.c.h.b16 %v2798
    %v3103 = vunpack.c.l.b16 %v2799
    %v3104 = vunpack.c.h.b16 %v2799
    %v3105 = vunpack.c.l.b16 %v2800
    %v3106 = vunpack.c.h.b16 %v2800
    %v3107 = vunpack.c.l.b16 %v2801
    %v3108 = vunpack.c.h.b16 %v2801
    %v3109 = vunpack.c.l.b16 %v2802
    %v3110 = vunpack.c.h.b16 %v2802
    %v3111 = vunpack.c.l.b16 %v2803
    %v3112 = vunpack.c.h.b16 %v2803
    %v3113 = vunpack.c.l.b16 %v2804
    %v3114 = vunpack.c.h.b16 %v2804
    %v3115 = vunpack.c.l.b16 %v2805
    %v3116 = vunpack.c.h.b16 %v2805
    %v3117 = vunpack.c.l.b16 %v2806
    %v3118 = vunpack.c.h.b16 %v2806
    %v3119 = vunpack.c.l.b16 %v2807
    %v3120 = vunpack.c.h.b16 %v2807
    %v3121 = vunpack.c.l.b16 %v2808
    %v3122 = vunpack.c.h.b16 %v2808
    %v3123 = vunpack.c.l.b16 %v2809
    %v3124 = vunpack.c.h.b16 %v2809
    %v3125 = vunpack.c.l.b16 %v2810
    %v3126 = vunpack.c.h.b16 %v2810
    %v3127 = vunpack.c.l.b16 %v2811
    %v3128 = vunpack.c.h.b16 %v2811
    %v3129 = vunpack.c.l.b16 %v2812
    %v3130 = vunpack.c.h.b16 %v2812
    %v3131 = vunpack.c.l.b16 %v2813
    %v3132 = vunpack.c.h.b16 %v2813
    %v3133 = vunpack.c.l.b16 %v2814
    %v3134 = vunpack.c.h.b16 %v2814
    %v3135 = vunpack.c.l.b16 %v2815
    %v3136 = vunpack.c.h.b16 %v2815
    %v3137 = vunpack.c.l.b16 %v2816
    %v3138 = vunpack.c.h.b16 %v2816
    %v3139 = vunpack.c.l.b16 %v2817
    %v3140 = vunpack.c.h.b16 %v2817
    %v3141 = vunpack.c.l.b16 %v2818
    %v3142 = vunpack.c.h.b16 %v2818
    %v3143 = vunpack.c.l.b16 %v2819
    %v3144 = vunpack.c.h.b16 %v2819
    %v3145 = vunpack.c.l.b16 %v2820
    %v3146 = vunpack.c.h.b16 %v2820
    %v3147 = vunpack.c.l.b16 %v2821
    %v3148 = vunpack.c.h.b16 %v2821
    %v3149 = vunpack.c.l.b16 %v2822
    %v3150 = vunpack.c.h.b16 %v2822
    %v3151 = vunpack.c.l.b16 %v2823
    %v3152 = vunpack.c.h.b16 %v2823
    %v3153 = vunpack.c.l.b16 %v2824
    %v3154 = vunpack.c.h.b16 %v2824
    %v3155 = vunpack.c.l.b16 %v2825
    %v3156 = vunpack.c.h.b16 %v2825
    %v3157 = vunpack.c.l.b16 %v2826
    %v3158 = vunpack.c.h.b16 %v2826
    %v3159 = vunpack.c.l.b16 %v2827
    %v3160 = vunpack.c.h.b16 %v2827
    %v3161 = vunpack.c.l.b16 %v2828
    %v3162 = vunpack.c.h.b16 %v2828
    %v3163 = vunpack.c.l.b16 %v2829
    %v3164 = vunpack.c.h.b16 %v2829
    %v3165 = vunpack.c.l.b16 %v2830
    %v3166 = vunpack.c.h.b16 %v2830
    %v3167 = vunpack.c.l.b16 %v2831
    %v3168 = vunpack.c.h.b16 %v2831
    %v3169 = vunpack.c.l.b16 %v2832
    %v3170 = vunpack.c.h.b16 %v2832
    %v3171 = vunpack.c.l.b16 %v2833
    %v3172 = vunpack.c.h.b16 %v2833
    %v3173 = vunpack.c.l.b16 %v2834
    %v3174 = vunpack.c.h.b16 %v2834
    %v3175 = vunpack.c.l.b16 %v2835
    %v3176 = vunpack.c.h.b16 %v2835
    %v3177 = vunpack.c.l.b16 %v2836
    %v3178 = vunpack.c.h.b16 %v2836
    %v3179 = vunpack.c.l.b16 %v2837
    %v3180 = vunpack.c.h.b16 %v2837
    %v3181 = vunpack.c.l.b16 %v2838
    %v3182 = vunpack.c.h.b16 %v2838
    %v3183 = vunpack.c.l.b16 %v2839
    %v3184 = vunpack.c.h.b16 %v2839
    %v3185 = vunpack.c.l.b16 %v2840
    %v3186 = vunpack.c.h.b16 %v2840
    %v3187 = vunpack.c.l.b16 %v2841
    %v3188 = vunpack.c.h.b16 %v2841
    %v3189 = vunpack.c.l.b16 %v2842
    %v3190 = vunpack.c.h.b16 %v2842
    %v3191 = vunpack.c.l.b16 %v2843
    %v3192 = vunpack.c.h.b16 %v2843
    %v3193 = vunpack.c.l.b16 %v2844
    %v3194 = vunpack.c.h.b16 %v2844
    %v3195 = vunpack.c.l.b16 %v2845
    %v3196 = vunpack.c.h.b16 %v2845
    %v3197 = vunpack.c.l.b16 %v2846
    %v3198 = vunpack.c.h.b16 %v2846
    %v3199 = vunpack.c.l.b16 %v2847
    %v3200 = vunpack.c.h.b16 %v2847
    %v3201 = vunpack.c.l.b16 %v2848
    %v3202 = vunpack.c.h.b16 %v2848
    %v3203 = vunpack.c.l.b16 %v2849
    %v3204 = vunpack.c.h.b16 %v2849
    %v3205 = vunpack.c.l.b16 %v2850
    %v3206 = vunpack.c.h.b16 %v2850
    %v3207 = vunpack.c.l.b16 %v2851
    %v3208 = vunpack.c.h.b16 %v2851
    %v3209 = vunpack.c.l.b16 %v2852
    %v3210 = vunpack.c.h.b16 %v2852
    %v3211 = vunpack.c.l.b16 %v2853
    %v3212 = vunpack.c.h.b16 %v2853
    %v3213 = vunpack.c.l.b16 %v2854
    %v3214 = vunpack.c.h.b16 %v2854
    %v3215 = vunpack.c.l.b16 %v2855
    %v3216 = vunpack.c.h.b16 %v2855
    %v3217 = vunpack.c.l.b16 %v2856
    %v3218 = vunpack.c.h.b16 %v2856
    %v3219 = vunpack.c.l.b16 %v2857
    %v3220 = vunpack.c.h.b16 %v2857
    %v3221 = vunpack.c.l.b16 %v2858
    %v3222 = vunpack.c.h.b16 %v2858
    %v3223 = vunpack.c.l.b16 %v2859
    %v3224 = vunpack.c.h.b16 %v2859
    %v3225 = vunpack.c.l.b16 %v2860
    %v3226 = vunpack.c.h.b16 %v2860
    %v3227 = vunpack.c.l.b16 %v2861
    %v3228 = vunpack.c.h.b16 %v2861
    %v3229 = vunpack.c.l.b16 %v2862
    %v3230 = vunpack.c.h.b16 %v2862
    %v3231 = vunpack.c.l.b16 %v2863
    %v3232 = vunpack.c.h.b16 %v2863
    %v3233 = vunpack.c.l.b16 %v2864
    %v3234 = vunpack.c.h.b16 %v2864
    %v3235 = vunpack.c.l.b16 %v2865
    %v3236 = vunpack.c.h.b16 %v2865
    %v3237 = vunpack.c.l.b16 %v2866
    %v3238 = vunpack.c.h.b16 %v2866
    %v3239 = vunpack.c.l.b16 %v2867
    %v3240 = vunpack.c.h.b16 %v2867
    %v3241 = vunpack.c.l.b16 %v2868
    %v3242 = vunpack.c.h.b16 %v2868
    %v3243 = vunpack.c.l.b16 %v2869
    %v3244 = vunpack.c.h.b16 %v2869
    %v3245 = vunpack.c.l.b16 %v2870
    %v3246 = vunpack.c.h.b16 %v2870
    %v3247 = vunpack.c.l.b16 %v2871
    %v3248 = vunpack.c.h.b16 %v2871
    %v3249 = vunpack.c.l.b16 %v2872
    %v3250 = vunpack.c.h.b16 %v2872
    %v3251 = vunpack.c.l.b16 %v2873
    %v3252 = vunpack.c.h.b16 %v2873
    %v3253 = vunpack.c.l.b16 %v2874
    %v3254 = vunpack.c.h.b16 %v2874
    %v3255 = vunpack.c.l.b16 %v2875
    %v3256 = vunpack.c.h.b16 %v2875
    %v3257 = vunpack.c.l.b16 %v2876
    %v3258 = vunpack.c.h.b16 %v2876
    %v3259 = vunpack.c.l.b16 %v2877
    %v3260 = vunpack.c.h.b16 %v2877
    %v3261 = vunpack.c.l.b16 %v2878
    %v3262 = vunpack.c.h.b16 %v2878
    %v3263 = vunpack.c.l.b16 %v2879
    %v3264 = vunpack.c.h.b16 %v2879
    %v3265 = vunpack.c.l.b16 %v2880
    %v3266 = vunpack.c.h.b16 %v2880
    %v3267 = vunpack.c.l.b16 %v2881
    %v3268 = vunpack.c.h.b16 %v2881
    %v3269 = vunpack.c.l.b16 %v2882
    %v3270 = vunpack.c.h.b16 %v2882
    %v3271 = vunpack.c.l.b16 %v2883
    %v3272 = vunpack.c.h.b16 %v2883
    %v3273 = vunpack.c.l.b16 %v2884
    %v3274 = vunpack.c.h.b16 %v2884
    %v3275 = vunpack.c.l.b16 %v2885
    %v3276 = vunpack.c.h.b16 %v2885
    %v3277 = vunpack.c.l.b16 %v2886
    %v3278 = vunpack.c.h.b16 %v2886
    %v3279 = vunpack.c.l.b16 %v2887
    %v3280 = vunpack.c.h.b16 %v2887
    %v3281 = vunpack.c.l.b16 %v2888
    %v3282 = vunpack.c.h.b16 %v2888
    %v3283 = vunpack.c.l.b16 %v2889
    %v3284 = vunpack.c.h.b16 %v2889
    %v3285 = vunpack.c.l.b16 %v2890
    %v3286 = vunpack.c.h.b16 %v2890
    %v3287 = vunpack.c.l.b16 %v2891
    %v3288 = vunpack.c.h.b16 %v2891
    %v3289 = vunpack.c.l.b16 %v2892
    %v3290 = vunpack.c.h.b16 %v2892
    %v3291 = vunpack.c.l.b16 %v2893
    %v3292 = vunpack.c.h.b16 %v2893
    %v3293 = vunpack.c.l.b16 %v2894
    %v3294 = vunpack.c.h.b16 %v2894
    %v3295 = vunpack.c.l.b16 %v2895
    %v3296 = vunpack.c.h.b16 %v2895
    %v3297 = vunpack.c.l.b16 %v2896
    %v3298 = vunpack.c.h.b16 %v2896
    %v3299 = vunpack.c.l.b16 %v2897
    %v3300 = vunpack.c.h.b16 %v2897
    %v3301 = vunpack.c.l.b16 %v2898
    %v3302 = vunpack.c.h.b16 %v2898
    %v3303 = vunpack.c.l.b16 %v2899
    %v3304 = vunpack.c.h.b16 %v2899
    %v3305 = vunpack.c.l.b16 %v2900
    %v3306 = vunpack.c.h.b16 %v2900
    %v3307 = vpack.c.b16 %v3055, %v3051
    %v3308 = vpack.c.b16 %v3056, %v3052
    %v3309 = vpack.c.b16 %v3057, %v3053
    %v3310 = vpack.c.b16 %v3058, %v3054
    %v3311 = vpack.c.b16 %v3063, %v3059
    %v3312 = vpack.c.b16 %v3064, %v3060
    %v3313 = vpack.c.b16 %v3065, %v3061
    %v3314 = vpack.c.b16 %v3066, %v3062
    %v3315 = vpack.c.b16 %v3071, %v3067
    %v3316 = vpack.c.b16 %v3072, %v3068
    %v3317 = vpack.c.b16 %v3073, %v3069
    %v3318 = vpack.c.b16 %v3074, %v3070
    %v3319 = vpack.c.b16 %v3079, %v3075
    %v3320 = vpack.c.b16 %v3080, %v3076
    %v3321 = vpack.c.b16 %v3081, %v3077
    %v3322 = vpack.c.b16 %v3082, %v3078
    %v3323 = vpack.c.b16 %v3087, %v3083
    %v3324 = vpack.c.b16 %v3088, %v3084
    %v3325 = vpack.c.b16 %v3089, %v3085
    %v3326 = vpack.c.b16 %v3090, %v3086
    %v3327 = vpack.c.b16 %v3095, %v3091
    %v3328 = vpack.c.b16 %v3096, %v3092
    %v3329 = vpack.c.b16 %v3097, %v3093
    %v3330 = vpack.c.b16 %v3098, %v3094
    %v3331 = vpack.c.b16 %v3103, %v3099
    %v3332 = vpack.c.b16 %v3104, %v3100
    %v3333 = vpack.c.b16 %v3105, %v3101
    %v3334 = vpack.c.b16 %v3106, %v3102
    %v3335 = vpack.c.b16 %v3111, %v3107
    %v3336 = vpack.c.b16 %v3112, %v3108
    %v3337 = vpack.c.b16 %v3113, %v3109
    %v3338 = vpack.c.b16 %v3114, %v3110
    %v3339 = vpack.c.b16 %v3119, %v3115
    %v3340 = vpack.c.b16 %v3120, %v3116
    %v3341 = vpack.c.b16 %v3121, %v3117
    %v3342 = vpack.c.b16 %v3122, %v3118
    %v3343 = vpack.c.b16 %v3127, %v3123
    %v3344 = vpack.c.b16 %v3128, %v3124
    %v3345 = vpack.c.b16 %v3129, %v3125
    %v3346 = vpack.c.b16 %v3130, %v3126
    %v3347 = vpack.c.b16 %v3135, %v3131
    %v3348 = vpack.c.b16 %v3136, %v3132
    %v3349 = vpack.c.b16 %v3137, %v3133
    %v3350 = vpack.c.b16 %v3138, %v3134
    %v3351 = vpack.c.b16 %v3143, %v3139
    %v3352 = vpack.c.b16 %v3144, %v3140
    %v3353 = vpack.c.b16 %v3145, %v3141
    %v3354 = vpack.c.b16 %v3146, %v3142
    %v3355 = vpack.c.b16 %v3151, %v3147
    %v3356 = vpack.c.b16 %v3152, %v3148
    %v3357 = vpack.c.b16 %v3153, %v3149
    %v3358 = vpack.c.b16 %v3154, %v3150
    %v3359 = vpack.c.b16 %v3159, %v3155
    %v3360 = vpack.c.b16 %v3160, %v3156
    %v3361 = vpack.c.b16 %v3161, %v3157
    %v3362 = vpack.c.b16 %v3162, %v3158
    %v3363 = vpack.c.b16 %v3167, %v3163
    %v3364 = vpack.c.b16 %v3168, %v3164
    %v3365 = vpack.c.b16 %v3169, %v3165
    %v3366 = vpack.c.b16 %v3170, %v3166
    %v3367 = vpack.c.b16 %v3175, %v3171
    %v3368 = vpack.c.b16 %v3176, %v3172
    %v3369 = vpack.c.b16 %v3177, %v3173
    %v3370 = vpack.c.b16 %v3178, %v3174
    %v3371 = vpack.c.b16 %v3183, %v3179
    %v3372 = vpack.c.b16 %v3184, %v3180
    %v3373 = vpack.c.b16 %v3185, %v3181
    %v3374 = vpack.c.b16 %v3186, %v3182
    %v3375 = vpack.c.b16 %v3191, %v3187
    %v3376 = vpack.c.b16 %v3192, %v3188
    %v3377 = vpack.c.b16 %v3193, %v3189
    %v3378 = vpack.c.b16 %v3194, %v3190
    %v3379 = vpack.c.b16 %v3199, %v3195
    %v3380 = vpack.c.b16 %v3200, %v3196
    %v3381 = vpack.c.b16 %v3201, %v3197
    %v3382 = vpack.c.b16 %v3202, %v3198
    %v3383 = vpack.c.b16 %v3207, %v3203
    %v3384 = vpack.c.b16 %v3208, %v3204
    %v3385 = vpack.c.b16 %v3209, %v3205
    %v3386 = vpack.c.b16 %v3210, %v3206
    %v3387 = vpack.c.b16 %v3215, %v3211
    %v3388 = vpack.c.b16 %v3216, %v3212
    %v3389 = vpack.c.b16 %v3217, %v3213
    %v3390 = vpack.c.b16 %v3218, %v3214
    %v3391 = vpack.c.b16 %v3223, %v3219
    %v3392 = vpack.c.b16 %v3224, %v3220
    %v3393 = vpack.c.b16 %v3225, %v3221
    %v3394 = vpack.c.b16 %v3226, %v3222
    %v3395 = vpack.c.b16 %v3231, %v3227
    %v3396 = vpack.c.b16 %v3232, %v3228
    %v3397 = vpack.c.b16 %v3233, %v3229
    %v3398 = vpack.c.b16 %v3234, %v3230
    %v3399 = vpack.c.b16 %v3239, %v3235
    %v3400 = vpack.c.b16 %v3240, %v3236
    %v3401 = vpack.c.b16 %v3241, %v3237
    %v3402 = vpack.c.b16 %v3242, %v3238
    %v3403 = vpack.c.b16 %v3247, %v3243
    %v3404 = vpack.c.b16 %v3248, %v3244
    %v3405 = vpack.c.b16 %v3249, %v3245
    %v3406 = vpack.c.b16 %v3250, %v3246
    %v3407 = vpack.c.b16 %v3255, %v3251
    %v3408 = vpack.c.b16 %v3256, %v3252
    %v3409 = vpack.c.b16 %v3257, %v3253
    %v3410 = vpack.c.b16 %v3258, %v3254
    %v3411 = vpack.c.b16 %v3263, %v3259
    %v3412 = vpack.c.b16 %v3264, %v3260
    %v3413 = vpack.c.b16 %v3265, %v3261
    %v3414 = vpack.c.b16 %v3266, %v3262
    %v3415 = vpack.c.b16 %v3271, %v3267
    %v3416 = vpack.c.b16 %v3272, %v3268
    %v3417 = vpack.c.b16 %v3273, %v3269
    %v3418 = vpack.c.b16 %v3274, %v3270
    %v3419 = vpack.c.b16 %v3279, %v3275
    %v3420 = vpack.c.b16 %v3280, %v3276
    %v3421 = vpack.c.b16 %v3281, %v3277
    %v3422 = vpack.c.b16 %v3282, %v3278
    %v3423 = vpack.c.b16 %v3287, %v3283
    %v3424 = vpack.c.b16 %v3288, %v3284
    %v3425 = vpack.c.b16 %v3289, %v3285
    %v3426 = vpack.c.b16 %v3290, %v3286
    %v3427 = vpack.c.b16 %v3295, %v3291
    %v3428 = vpack.c.b16 %v3296, %v3292
    %v3429 = vpack.c.b16 %v3297, %v3293
    %v3430 = vpack.c.b16 %v3298, %v3294
    %v3431 = vpack.c.b16 %v3303, %v3299
    %v3432 = vpack.c.b16 %v3304, %v3300
    %v3433 = vpack.c.b16 %v3305, %v3301
    %v3434 = vpack.c.b16 %v3306, %v3302
    %3563 = vmatprep.subr.bf16.mxu0 %v3308
    %3564 = vmatpush1.bf16.msra.mxu0 %v3307
    %3565 = vmatprep.subr.bf16.mxu0 %v3312
    %3566 = vmatpush1.bf16.msra.mxu0 %v3311
    %3567 = vmatprep.subr.bf16.mxu0 %v3316
    %3568 = vmatpush1.bf16.msra.mxu0 %v3315
    %3569 = vmatprep.subr.bf16.mxu0 %v3320
    %3570 = vmatpush1.bf16.msra.mxu0 %v3319
    %3571 = vmatprep.subr.bf16.mxu0 %v3324
    %3572 = vmatpush1.bf16.msra.mxu0 %v3323
    %3573 = vmatprep.subr.bf16.mxu0 %v3328
    %3574 = vmatpush1.bf16.msra.mxu0 %v3327
    %3575 = vmatprep.subr.bf16.mxu0 %v3332
    %3576 = vmatpush1.bf16.msra.mxu0 %v3331
    %3577 = vmatprep.subr.bf16.mxu0 %v3336
    %3578 = vmatpush1.bf16.msra.mxu0 %v3335
    %3579 = vmatprep.subr.bf16.mxu0 %v3340
    %3580 = vmatpush1.bf16.msra.mxu0 %v3339
    %3581 = vmatprep.subr.bf16.mxu0 %v3344
    %3582 = vmatpush1.bf16.msra.mxu0 %v3343
    %3583 = vmatprep.subr.bf16.mxu0 %v3348
    %3584 = vmatpush1.bf16.msra.mxu0 %v3347
    %3585 = vmatprep.subr.bf16.mxu0 %v3352
    %3586 = vmatpush1.bf16.msra.mxu0 %v3351
    %3587 = vmatprep.subr.bf16.mxu0 %v3356
    %3588 = vmatpush1.bf16.msra.mxu0 %v3355
    %3589 = vmatprep.subr.bf16.mxu0 %v3360
    %3590 = vmatpush1.bf16.msra.mxu0 %v3359
    %3591 = vmatprep.subr.bf16.mxu0 %v3364
    %3592 = vmatpush1.bf16.msra.mxu0 %v3363
    %3593 = vmatprep.subr.bf16.mxu0 %v3368
    %3594 = vmatpush1.bf16.msra.mxu0 %v3367
    %3595 = vmatprep.mubr.bf16.mxu0 %v2742
    %3596 = vmatmul.mubr.bf16.gmra.mrb[0].mxu0 %v2741
    %v3597 = vpop.f32.mrb[0].mxu0
    %v3598 = vadd.f32 %v2906, %v3597
    %v3599 = vpop.f32.mrb[0].mxu0
    %v3600 = vadd.f32 %v2910, %v3599
    %v3601 = vpop.f32.mrb[0].mxu0
    %v3602 = vadd.f32 %v2906, %v3601
    %v3603 = vpop.f32.mrb[0].mxu0
    %v3604 = vadd.f32 %v2910, %v3603
    %3605 = vmatprep.mubr.bf16.mxu0 %v2746
    %3606 = vmatmul.mubr.bf16.gmra.mrb[0].mxu0 %v2745
    %v3607 = vpop.f32.mrb[0].mxu0
    %v3608 = vadd.f32 %v2906, %v3607
    %v3609 = vpop.f32.mrb[0].mxu0
    %v3610 = vadd.f32 %v2910, %v3609
    %v3611 = vpop.f32.mrb[0].mxu0
    %v3612 = vadd.f32 %v2906, %v3611
    %v3613 = vpop.f32.mrb[0].mxu0
    %v3614 = vadd.f32 %v2910, %v3613
    %3615 = vmatprep.mubr.bf16.mxu0 %v2750
    %3616 = vmatmul.mubr.bf16.gmra.mrb[0].mxu0 %v2749
    %v3617 = vpop.f32.mrb[0].mxu0
    %v3618 = vadd.f32 %v2906, %v3617
    %v3619 = vpop.f32.mrb[0].mxu0
    %v3620 = vadd.f32 %v2910, %v3619
    %v3621 = vpop.f32.mrb[0].mxu0
    %v3622 = vadd.f32 %v2906, %v3621
    %v3623 = vpop.f32.mrb[0].mxu0
    %v3624 = vadd.f32 %v2910, %v3623
    %3625 = vmatprep.mubr.bf16.mxu0 %v2754
    %3626 = vmatmul.mubr.bf16.gmra.mrb[0].mxu0 %v2753
    %v3627 = vpop.f32.mrb[0].mxu0
    %v3628 = vadd.f32 %v2906, %v3627
    %v3629 = vpop.f32.mrb[0].mxu0
    %v3630 = vadd.f32 %v2910, %v3629
    %v3631 = vpop.f32.mrb[0].mxu0
    %v3632 = vadd.f32 %v2906, %v3631
    %v3633 = vpop.f32.mrb[0].mxu0
    %v3634 = vadd.f32 %v2910, %v3633
    %3635 = vmatprep.mubr.bf16.mxu0 %v2758
    %3636 = vmatmul.mubr.bf16.gmra.mrb[0].mxu0 %v2757
    %v3637 = vpop.f32.mrb[0].mxu0
    %v3638 = vadd.f32 %v2906, %v3637
    %v3639 = vpop.f32.mrb[0].mxu0
    %v3640 = vadd.f32 %v2910, %v3639
    %v3641 = vpop.f32.mrb[0].mxu0
    %v3642 = vadd.f32 %v2906, %v3641
    %v3643 = vpop.f32.mrb[0].mxu0
    %v3644 = vadd.f32 %v2910, %v3643
    %3645 = vmatprep.mubr.bf16.mxu0 %v2762
    %3646 = vmatmul.mubr.bf16.gmra.mrb[0].mxu0 %v2761
    %v3647 = vpop.f32.mrb[0].mxu0
    %v3648 = vadd.f32 %v2906, %v3647
    %v3649 = vpop.f32.mrb[0].mxu0
    %v3650 = vadd.f32 %v2910, %v3649
    %v3651 = vpop.f32.mrb[0].mxu0
    %v3652 = vadd.f32 %v2906, %v3651
    %v3653 = vpop.f32.mrb[0].mxu0
    %v3654 = vadd.f32 %v2910, %v3653
    %3655 = vmatprep.mubr.bf16.mxu0 %v2766
    %3656 = vmatmul.mubr.bf16.gmra.mrb[0].mxu0 %v2765
    %v3657 = vpop.f32.mrb[0].mxu0
    %v3658 = vadd.f32 %v2906, %v3657
    %v3659 = vpop.f32.mrb[0].mxu0
    %v3660 = vadd.f32 %v2910, %v3659
    %v3661 = vpop.f32.mrb[0].mxu0
    %v3662 = vadd.f32 %v2906, %v3661
    %v3663 = vpop.f32.mrb[0].mxu0
    %v3664 = vadd.f32 %v2910, %v3663
    %3665 = vmatprep.mubr.bf16.mxu0 %v2770
    %3666 = vmatmul.mubr.bf16.gmra.mrb[0].mxu0 %v2769
    %v3667 = vpop.f32.mrb[0].mxu0
    %v3668 = vadd.f32 %v2906, %v3667
    %v3669 = vpop.f32.mrb[0].mxu0
    %v3670 = vadd.f32 %v2910, %v3669
    %v3671 = vpop.f32.mrb[0].mxu0
    %v3672 = vadd.f32 %v2906, %v3671
    %v3673 = vpop.f32.mrb[0].mxu0
    %v3674 = vadd.f32 %v2910, %v3673
    %3675 = vdwg.mxu0
    %3676 = vmatprep.subr.bf16.mxu0 %v3372
    %3677 = vmatpush1.bf16.msra.mxu0 %v3371
    %3678 = vmatprep.subr.bf16.mxu0 %v3376
    %3679 = vmatpush1.bf16.msra.mxu0 %v3375
    %3680 = vmatprep.subr.bf16.mxu0 %v3380
    %3681 = vmatpush1.bf16.msra.mxu0 %v3379
    %3682 = vmatprep.subr.bf16.mxu0 %v3384
    %3683 = vmatpush1.bf16.msra.mxu0 %v3383
    %3684 = vmatprep.subr.bf16.mxu0 %v3388
    %3685 = vmatpush1.bf16.msra.mxu0 %v3387
    %3686 = vmatprep.subr.bf16.mxu0 %v3392
    %3687 = vmatpush1.bf16.msra.mxu0 %v3391
    %3688 = vmatprep.subr.bf16.mxu0 %v3396
    %3689 = vmatpush1.bf16.msra.mxu0 %v3395
    %3690 = vmatprep.subr.bf16.mxu0 %v3400
    %3691 = vmatpush1.bf16.msra.mxu0 %v3399
    %3692 = vmatprep.subr.bf16.mxu0 %v3404
    %3693 = vmatpush1.bf16.msra.mxu0 %v3403
    %3694 = vmatprep.subr.bf16.mxu0 %v3408
    %3695 = vmatpush1.bf16.msra.mxu0 %v3407
    %3696 = vmatprep.subr.bf16.mxu0 %v3412
    %3697 = vmatpush1.bf16.msra.mxu0 %v3411
    %3698 = vmatprep.subr.bf16.mxu0 %v3416
    %3699 = vmatpush1.bf16.msra.mxu0 %v3415
    %3700 = vmatprep.subr.bf16.mxu0 %v3420
    %3701 = vmatpush1.bf16.msra.mxu0 %v3419
    %3702 = vmatprep.subr.bf16.mxu0 %v3424
    %3703 = vmatpush1.bf16.msra.mxu0 %v3423
    %3704 = vmatprep.subr.bf16.mxu0 %v3428
    %3705 = vmatpush1.bf16.msra.mxu0 %v3427
    %3706 = vmatprep.subr.bf16.mxu0 %v3432
    %3707 = vmatpush1.bf16.msra.mxu0 %v3431
    %3708 = vmatprep.mubr.bf16.mxu0 %v2744
    %3709 = vmatmul.mubr.bf16.gmra.mrb[0].mxu0 %v2743
    %v3710 = vpop.f32.mrb[0].mxu0
    %v3711 = vadd.f32 %v3598, %v3710
    %v3712 = vpop.f32.mrb[0].mxu0
    %v3713 = vadd.f32 %v3600, %v3712
    %v3714 = vpop.f32.mrb[0].mxu0
    %v3715 = vadd.f32 %v3602, %v3714
    %v3716 = vpop.f32.mrb[0].mxu0
    %v3717 = vadd.f32 %v3604, %v3716
    %3718 = vmatprep.mubr.bf16.mxu0 %v2748
    %3719 = vmatmul.mubr.bf16.gmra.mrb[0].mxu0 %v2747
    %v3720 = vpop.f32.mrb[0].mxu0
    %v3721 = vadd.f32 %v3608, %v3720
    %v3722 = vpop.f32.mrb[0].mxu0
    %v3723 = vadd.f32 %v3610, %v3722
    %v3724 = vpop.f32.mrb[0].mxu0
    %v3725 = vadd.f32 %v3612, %v3724
    %v3726 = vpop.f32.mrb[0].mxu0
    %v3727 = vadd.f32 %v3614, %v3726
    %3728 = vmatprep.mubr.bf16.mxu0 %v2752
    %3729 = vmatmul.mubr.bf16.gmra.mrb[0].mxu0 %v2751
    %v3730 = vpop.f32.mrb[0].mxu0
    %v3731 = vadd.f32 %v3618, %v3730
    %v3732 = vpop.f32.mrb[0].mxu0
    %v3733 = vadd.f32 %v3620, %v3732
    %v3734 = vpop.f32.mrb[0].mxu0
    %v3735 = vadd.f32 %v3622, %v3734
    %v3736 = vpop.f32.mrb[0].mxu0
    %v3737 = vadd.f32 %v3624, %v3736
    %3738 = vmatprep.mubr.bf16.mxu0 %v2756
    %3739 = vmatmul.mubr.bf16.gmra.mrb[0].mxu0 %v2755
    %v3740 = vpop.f32.mrb[0].mxu0
    %v3741 = vadd.f32 %v3628, %v3740
    %v3742 = vpop.f32.mrb[0].mxu0
    %v3743 = vadd.f32 %v3630, %v3742
    %v3744 = vpop.f32.mrb[0].mxu0
    %v3745 = vadd.f32 %v3632, %v3744
    %v3746 = vpop.f32.mrb[0].mxu0
    %v3747 = vadd.f32 %v3634, %v3746
    %3748 = vmatprep.mubr.bf16.mxu0 %v2760
    %3749 = vmatmul.mubr.bf16.gmra.mrb[0].mxu0 %v2759
    %v3750 = vpop.f32.mrb[0].mxu0
    %v3751 = vadd.f32 %v3638, %v3750
    %v3752 = vpop.f32.mrb[0].mxu0
    %v3753 = vadd.f32 %v3640, %v3752
    %v3754 = vpop.f32.mrb[0].mxu0
    %v3755 = vadd.f32 %v3642, %v3754
    %v3756 = vpop.f32.mrb[0].mxu0
    %v3757 = vadd.f32 %v3644, %v3756
    %3758 = vmatprep.mubr.bf16.mxu0 %v2764
    %3759 = vmatmul.mubr.bf16.gmra.mrb[0].mxu0 %v2763
    %v3760 = vpop.f32.mrb[0].mxu0
    %v3761 = vadd.f32 %v3648, %v3760
    %v3762 = vpop.f32.mrb[0].mxu0
    %v3763 = vadd.f32 %v3650, %v3762
    %v3764 = vpop.f32.mrb[0].mxu0
    %v3765 = vadd.f32 %v3652, %v3764
    %v3766 = vpop.f32.mrb[0].mxu0
    %v3767 = vadd.f32 %v3654, %v3766
    %3768 = vmatprep.mubr.bf16.mxu0 %v2768
    %3769 = vmatmul.mubr.bf16.gmra.mrb[0].mxu0 %v2767
    %v3770 = vpop.f32.mrb[0].mxu0
    %v3771 = vadd.f32 %v3658, %v3770
    %v3772 = vpop.f32.mrb[0].mxu0
    %v3773 = vadd.f32 %v3660, %v3772
    %v3774 = vpop.f32.mrb[0].mxu0
    %v3775 = vadd.f32 %v3662, %v3774
    %v3776 = vpop.f32.mrb[0].mxu0
    %v3777 = vadd.f32 %v3664, %v3776
    %3778 = vmatprep.mubr.bf16.mxu0 %v2772
    %3779 = vmatmul.mubr.bf16.gmra.mrb[0].mxu0 %v2771
    %v3780 = vpop.f32.mrb[0].mxu0
    %v3781 = vadd.f32 %v3668, %v3780
    %v3782 = vpop.f32.mrb[0].mxu0
    %v3783 = vadd.f32 %v3670, %v3782
    %v3784 = vpop.f32.mrb[0].mxu0
    %v3785 = vadd.f32 %v3672, %v3784
    %v3786 = vpop.f32.mrb[0].mxu0
    %v3787 = vadd.f32 %v3674, %v3786
    %3788 = vdwg.mxu0
    %3789 = vmatprep.subr.bf16.mxu0 %v3310
    %3790 = vmatpush1.bf16.msra.mxu0 %v3309
    %3791 = vmatprep.subr.bf16.mxu0 %v3314
    %3792 = vmatpush1.bf16.msra.mxu0 %v3313
    %3793 = vmatprep.subr.bf16.mxu0 %v3318
    %3794 = vmatpush1.bf16.msra.mxu0 %v3317
    %3795 = vmatprep.subr.bf16.mxu0 %v3322
    %3796 = vmatpush1.bf16.msra.mxu0 %v3321
    %3797 = vmatprep.subr.bf16.mxu0 %v3326
    %3798 = vmatpush1.bf16.msra.mxu0 %v3325
    %3799 = vmatprep.subr.bf16.mxu0 %v3330
    %3800 = vmatpush1.bf16.msra.mxu0 %v3329
    %3801 = vmatprep.subr.bf16.mxu0 %v3334
    %3802 = vmatpush1.bf16.msra.mxu0 %v3333
    %3803 = vmatprep.subr.bf16.mxu0 %v3338
    %3804 = vmatpush1.bf16.msra.mxu0 %v3337
    %3805 = vmatprep.subr.bf16.mxu0 %v3342
    %3806 = vmatpush1.bf16.msra.mxu0 %v3341
    %3807 = vmatprep.subr.bf16.mxu0 %v3346
    %3808 = vmatpush1.bf16.msra.mxu0 %v3345
    %3809 = vmatprep.subr.bf16.mxu0 %v3350
    %3810 = vmatpush1.bf16.msra.mxu0 %v3349
    %3811 = vmatprep.subr.bf16.mxu0 %v3354
    %3812 = vmatpush1.bf16.msra.mxu0 %v3353
    %3813 = vmatprep.subr.bf16.mxu0 %v3358
    %3814 = vmatpush1.bf16.msra.mxu0 %v3357
    %3815 = vmatprep.subr.bf16.mxu0 %v3362
    %3816 = vmatpush1.bf16.msra.mxu0 %v3361
    %3817 = vmatprep.subr.bf16.mxu0 %v3366
    %3818 = vmatpush1.bf16.msra.mxu0 %v3365
    %3819 = vmatprep.subr.bf16.mxu0 %v3370
    %3820 = vmatpush1.bf16.msra.mxu0 %v3369
    %3821 = vmatprep.mubr.bf16.mxu0 %v2742
    %3822 = vmatmul.mubr.bf16.gmra.mrb[0].mxu0 %v2741
    %v3823 = vpop.f32.mrb[0].mxu0
    %v3824 = vadd.f32 %v2914, %v3823
    %v3825 = vpop.f32.mrb[0].mxu0
    %v3826 = vadd.f32 %v2918, %v3825
    %v3827 = vpop.f32.mrb[0].mxu0
    %v3828 = vadd.f32 %v2914, %v3827
    %v3829 = vpop.f32.mrb[0].mxu0
    %v3830 = vadd.f32 %v2918, %v3829
    %3831 = vmatprep.mubr.bf16.mxu0 %v2746
    %3832 = vmatmul.mubr.bf16.gmra.mrb[0].mxu0 %v2745
    %v3833 = vpop.f32.mrb[0].mxu0
    %v3834 = vadd.f32 %v2914, %v3833
    %v3835 = vpop.f32.mrb[0].mxu0
    %v3836 = vadd.f32 %v2918, %v3835
    %v3837 = vpop.f32.mrb[0].mxu0
    %v3838 = vadd.f32 %v2914, %v3837
    %v3839 = vpop.f32.mrb[0].mxu0
    %v3840 = vadd.f32 %v2918, %v3839
    %3841 = vmatprep.mubr.bf16.mxu0 %v2750
    %3842 = vmatmul.mubr.bf16.gmra.mrb[0].mxu0 %v2749
    %v3843 = vpop.f32.mrb[0].mxu0
    %v3844 = vadd.f32 %v2914, %v3843
    %v3845 = vpop.f32.mrb[0].mxu0
    %v3846 = vadd.f32 %v2918, %v3845
    %v3847 = vpop.f32.mrb[0].mxu0
    %v3848 = vadd.f32 %v2914, %v3847
    %v3849 = vpop.f32.mrb[0].mxu0
    %v3850 = vadd.f32 %v2918, %v3849
    %3851 = vmatprep.mubr.bf16.mxu0 %v2754
    %3852 = vmatmul.mubr.bf16.gmra.mrb[0].mxu0 %v2753
    %v3853 = vpop.f32.mrb[0].mxu0
    %v3854 = vadd.f32 %v2914, %v3853
    %v3855 = vpop.f32.mrb[0].mxu0
    %v3856 = vadd.f32 %v2918, %v3855
    %v3857 = vpop.f32.mrb[0].mxu0
    %v3858 = vadd.f32 %v2914, %v3857
    %v3859 = vpop.f32.mrb[0].mxu0
    %v3860 = vadd.f32 %v2918, %v3859
    %3861 = vmatprep.mubr.bf16.mxu0 %v2758
    %3862 = vmatmul.mubr.bf16.gmra.mrb[0].mxu0 %v2757
    %v3863 = vpop.f32.mrb[0].mxu0
    %v3864 = vadd.f32 %v2914, %v3863
    %v3865 = vpop.f32.mrb[0].mxu0
    %v3866 = vadd.f32 %v2918, %v3865
    %v3867 = vpop.f32.mrb[0].mxu0
    %v3868 = vadd.f32 %v2914, %v3867
    %v3869 = vpop.f32.mrb[0].mxu0
    %v3870 = vadd.f32 %v2918, %v3869
    %3871 = vmatprep.mubr.bf16.mxu0 %v2762
    %3872 = vmatmul.mubr.bf16.gmra.mrb[0].mxu0 %v2761
    %v3873 = vpop.f32.mrb[0].mxu0
    %v3874 = vadd.f32 %v2914, %v3873
    %v3875 = vpop.f32.mrb[0].mxu0
    %v3876 = vadd.f32 %v2918, %v3875
    %v3877 = vpop.f32.mrb[0].mxu0
    %v3878 = vadd.f32 %v2914, %v3877
    %v3879 = vpop.f32.mrb[0].mxu0
    %v3880 = vadd.f32 %v2918, %v3879
    %3881 = vmatprep.mubr.bf16.mxu0 %v2766
    %3882 = vmatmul.mubr.bf16.gmra.mrb[0].mxu0 %v2765
    %v3883 = vpop.f32.mrb[0].mxu0
    %v3884 = vadd.f32 %v2914, %v3883
    %v3885 = vpop.f32.mrb[0].mxu0
    %v3886 = vadd.f32 %v2918, %v3885
    %v3887 = vpop.f32.mrb[0].mxu0
    %v3888 = vadd.f32 %v2914, %v3887
    %v3889 = vpop.f32.mrb[0].mxu0
    %v3890 = vadd.f32 %v2918, %v3889
    %3891 = vmatprep.mubr.bf16.mxu0 %v2770
    %3892 = vmatmul.mubr.bf16.gmra.mrb[0].mxu0 %v2769
    %v3893 = vpop.f32.mrb[0].mxu0
    %v3894 = vadd.f32 %v2914, %v3893
    %v3895 = vpop.f32.mrb[0].mxu0
    %v3896 = vadd.f32 %v2918, %v3895
    %v3897 = vpop.f32.mrb[0].mxu0
    %v3898 = vadd.f32 %v2914, %v3897
    %v3899 = vpop.f32.mrb[0].mxu0
    %v3900 = vadd.f32 %v2918, %v3899
    %3901 = vdwg.mxu0
    %3902 = vmatprep.subr.bf16.mxu0 %v3374
    %3903 = vmatpush1.bf16.msra.mxu0 %v3373
    %3904 = vmatprep.subr.bf16.mxu0 %v3378
    %3905 = vmatpush1.bf16.msra.mxu0 %v3377
    %3906 = vmatprep.subr.bf16.mxu0 %v3382
    %3907 = vmatpush1.bf16.msra.mxu0 %v3381
    %3908 = vmatprep.subr.bf16.mxu0 %v3386
    %3909 = vmatpush1.bf16.msra.mxu0 %v3385
    %3910 = vmatprep.subr.bf16.mxu0 %v3390
    %3911 = vmatpush1.bf16.msra.mxu0 %v3389
    %3912 = vmatprep.subr.bf16.mxu0 %v3394
    %3913 = vmatpush1.bf16.msra.mxu0 %v3393
    %3914 = vmatprep.subr.bf16.mxu0 %v3398
    %3915 = vmatpush1.bf16.msra.mxu0 %v3397
    %3916 = vmatprep.subr.bf16.mxu0 %v3402
    %3917 = vmatpush1.bf16.msra.mxu0 %v3401
    %3918 = vmatprep.subr.bf16.mxu0 %v3406
    %3919 = vmatpush1.bf16.msra.mxu0 %v3405
    %3920 = vmatprep.subr.bf16.mxu0 %v3410
    %3921 = vmatpush1.bf16.msra.mxu0 %v3409
    %3922 = vmatprep.subr.bf16.mxu0 %v3414
    %3923 = vmatpush1.bf16.msra.mxu0 %v3413
    %3924 = vmatprep.subr.bf16.mxu0 %v3418
    %3925 = vmatpush1.bf16.msra.mxu0 %v3417
    %3926 = vmatprep.subr.bf16.mxu0 %v3422
    %3927 = vmatpush1.bf16.msra.mxu0 %v3421
    %3928 = vmatprep.subr.bf16.mxu0 %v3426
    %3929 = vmatpush1.bf16.msra.mxu0 %v3425
    %3930 = vmatprep.subr.bf16.mxu0 %v3430
    %3931 = vmatpush1.bf16.msra.mxu0 %v3429
    %3932 = vmatprep.subr.bf16.mxu0 %v3434
    %3933 = vmatpush1.bf16.msra.mxu0 %v3433
    %3934 = vmatprep.mubr.bf16.mxu0 %v2744
    %3935 = vmatmul.mubr.bf16.gmra.mrb[0].mxu0 %v2743
    %v3936 = vpop.f32.mrb[0].mxu0
    %v3937 = vadd.f32 %v3824, %v3936
    %v3938 = vpop.f32.mrb[0].mxu0
    %v3939 = vadd.f32 %v3826, %v3938
    %v3940 = vpop.f32.mrb[0].mxu0
    %v3941 = vadd.f32 %v3828, %v3940
    %v3942 = vpop.f32.mrb[0].mxu0
    %v3943 = vadd.f32 %v3830, %v3942
    %3944 = vmatprep.mubr.bf16.mxu0 %v2748
    %3945 = vmatmul.mubr.bf16.gmra.mrb[0].mxu0 %v2747
    %v3946 = vpop.f32.mrb[0].mxu0
    %v3947 = vadd.f32 %v3834, %v3946
    %v3948 = vpop.f32.mrb[0].mxu0
    %v3949 = vadd.f32 %v3836, %v3948
    %v3950 = vpop.f32.mrb[0].mxu0
    %v3951 = vadd.f32 %v3838, %v3950
    %v3952 = vpop.f32.mrb[0].mxu0
    %v3953 = vadd.f32 %v3840, %v3952
    %3954 = vmatprep.mubr.bf16.mxu0 %v2752
    %3955 = vmatmul.mubr.bf16.gmra.mrb[0].mxu0 %v2751
    %v3956 = vpop.f32.mrb[0].mxu0
    %v3957 = vadd.f32 %v3844, %v3956
    %v3958 = vpop.f32.mrb[0].mxu0
    %v3959 = vadd.f32 %v3846, %v3958
    %v3960 = vpop.f32.mrb[0].mxu0
    %v3961 = vadd.f32 %v3848, %v3960
    %v3962 = vpop.f32.mrb[0].mxu0
    %v3963 = vadd.f32 %v3850, %v3962
    %3964 = vmatprep.mubr.bf16.mxu0 %v2756
    %3965 = vmatmul.mubr.bf16.gmra.mrb[0].mxu0 %v2755
    %v3966 = vpop.f32.mrb[0].mxu0
    %v3967 = vadd.f32 %v3854, %v3966
    %v3968 = vpop.f32.mrb[0].mxu0
    %v3969 = vadd.f32 %v3856, %v3968
    %v3970 = vpop.f32.mrb[0].mxu0
    %v3971 = vadd.f32 %v3858, %v3970
    %v3972 = vpop.f32.mrb[0].mxu0
    %v3973 = vadd.f32 %v3860, %v3972
    %3974 = vmatprep.mubr.bf16.mxu0 %v2760
    %3975 = vmatmul.mubr.bf16.gmra.mrb[0].mxu0 %v2759
    %v3976 = vpop.f32.mrb[0].mxu0
    %v3977 = vadd.f32 %v3864, %v3976
    %v3978 = vpop.f32.mrb[0].mxu0
    %v3979 = vadd.f32 %v3866, %v3978
    %v3980 = vpop.f32.mrb[0].mxu0
    %v3981 = vadd.f32 %v3868, %v3980
    %v3982 = vpop.f32.mrb[0].mxu0
    %v3983 = vadd.f32 %v3870, %v3982
    %3984 = vmatprep.mubr.bf16.mxu0 %v2764
    %3985 = vmatmul.mubr.bf16.gmra.mrb[0].mxu0 %v2763
    %v3986 = vpop.f32.mrb[0].mxu0
    %v3987 = vadd.f32 %v3874, %v3986
    %v3988 = vpop.f32.mrb[0].mxu0
    %v3989 = vadd.f32 %v3876, %v3988
    %v3990 = vpop.f32.mrb[0].mxu0
    %v3991 = vadd.f32 %v3878, %v3990
    %v3992 = vpop.f32.mrb[0].mxu0
    %v3993 = vadd.f32 %v3880, %v3992
    %3994 = vmatprep.mubr.bf16.mxu0 %v2768
    %3995 = vmatmul.mubr.bf16.gmra.mrb[0].mxu0 %v2767
    %v3996 = vpop.f32.mrb[0].mxu0
    %v3997 = vadd.f32 %v3884, %v3996
    %v3998 = vpop.f32.mrb[0].mxu0
    %v3999 = vadd.f32 %v3886, %v3998
    %v4000 = vpop.f32.mrb[0].mxu0
    %v4001 = vadd.f32 %v3888, %v4000
    %v4002 = vpop.f32.mrb[0].mxu0
    %v4003 = vadd.f32 %v3890, %v4002
    %4004 = vmatprep.mubr.bf16.mxu0 %v2772
    %4005 = vmatmul.mubr.bf16.gmra.mrb[0].mxu0 %v2771
    %v4006 = vpop.f32.mrb[0].mxu0
    %v4007 = vadd.f32 %v3894, %v4006
    %v4008 = vpop.f32.mrb[0].mxu0
    %v4009 = vadd.f32 %v3896, %v4008
    %v4010 = vpop.f32.mrb[0].mxu0
    %v4011 = vadd.f32 %v3898, %v4010
    %v4012 = vpop.f32.mrb[0].mxu0
    %v4013 = vadd.f32 %v3900, %v4012
    %4014 = vdwg.mxu0
    %v4015 = vmax.f32 %v3711, 0.0
    %v4016 = vmax.f32 %v3713, 0.0
    %v4017 = vmax.f32 %v3937, 0.0
    %v4018 = vmax.f32 %v3939, 0.0
    %v4019 = vmax.f32 %v3715, 0.0
    %v4020 = vmax.f32 %v3717, 0.0
    %v4021 = vmax.f32 %v3941, 0.0
    %v4022 = vmax.f32 %v3943, 0.0
    %v4023 = vmax.f32 %v3721, 0.0
    %v4024 = vmax.f32 %v3723, 0.0
    %v4025 = vmax.f32 %v3947, 0.0
    %v4026 = vmax.f32 %v3949, 0.0
    %v4027 = vmax.f32 %v3725, 0.0
    %v4028 = vmax.f32 %v3727, 0.0
    %v4029 = vmax.f32 %v3951, 0.0
    %v4030 = vmax.f32 %v3953, 0.0
    %v4031 = vmax.f32 %v3731, 0.0
    %v4032 = vmax.f32 %v3733, 0.0
    %v4033 = vmax.f32 %v3957, 0.0
    %v4034 = vmax.f32 %v3959, 0.0
    %v4035 = vmax.f32 %v3735, 0.0
    %v4036 = vmax.f32 %v3737, 0.0
    %v4037 = vmax.f32 %v3961, 0.0
    %v4038 = vmax.f32 %v3963, 0.0
    %v4039 = vmax.f32 %v3741, 0.0
    %v4040 = vmax.f32 %v3743, 0.0
    %v4041 = vmax.f32 %v3967, 0.0
    %v4042 = vmax.f32 %v3969, 0.0
    %v4043 = vmax.f32 %v3745, 0.0
    %v4044 = vmax.f32 %v3747, 0.0
    %v4045 = vmax.f32 %v3971, 0.0
    %v4046 = vmax.f32 %v3973, 0.0
    %v4047 = vmax.f32 %v3751, 0.0
    %v4048 = vmax.f32 %v3753, 0.0
    %v4049 = vmax.f32 %v3977, 0.0
    %v4050 = vmax.f32 %v3979, 0.0
    %v4051 = vmax.f32 %v3755, 0.0
    %v4052 = vmax.f32 %v3757, 0.0
    %v4053 = vmax.f32 %v3981, 0.0
    %v4054 = vmax.f32 %v3983, 0.0
    %v4055 = vmax.f32 %v3761, 0.0
    %v4056 = vmax.f32 %v3763, 0.0
    %v4057 = vmax.f32 %v3987, 0.0
    %v4058 = vmax.f32 %v3989, 0.0
    %v4059 = vmax.f32 %v3765, 0.0
    %v4060 = vmax.f32 %v3767, 0.0
    %v4061 = vmax.f32 %v3991, 0.0
    %v4062 = vmax.f32 %v3993, 0.0
    %v4063 = vmax.f32 %v3771, 0.0
    %v4064 = vmax.f32 %v3773, 0.0
    %v4065 = vmax.f32 %v3997, 0.0
    %v4066 = vmax.f32 %v3999, 0.0
    %v4067 = vmax.f32 %v3775, 0.0
    %v4068 = vmax.f32 %v3777, 0.0
    %v4069 = vmax.f32 %v4001, 0.0
    %v4070 = vmax.f32 %v4003, 0.0
    %v4071 = vmax.f32 %v3781, 0.0
    %v4072 = vmax.f32 %v3783, 0.0
    %v4073 = vmax.f32 %v4007, 0.0
    %v4074 = vmax.f32 %v4009, 0.0
    %v4075 = vmax.f32 %v3785, 0.0
    %v4076 = vmax.f32 %v3787, 0.0
    %v4077 = vmax.f32 %v4011, 0.0
    %v4078 = vmax.f32 %v4013, 0.0
    %v4079 = vpack.c.bf16 %v4019, %v4015
    %v4080 = vpack.c.bf16 %v4020, %v4016
    %v4081 = vpack.c.bf16 %v4021, %v4017
    %v4082 = vpack.c.bf16 %v4022, %v4018
    %v4083 = vpack.c.bf16 %v4027, %v4023
    %v4084 = vpack.c.bf16 %v4028, %v4024
    %v4085 = vpack.c.bf16 %v4029, %v4025
    %v4086 = vpack.c.bf16 %v4030, %v4026
    %v4087 = vpack.c.bf16 %v4035, %v4031
    %v4088 = vpack.c.bf16 %v4036, %v4032
    %v4089 = vpack.c.bf16 %v4037, %v4033
    %v4090 = vpack.c.bf16 %v4038, %v4034
    %v4091 = vpack.c.bf16 %v4043, %v4039
    %v4092 = vpack.c.bf16 %v4044, %v4040
    %v4093 = vpack.c.bf16 %v4045, %v4041
    %v4094 = vpack.c.bf16 %v4046, %v4042
    %v4095 = vpack.c.bf16 %v4051, %v4047
    %v4096 = vpack.c.bf16 %v4052, %v4048
    %v4097 = vpack.c.bf16 %v4053, %v4049
    %v4098 = vpack.c.bf16 %v4054, %v4050
    %v4099 = vpack.c.bf16 %v4059, %v4055
    %v4100 = vpack.c.bf16 %v4060, %v4056
    %v4101 = vpack.c.bf16 %v4061, %v4057
    %v4102 = vpack.c.bf16 %v4062, %v4058
    %v4103 = vpack.c.bf16 %v4067, %v4063
    %v4104 = vpack.c.bf16 %v4068, %v4064
    %v4105 = vpack.c.bf16 %v4069, %v4065
    %v4106 = vpack.c.bf16 %v4070, %v4066
    %v4107 = vpack.c.bf16 %v4075, %v4071
    %v4108 = vpack.c.bf16 %v4076, %v4072
    %v4109 = vpack.c.bf16 %v4077, %v4073
    %v4110 = vpack.c.bf16 %v4078, %v4074
    %v4111 = vld [vmem:[%s5] sm:$0xf]
    %v4112 = vld [vmem:[%s5 + $0x4] sm:$0xf]
    %v4113 = vld [vmem:[%s5 + $0x8] sm:$0xf]
    %v4114 = vld [vmem:[%s5 + $0xc] sm:$0xf]
    %v4115 = vld [vmem:[%s5 + $0x10] sm:$0xf]
    %v4116 = vld [vmem:[%s5 + $0x14] sm:$0xf]
    %v4117 = vld [vmem:[%s5 + $0x18] sm:$0xf]
    %v4118 = vld [vmem:[%s5 + $0x1c] sm:$0xf]
    %v4119 = vld [vmem:[%s5 + $0x20] sm:$0xf]
    %v4120 = vld [vmem:[%s5 + $0x24] sm:$0xf]
    %v4121 = vld [vmem:[%s5 + $0x28] sm:$0xf]
    %v4122 = vld [vmem:[%s5 + $0x2c] sm:$0xf]
    %v4123 = vld [vmem:[%s5 + $0x30] sm:$0xf]
    %v4124 = vld [vmem:[%s5 + $0x34] sm:$0xf]
    %v4125 = vld [vmem:[%s5 + $0x38] sm:$0xf]
    %v4126 = vld [vmem:[%s5 + $0x3c] sm:$0xf]
    %v4127 = vld [vmem:[%s5 + $0x40] sm:$0xf]
    %v4128 = vld [vmem:[%s5 + $0x44] sm:$0xf]
    %v4129 = vld [vmem:[%s5 + $0x48] sm:$0xf]
    %v4130 = vld [vmem:[%s5 + $0x4c] sm:$0xf]
    %v4131 = vld [vmem:[%s5 + $0x50] sm:$0xf]
    %v4132 = vld [vmem:[%s5 + $0x54] sm:$0xf]
    %v4133 = vld [vmem:[%s5 + $0x58] sm:$0xf]
    %v4134 = vld [vmem:[%s5 + $0x5c] sm:$0xf]
    %v4135 = vld [vmem:[%s5 + $0x60] sm:$0xf]
    %v4136 = vld [vmem:[%s5 + $0x64] sm:$0xf]
    %v4137 = vld [vmem:[%s5 + $0x68] sm:$0xf]
    %v4138 = vld [vmem:[%s5 + $0x6c] sm:$0xf]
    %v4139 = vld [vmem:[%s5 + $0x70] sm:$0xf]
    %v4140 = vld [vmem:[%s5 + $0x74] sm:$0xf]
    %v4141 = vld [vmem:[%s5 + $0x78] sm:$0xf]
    %v4142 = vld [vmem:[%s5 + $0x7c] sm:$0xf]
    %v4143 = vld [vmem:[%s5 + $0x80] sm:$0xf]
    %v4144 = vld [vmem:[%s5 + $0x84] sm:$0xf]
    %v4145 = vld [vmem:[%s5 + $0x88] sm:$0xf]
    %v4146 = vld [vmem:[%s5 + $0x8c] sm:$0xf]
    %v4147 = vld [vmem:[%s5 + $0x90] sm:$0xf]
    %v4148 = vld [vmem:[%s5 + $0x94] sm:$0xf]
    %v4149 = vld [vmem:[%s5 + $0x98] sm:$0xf]
    %v4150 = vld [vmem:[%s5 + $0x9c] sm:$0xf]
    %v4151 = vld [vmem:[%s5 + $0xa0] sm:$0xf]
    %v4152 = vld [vmem:[%s5 + $0xa4] sm:$0xf]
    %v4153 = vld [vmem:[%s5 + $0xa8] sm:$0xf]
    %v4154 = vld [vmem:[%s5 + $0xac] sm:$0xf]
    %v4155 = vld [vmem:[%s5 + $0xb0] sm:$0xf]
    %v4156 = vld [vmem:[%s5 + $0xb4] sm:$0xf]
    %v4157 = vld [vmem:[%s5 + $0xb8] sm:$0xf]
    %v4158 = vld [vmem:[%s5 + $0xbc] sm:$0xf]
    %v4159 = vld [vmem:[%s5 + $0xc0] sm:$0xf]
    %v4160 = vld [vmem:[%s5 + $0xc4] sm:$0xf]
    %v4161 = vld [vmem:[%s5 + $0xc8] sm:$0xf]
    %v4162 = vld [vmem:[%s5 + $0xcc] sm:$0xf]
    %v4163 = vld [vmem:[%s5 + $0xd0] sm:$0xf]
    %v4164 = vld [vmem:[%s5 + $0xd4] sm:$0xf]
    %v4165 = vld [vmem:[%s5 + $0xd8] sm:$0xf]
    %v4166 = vld [vmem:[%s5 + $0xdc] sm:$0xf]
    %v4167 = vld [vmem:[%s5 + $0xe0] sm:$0xf]
    %v4168 = vld [vmem:[%s5 + $0xe4] sm:$0xf]
    %v4169 = vld [vmem:[%s5 + $0xe8] sm:$0xf]
    %v4170 = vld [vmem:[%s5 + $0xec] sm:$0xf]
    %v4171 = vld [vmem:[%s5 + $0xf0] sm:$0xf]
    %v4172 = vld [vmem:[%s5 + $0xf4] sm:$0xf]
    %v4173 = vld [vmem:[%s5 + $0xf8] sm:$0xf]
    %v4174 = vld [vmem:[%s5 + $0xfc] sm:$0xf]
    %v4175 = vld [vmem:[%s6] sm:$0x1]
    %v4177 = vlaneseq
    %v4178 = vshrl.u32 %v4177, 7
    %v4179 = vsub.s32 0, %v4178
    %v4180 = vrot.slane %v4175, %v4179
    %v4246 = vunpack.c.l.b16 %v4111
    %v4247 = vunpack.c.l.b16 %v4112
    %v4248 = vunpack.c.l.b16 %v4113
    %v4249 = vunpack.c.l.b16 %v4114
    %v4250 = vunpack.c.l.b16 %v4115
    %v4251 = vunpack.c.l.b16 %v4116
    %v4252 = vunpack.c.l.b16 %v4117
    %v4253 = vunpack.c.l.b16 %v4118
    %v4254 = vunpack.c.l.b16 %v4119
    %v4255 = vunpack.c.l.b16 %v4120
    %v4256 = vunpack.c.l.b16 %v4121
    %v4257 = vunpack.c.l.b16 %v4122
    %v4258 = vunpack.c.l.b16 %v4123
    %v4259 = vunpack.c.l.b16 %v4124
    %v4260 = vunpack.c.l.b16 %v4125
    %v4261 = vunpack.c.l.b16 %v4126
    %v4262 = vunpack.c.l.b16 %v4127
    %v4263 = vunpack.c.l.b16 %v4128
    %v4264 = vunpack.c.l.b16 %v4129
    %v4265 = vunpack.c.l.b16 %v4130
    %v4266 = vunpack.c.l.b16 %v4131
    %v4267 = vunpack.c.l.b16 %v4132
    %v4268 = vunpack.c.l.b16 %v4133
    %v4269 = vunpack.c.l.b16 %v4134
    %v4270 = vunpack.c.l.b16 %v4135
    %v4271 = vunpack.c.l.b16 %v4136
    %v4272 = vunpack.c.l.b16 %v4137
    %v4273 = vunpack.c.l.b16 %v4138
    %v4274 = vunpack.c.l.b16 %v4139
    %v4275 = vunpack.c.l.b16 %v4140
    %v4276 = vunpack.c.l.b16 %v4141
    %v4277 = vunpack.c.l.b16 %v4142
    %v4278 = vunpack.c.l.b16 %v4143
    %v4279 = vunpack.c.l.b16 %v4144
    %v4280 = vunpack.c.l.b16 %v4145
    %v4281 = vunpack.c.l.b16 %v4146
    %v4282 = vunpack.c.l.b16 %v4147
    %v4283 = vunpack.c.l.b16 %v4148
    %v4284 = vunpack.c.l.b16 %v4149
    %v4285 = vunpack.c.l.b16 %v4150
    %v4286 = vunpack.c.l.b16 %v4151
    %v4287 = vunpack.c.l.b16 %v4152
    %v4288 = vunpack.c.l.b16 %v4153
    %v4289 = vunpack.c.l.b16 %v4154
    %v4290 = vunpack.c.l.b16 %v4155
    %v4291 = vunpack.c.l.b16 %v4156
    %v4292 = vunpack.c.l.b16 %v4157
    %v4293 = vunpack.c.l.b16 %v4158
    %v4294 = vunpack.c.l.b16 %v4159
    %v4295 = vunpack.c.l.b16 %v4160
    %v4296 = vunpack.c.l.b16 %v4161
    %v4297 = vunpack.c.l.b16 %v4162
    %v4298 = vunpack.c.l.b16 %v4163
    %v4299 = vunpack.c.l.b16 %v4164
    %v4300 = vunpack.c.l.b16 %v4165
    %v4301 = vunpack.c.l.b16 %v4166
    %v4302 = vunpack.c.l.b16 %v4167
    %v4303 = vunpack.c.l.b16 %v4168
    %v4304 = vunpack.c.l.b16 %v4169
    %v4305 = vunpack.c.l.b16 %v4170
    %v4306 = vunpack.c.l.b16 %v4171
    %v4307 = vunpack.c.l.b16 %v4172
    %v4308 = vunpack.c.l.b16 %v4173
    %v4309 = vunpack.c.l.b16 %v4174
    %v4310 = vpack.c.b16 %v4247, %v4246
    %v4311 = vpack.c.b16 %v4249, %v4248
    %v4312 = vpack.c.b16 %v4251, %v4250
    %v4313 = vpack.c.b16 %v4253, %v4252
    %v4314 = vpack.c.b16 %v4255, %v4254
    %v4315 = vpack.c.b16 %v4257, %v4256
    %v4316 = vpack.c.b16 %v4259, %v4258
    %v4317 = vpack.c.b16 %v4261, %v4260
    %v4318 = vpack.c.b16 %v4263, %v4262
    %v4319 = vpack.c.b16 %v4265, %v4264
    %v4320 = vpack.c.b16 %v4267, %v4266
    %v4321 = vpack.c.b16 %v4269, %v4268
    %v4322 = vpack.c.b16 %v4271, %v4270
    %v4323 = vpack.c.b16 %v4273, %v4272
    %v4324 = vpack.c.b16 %v4275, %v4274
    %v4325 = vpack.c.b16 %v4277, %v4276
    %v4326 = vpack.c.b16 %v4279, %v4278
    %v4327 = vpack.c.b16 %v4281, %v4280
    %v4328 = vpack.c.b16 %v4283, %v4282
    %v4329 = vpack.c.b16 %v4285, %v4284
    %v4330 = vpack.c.b16 %v4287, %v4286
    %v4331 = vpack.c.b16 %v4289, %v4288
    %v4332 = vpack.c.b16 %v4291, %v4290
    %v4333 = vpack.c.b16 %v4293, %v4292
    %v4334 = vpack.c.b16 %v4295, %v4294
    %v4335 = vpack.c.b16 %v4297, %v4296
    %v4336 = vpack.c.b16 %v4299, %v4298
    %v4337 = vpack.c.b16 %v4301, %v4300
    %v4338 = vpack.c.b16 %v4303, %v4302
    %v4339 = vpack.c.b16 %v4305, %v4304
    %v4340 = vpack.c.b16 %v4307, %v4306
    %v4341 = vpack.c.b16 %v4309, %v4308
    %4374 = vmatprep.subr.bf16.mxu0 0
    %4375 = vmatpush1.bf16.msra.mxu0 %v4310
    %4376 = vmatprep.subr.bf16.mxu0 0
    %4377 = vmatpush1.bf16.msra.mxu0 %v4311
    %4378 = vmatprep.subr.bf16.mxu0 0
    %4379 = vmatpush1.bf16.msra.mxu0 %v4312
    %4380 = vmatprep.subr.bf16.mxu0 0
    %4381 = vmatpush1.bf16.msra.mxu0 %v4313
    %4382 = vmatprep.subr.bf16.mxu0 0
    %4383 = vmatpush1.bf16.msra.mxu0 %v4314
    %4384 = vmatprep.subr.bf16.mxu0 0
    %4385 = vmatpush1.bf16.msra.mxu0 %v4315
    %4386 = vmatprep.subr.bf16.mxu0 0
    %4387 = vmatpush1.bf16.msra.mxu0 %v4316
    %4388 = vmatprep.subr.bf16.mxu0 0
    %4389 = vmatpush1.bf16.msra.mxu0 %v4317
    %4390 = vmatprep.subr.bf16.mxu0 0
    %4391 = vmatpush1.bf16.msra.mxu0 %v4318
    %4392 = vmatprep.subr.bf16.mxu0 0
    %4393 = vmatpush1.bf16.msra.mxu0 %v4319
    %4394 = vmatprep.subr.bf16.mxu0 0
    %4395 = vmatpush1.bf16.msra.mxu0 %v4320
    %4396 = vmatprep.subr.bf16.mxu0 0
    %4397 = vmatpush1.bf16.msra.mxu0 %v4321
    %4398 = vmatprep.subr.bf16.mxu0 0
    %4399 = vmatpush1.bf16.msra.mxu0 %v4322
    %4400 = vmatprep.subr.bf16.mxu0 0
    %4401 = vmatpush1.bf16.msra.mxu0 %v4323
    %4402 = vmatprep.subr.bf16.mxu0 0
    %4403 = vmatpush1.bf16.msra.mxu0 %v4324
    %4404 = vmatprep.subr.bf16.mxu0 0
    %4405 = vmatpush1.bf16.msra.mxu0 %v4325
    %4406 = vmatprep.mubr.bf16.mxu0 %v4080
    %4407 = vmatmul.mubr.bf16.gmra.mrb[0].mxu0 %v4079
    %v4408 = vpop.f32.mrb[0].mxu0
    %v4409 = vadd.f32 %v4180, %v4408
    %v4410 = vpop.f32.mrb[0].mxu0
    %v4411 = vpop.f32.mrb[0].mxu0
    %v4412 = vadd.f32 %v4180, %v4411
    %v4413 = vpop.f32.mrb[0].mxu0
    %4414 = vmatprep.mubr.bf16.mxu0 %v4084
    %4415 = vmatmul.mubr.bf16.gmra.mrb[0].mxu0 %v4083
    %v4416 = vpop.f32.mrb[0].mxu0
    %v4417 = vadd.f32 %v4180, %v4416
    %v4418 = vpop.f32.mrb[0].mxu0
    %v4419 = vpop.f32.mrb[0].mxu0
    %v4420 = vadd.f32 %v4180, %v4419
    %v4421 = vpop.f32.mrb[0].mxu0
    %4422 = vmatprep.mubr.bf16.mxu0 %v4088
    %4423 = vmatmul.mubr.bf16.gmra.mrb[0].mxu0 %v4087
    %v4424 = vpop.f32.mrb[0].mxu0
    %v4425 = vadd.f32 %v4180, %v4424
    %v4426 = vpop.f32.mrb[0].mxu0
    %v4427 = vpop.f32.mrb[0].mxu0
    %v4428 = vadd.f32 %v4180, %v4427
    %v4429 = vpop.f32.mrb[0].mxu0
    %4430 = vmatprep.mubr.bf16.mxu0 %v4092
    %4431 = vmatmul.mubr.bf16.gmra.mrb[0].mxu0 %v4091
    %v4432 = vpop.f32.mrb[0].mxu0
    %v4433 = vadd.f32 %v4180, %v4432
    %v4434 = vpop.f32.mrb[0].mxu0
    %v4435 = vpop.f32.mrb[0].mxu0
    %v4436 = vadd.f32 %v4180, %v4435
    %v4437 = vpop.f32.mrb[0].mxu0
    %4438 = vmatprep.mubr.bf16.mxu0 %v4096
    %4439 = vmatmul.mubr.bf16.gmra.mrb[0].mxu0 %v4095
    %v4440 = vpop.f32.mrb[0].mxu0
    %v4441 = vadd.f32 %v4180, %v4440
    %v4442 = vpop.f32.mrb[0].mxu0
    %v4443 = vpop.f32.mrb[0].mxu0
    %v4444 = vadd.f32 %v4180, %v4443
    %v4445 = vpop.f32.mrb[0].mxu0
    %4446 = vmatprep.mubr.bf16.mxu0 %v4100
    %4447 = vmatmul.mubr.bf16.gmra.mrb[0].mxu0 %v4099
    %v4448 = vpop.f32.mrb[0].mxu0
    %v4449 = vadd.f32 %v4180, %v4448
    %v4450 = vpop.f32.mrb[0].mxu0
    %v4451 = vpop.f32.mrb[0].mxu0
    %v4452 = vadd.f32 %v4180, %v4451
    %v4453 = vpop.f32.mrb[0].mxu0
    %4454 = vmatprep.mubr.bf16.mxu0 %v4104
    %4455 = vmatmul.mubr.bf16.gmra.mrb[0].mxu0 %v4103
    %v4456 = vpop.f32.mrb[0].mxu0
    %v4457 = vadd.f32 %v4180, %v4456
    %v4458 = vpop.f32.mrb[0].mxu0
    %v4459 = vpop.f32.mrb[0].mxu0
    %v4460 = vadd.f32 %v4180, %v4459
    %v4461 = vpop.f32.mrb[0].mxu0
    %4462 = vmatprep.mubr.bf16.mxu0 %v4108
    %4463 = vmatmul.mubr.bf16.gmra.mrb[0].mxu0 %v4107
    %v4464 = vpop.f32.mrb[0].mxu0
    %v4465 = vadd.f32 %v4180, %v4464
    %v4466 = vpop.f32.mrb[0].mxu0
    %v4467 = vpop.f32.mrb[0].mxu0
    %v4468 = vadd.f32 %v4180, %v4467
    %v4469 = vpop.f32.mrb[0].mxu0
    %4470 = vdwg.mxu0
    %4471 = vmatprep.subr.bf16.mxu0 0
    %4472 = vmatpush1.bf16.msra.mxu0 %v4326
    %4473 = vmatprep.subr.bf16.mxu0 0
    %4474 = vmatpush1.bf16.msra.mxu0 %v4327
    %4475 = vmatprep.subr.bf16.mxu0 0
    %4476 = vmatpush1.bf16.msra.mxu0 %v4328
    %4477 = vmatprep.subr.bf16.mxu0 0
    %4478 = vmatpush1.bf16.msra.mxu0 %v4329
    %4479 = vmatprep.subr.bf16.mxu0 0
    %4480 = vmatpush1.bf16.msra.mxu0 %v4330
    %4481 = vmatprep.subr.bf16.mxu0 0
    %4482 = vmatpush1.bf16.msra.mxu0 %v4331
    %4483 = vmatprep.subr.bf16.mxu0 0
    %4484 = vmatpush1.bf16.msra.mxu0 %v4332
    %4485 = vmatprep.subr.bf16.mxu0 0
    %4486 = vmatpush1.bf16.msra.mxu0 %v4333
    %4487 = vmatprep.subr.bf16.mxu0 0
    %4488 = vmatpush1.bf16.msra.mxu0 %v4334
    %4489 = vmatprep.subr.bf16.mxu0 0
    %4490 = vmatpush1.bf16.msra.mxu0 %v4335
    %4491 = vmatprep.subr.bf16.mxu0 0
    %4492 = vmatpush1.bf16.msra.mxu0 %v4336
    %4493 = vmatprep.subr.bf16.mxu0 0
    %4494 = vmatpush1.bf16.msra.mxu0 %v4337
    %4495 = vmatprep.subr.bf16.mxu0 0
    %4496 = vmatpush1.bf16.msra.mxu0 %v4338
    %4497 = vmatprep.subr.bf16.mxu0 0
    %4498 = vmatpush1.bf16.msra.mxu0 %v4339
    %4499 = vmatprep.subr.bf16.mxu0 0
    %4500 = vmatpush1.bf16.msra.mxu0 %v4340
    %4501 = vmatprep.subr.bf16.mxu0 0
    %4502 = vmatpush1.bf16.msra.mxu0 %v4341
    %4503 = vmatprep.mubr.bf16.mxu0 %v4082
    %4504 = vmatmul.mubr.bf16.gmra.mrb[0].mxu0 %v4081
    %v4505 = vpop.f32.mrb[0].mxu0
    %v4506 = vadd.f32 %v4409, %v4505
    %v4507 = vpop.f32.mrb[0].mxu0
    %v4508 = vpop.f32.mrb[0].mxu0
    %v4509 = vadd.f32 %v4412, %v4508
    %v4510 = vpop.f32.mrb[0].mxu0
    %4511 = vmatprep.mubr.bf16.mxu0 %v4086
    %4512 = vmatmul.mubr.bf16.gmra.mrb[0].mxu0 %v4085
    %v4513 = vpop.f32.mrb[0].mxu0
    %v4514 = vadd.f32 %v4417, %v4513
    %v4515 = vpop.f32.mrb[0].mxu0
    %v4516 = vpop.f32.mrb[0].mxu0
    %v4517 = vadd.f32 %v4420, %v4516
    %v4518 = vpop.f32.mrb[0].mxu0
    %4519 = vmatprep.mubr.bf16.mxu0 %v4090
    %4520 = vmatmul.mubr.bf16.gmra.mrb[0].mxu0 %v4089
    %v4521 = vpop.f32.mrb[0].mxu0
    %v4522 = vadd.f32 %v4425, %v4521
    %v4523 = vpop.f32.mrb[0].mxu0
    %v4524 = vpop.f32.mrb[0].mxu0
    %v4525 = vadd.f32 %v4428, %v4524
    %v4526 = vpop.f32.mrb[0].mxu0
    %4527 = vmatprep.mubr.bf16.mxu0 %v4094
    %4528 = vmatmul.mubr.bf16.gmra.mrb[0].mxu0 %v4093
    %v4529 = vpop.f32.mrb[0].mxu0
    %v4530 = vadd.f32 %v4433, %v4529
    %v4531 = vpop.f32.mrb[0].mxu0
    %v4532 = vpop.f32.mrb[0].mxu0
    %v4533 = vadd.f32 %v4436, %v4532
    %v4534 = vpop.f32.mrb[0].mxu0
    %4535 = vmatprep.mubr.bf16.mxu0 %v4098
    %4536 = vmatmul.mubr.bf16.gmra.mrb[0].mxu0 %v4097
    %v4537 = vpop.f32.mrb[0].mxu0
    %v4538 = vadd.f32 %v4441, %v4537
    %v4539 = vpop.f32.mrb[0].mxu0
    %v4540 = vpop.f32.mrb[0].mxu0
    %v4541 = vadd.f32 %v4444, %v4540
    %v4542 = vpop.f32.mrb[0].mxu0
    %4543 = vmatprep.mubr.bf16.mxu0 %v4102
    %4544 = vmatmul.mubr.bf16.gmra.mrb[0].mxu0 %v4101
    %v4545 = vpop.f32.mrb[0].mxu0
    %v4546 = vadd.f32 %v4449, %v4545
    %v4547 = vpop.f32.mrb[0].mxu0
    %v4548 = vpop.f32.mrb[0].mxu0
    %v4549 = vadd.f32 %v4452, %v4548
    %v4550 = vpop.f32.mrb[0].mxu0
    %4551 = vmatprep.mubr.bf16.mxu0 %v4106
    %4552 = vmatmul.mubr.bf16.gmra.mrb[0].mxu0 %v4105
    %v4553 = vpop.f32.mrb[0].mxu0
    %v4554 = vadd.f32 %v4457, %v4553
    %v4555 = vpop.f32.mrb[0].mxu0
    %v4556 = vpop.f32.mrb[0].mxu0
    %v4557 = vadd.f32 %v4460, %v4556
    %v4558 = vpop.f32.mrb[0].mxu0
    %4559 = vmatprep.mubr.bf16.mxu0 %v4110
    %4560 = vmatmul.mubr.bf16.gmra.mrb[0].mxu0 %v4109
    %v4561 = vpop.f32.mrb[0].mxu0
    %v4562 = vadd.f32 %v4465, %v4561
    %v4563 = vpop.f32.mrb[0].mxu0
    %v4564 = vpop.f32.mrb[0].mxu0
    %v4565 = vadd.f32 %v4468, %v4564
    %v4566 = vpop.f32.mrb[0].mxu0
    %4567 = vdwg.mxu0
    %v4568 = vmax.f32 %v4506, 0.0
    %v4569 = vmax.f32 %v4509, 0.0
    %v4570 = vmax.f32 %v4514, 0.0
    %v4571 = vmax.f32 %v4517, 0.0
    %v4572 = vmax.f32 %v4522, 0.0
    %v4573 = vmax.f32 %v4525, 0.0
    %v4574 = vmax.f32 %v4530, 0.0
    %v4575 = vmax.f32 %v4533, 0.0
    %v4576 = vmax.f32 %v4538, 0.0
    %v4577 = vmax.f32 %v4541, 0.0
    %v4578 = vmax.f32 %v4546, 0.0
    %v4579 = vmax.f32 %v4549, 0.0
    %v4580 = vmax.f32 %v4554, 0.0
    %v4581 = vmax.f32 %v4557, 0.0
    %v4582 = vmax.f32 %v4562, 0.0
    %v4583 = vmax.f32 %v4565, 0.0
    %4584 = vst [vmem:[%s7] sm:$0xff] %v4568
    %4585 = vst [vmem:[%s7 + $0x8] sm:$0xff] %v4569
    %4586 = vst [vmem:[%s7 + $0x10] sm:$0xff] %v4570
    %4587 = vst [vmem:[%s7 + $0x18] sm:$0xff] %v4571
    %4588 = vst [vmem:[%s7 + $0x20] sm:$0xff] %v4572
    %4589 = vst [vmem:[%s7 + $0x28] sm:$0xff] %v4573
    %4590 = vst [vmem:[%s7 + $0x30] sm:$0xff] %v4574
    %4591 = vst [vmem:[%s7 + $0x38] sm:$0xff] %v4575
    %4592 = vst [vmem:[%s7 + $0x40] sm:$0xff] %v4576
    %4593 = vst [vmem:[%s7 + $0x48] sm:$0xff] %v4577
    %4594 = vst [vmem:[%s7 + $0x50] sm:$0xff] %v4578
    %4595 = vst [vmem:[%s7 + $0x58] sm:$0xff] %v4579
    %4596 = vst [vmem:[%s7 + $0x60] sm:$0xff] %v4580
    %4597 = vst [vmem:[%s7 + $0x68] sm:$0xff] %v4581
    %4598 = vst [vmem:[%s7 + $0x70] sm:$0xff] %v4582
    %4599 = vst [vmem:[%s7 + $0x78] sm:$0xff] %v4583
    // Predicated region
    $region38: #{mlp_forward.1} parent=1 // pred_check
      _
    $region39: #{mlp_forward.1} parent=1 // pred_check_branch
      %4601 = sbr.rel (0) target = $region41
    $region40: #{mlp_forward.1} parent=1 // pred_region
      _
    $region41: #{mlp_forward.1} parent=1 // pred_fallthru
      _
    // Predicated region
    $region42: #{mlp_forward.1} parent=1 // pred_check
      _
    $region43: #{mlp_forward.1} parent=1 // pred_check_branch
      %4603 = sbr.rel (0) target = $region45
    $region44: #{mlp_forward.1} parent=1 // pred_region
      _
    $region45: #{mlp_forward.1} parent=1 // pred_fallthru
      _
    %4604 = vsyncpa [#allocation3], 1
    %4605 = vsyncpa [#allocation5], 1

</llo_original>
